<compile_context>
chip_gen: v7x
topology: tpu7x:2x2x1
jax: 0.10.0
libtpu: 0.0.40
codegen_flags: <defaults>
</compile_context>

<pallas_src>
import functools

import jax
import jax.numpy as jnp
from jax import lax
from jax.experimental import pallas as pl
from jax.experimental.pallas import tpu as pltpu


# ----------------------------------------------------------------------------
# VMEM budget & tiling helpers
# ----------------------------------------------------------------------------
def _vmem_budget_bytes():
    """~75% of physical VMEM (headroom); conservative 48 MiB if query fails."""
    try:
        cap = int(pltpu.get_tpu_info().vmem_capacity_bytes)
    except Exception:
        cap = 64 * 1024 * 1024          # safe on every generation (v7x = 64 MiB)
    return max(16 * 1024 * 1024, (cap * 3) // 4)


def _largest_divisor(n, cap, multiple=1):
    """Largest d <= cap with d % multiple == 0 and n % d == 0 (>= 1)."""
    cap = max(multiple, min(int(cap), n))
    cap -= cap % multiple
    for d in range(cap, 0, -multiple):
        if n % d == 0:
            return d
    return 1


def _sigmoid(x):
    # logistic via tanh: 1 EUP op / element instead of exp + reciprocal (2).
    return 0.5 * jnp.tanh(0.5 * x) + 0.5


# ----------------------------------------------------------------------------
# Pallas kernels
# ----------------------------------------------------------------------------
def _input_proj_kernel(x_ref, w_ref, b_ref, gf_ref, gb_ref, *,
                       gate_width, matmul_dtype):
    """Fused gate partials for both directions: x @ [Wf|Wb] + [bf|bb]."""
    x = x_ref[...].astype(matmul_dtype)
    g = jnp.dot(x, w_ref[...], preferred_element_type=jnp.float32) + b_ref[...]
    gf_ref[...] = g[:, :gate_width]
    gb_ref[...] = g[:, gate_width:]


def _bilstm_recurrent_kernel(gf_ref, gb_ref, whh_f_ref, whh_b_ref,
                             hf_out_ref, hb_out_ref,
                             hf_sc, cf_sc, hb_sc, cb_sc,
                             *, chunk, hidden, matmul_dtype):
    """One (batch tile, time chunk) step for both LSTM directions.

    Grid = (batch tiles [parallel], time chunks [arbitrary]).  h/c for both
    directions live in VMEM scratch and carry across time chunks.  Backward
    chunks arrive in reversed time order via the index_map; within the chunk
    we walk local indices in reverse so backward outputs land directly in
    their natural positions.  Layout is time-major: gf_ref is (Tc, bt, 4H).
    """
    H = hidden

    @pl.when(pl.program_id(1) == 0)
    def _init():
        hf_sc[...] = jnp.zeros_like(hf_sc)
        cf_sc[...] = jnp.zeros_like(cf_sc)
        hb_sc[...] = jnp.zeros_like(hb_sc)
        cb_sc[...] = jnp.zeros_like(cb_sc)

    # Resident (loop-invariant) hidden-to-hidden weights.
    # TODO(synk): single-buffer these constant-index blocks
    # (pipeline_mode=pl.Buffered(1)) to halve their VMEM footprint on v7x.
    wf = whh_f_ref[...]
    wb = whh_b_ref[...]

    def cell(gx, h, c, w):
        # gx already holds x @ W_ih + b ; only the hidden matmul remains.
        gates = gx + jnp.dot(h.astype(matmul_dtype), w,
                             preferred_element_type=jnp.float32)
        i = _sigmoid(gates[:, 0 * H:1 * H])
        f = _sigmoid(gates[:, 1 * H:2 * H])
        g = jnp.tanh(gates[:, 2 * H:3 * H])
        o = _sigmoid(gates[:, 3 * H:4 * H])
        c_new = f * c + i * g
        h_new = o * jnp.tanh(c_new)
        return h_new, c_new

    def body(s, carry):
        hf, cf, hb, cb = carry
        # forward direction: local time index s (dense (bt, 4H) load / store)
        hf, cf = cell(gf_ref[s], hf, cf, wf)
        hf_out_ref[s] = hf
        # backward direction: local time index chunk-1-s
        sb = chunk - 1 - s
        hb, cb = cell(gb_ref[sb], hb, cb, wb)
        hb_out_ref[sb] = hb
        return hf, cf, hb, cb

    carry = (hf_sc[...], cf_sc[...], hb_sc[...], cb_sc[...])
    hf, cf, hb, cb = lax.fori_loop(0, chunk, body, carry, unroll=True)

    hf_sc[...] = hf
    cf_sc[...] = cf
    hb_sc[...] = hb
    cb_sc[...] = cb


def _linear_kernel(hf_ref, hb_ref, wf_ref, wb_ref, b_ref, o_ref,
                   *, matmul_dtype):
    """out = h_f @ W[:H] + h_b @ W[H:] + b  (fused; no concat materialized)."""
    hf = hf_ref[...].astype(matmul_dtype)
    hb = hb_ref[...].astype(matmul_dtype)
    o_ref[...] = (jnp.dot(hf, wf_ref[...], preferred_element_type=jnp.float32)
                  + jnp.dot(hb, wb_ref[...], preferred_element_type=jnp.float32)
                  + b_ref[...])


# ----------------------------------------------------------------------------
# Wrapper
# ----------------------------------------------------------------------------
def bidirectional_lstm(x, params, *, matmul_dtype=jnp.bfloat16):
    """x: (B, T, input_size) f32 -> (B, T, output_size) f32."""
    B, T, I = x.shape
    H = params["whh_f"].shape[0]          # whh stored transposed: (H, 4H)
    O = params["w_lin"].shape[1]          # w_lin stored transposed: (2H, O)
    f32 = jnp.float32
    wbytes = jnp.dtype(matmul_dtype).itemsize
    budget = _vmem_budget_bytes()

    # Pad batch to the f32 sublane multiple; padded rows dropped at the end.
    B_pad = ((B + 7) // 8) * 8
    if B_pad != B:
        x = jnp.pad(x, ((0, B_pad - B), (0, 0), (0, 0)))

    # Time-major layout so every per-timestep access in the serial recurrence
    # is a dense (batch, lane) tile.  The (B,T,I)->(T,B,I) transpose is a
    # cheap, parallel XLA pass over the (small) input only.
    xt = jnp.transpose(x, (1, 0, 2))                      # (T, B_pad, I)
    N = T * B_pad
    x_flat = xt.reshape(N, I)

    # ---- stage 1: fused input projection for both directions ---------------
    wih = jnp.concatenate([params["wih_f"], params["wih_b"]],
                          axis=1).astype(matmul_dtype)    # (I, 8H)
    b_all = jnp.concatenate([params["b_f"], params["b_b"]], axis=1)  # (1, 8H)

    s1_w = 2 * I * 8 * H * wbytes                 # double-buffered weights
    s1_row = 2 * 4 * (I + 8 * H)                  # 2 bufs x f32 (x + gate rows)
    rt = _largest_divisor(N, min(512, max(8, (budget - s1_w) // max(s1_row, 1))),
                          multiple=8)

    gf_flat, gb_flat = pl.pallas_call(
        functools.partial(_input_proj_kernel, gate_width=4 * H,
                          matmul_dtype=matmul_dtype),
        out_shape=(jax.ShapeDtypeStruct((N, 4 * H), f32),
                   jax.ShapeDtypeStruct((N, 4 * H), f32)),
        grid_spec=pltpu.PrefetchScalarGridSpec(
            num_scalar_prefetch=0,
            grid=(N // rt,),
            in_specs=[
                pl.BlockSpec((rt, I), lambda i: (i, 0)),          # x rows
                pl.BlockSpec((I, 8 * H), lambda i: (0, 0)),       # fused wih
                pl.BlockSpec((1, 8 * H), lambda i: (0, 0)),       # fused bias
            ],
            out_specs=[
                pl.BlockSpec((rt, 4 * H), lambda i: (i, 0)),
                pl.BlockSpec((rt, 4 * H), lambda i: (i, 0)),
            ],
        ),
        compiler_params=pltpu.CompilerParams(
            dimension_semantics=("parallel",),
            vmem_limit_bytes=budget),
    )(x_flat, wih, b_all)

    gf = gf_flat.reshape(T, B_pad, 4 * H)         # free reshape (leading split)
    gb = gb_flat.reshape(T, B_pad, 4 * H)

    # ---- stage 2: serial recurrence over (batch tiles, time chunks) --------
    bt = _largest_divisor(B_pad, 256, multiple=8)
    s2_w = 2 * 2 * H * 4 * H * wbytes             # 2 dirs, double-buffered
    s2_scr = 4 * bt * H * 4
    s2_per_tc = 2 * 2 * bt * 5 * H * 4            # 2 dirs x 2 bufs x (4H in + H out)
    tc_cap = max(1, (budget - s2_w - s2_scr) // max(s2_per_tc, 1))
    # chunk <= 16 keeps the unrolled live ranges within the 64-vreg budget.
    # TODO(synk): pad T (front-pad the backward stream) when T is prime so the
    # chunk never degenerates to 1.
    Tc = _largest_divisor(T, min(16, tc_cap))
    nc = T // Tc
    nb = B_pad // bt

    whh_f = params["whh_f"].astype(matmul_dtype)
    whh_b = params["whh_b"].astype(matmul_dtype)

    # TODO(synk): on v7x (2 TCs) shard the two directions across cores via a
    # leading "parallel" direction axis; kept interleaved here since v5e/v6e
    # have a single TensorCore and benefit from cross-direction latency hiding.
    hf, hb = pl.pallas_call(
        functools.partial(_bilstm_recurrent_kernel, chunk=Tc, hidden=H,
                          matmul_dtype=matmul_dtype),
        out_shape=(jax.ShapeDtypeStruct((T, B_pad, H), f32),
                   jax.ShapeDtypeStruct((T, B_pad, H), f32)),
        grid_spec=pltpu.PrefetchScalarGridSpec(
            num_scalar_prefetch=0,
            grid=(nb, nc),
            in_specs=[
                pl.BlockSpec((Tc, bt, 4 * H), lambda b, t: (t, b, 0)),
                # backward stream: chunks delivered in reversed time order
                pl.BlockSpec((Tc, bt, 4 * H), lambda b, t: (nc - 1 - t, b, 0)),
                pl.BlockSpec((H, 4 * H), lambda b, t: (0, 0)),    # whh fwd
                pl.BlockSpec((H, 4 * H), lambda b, t: (0, 0)),    # whh bwd
            ],
            out_specs=[
                pl.BlockSpec((Tc, bt, H), lambda b, t: (t, b, 0)),
                # backward output written straight to its natural positions
                pl.BlockSpec((Tc, bt, H), lambda b, t: (nc - 1 - t, b, 0)),
            ],
            scratch_shapes=[pltpu.VMEM((bt, H), f32)] * 4,
        ),
        compiler_params=pltpu.CompilerParams(
            dimension_semantics=("parallel", "arbitrary"),
            vmem_limit_bytes=budget),
    )(gf, gb, whh_f, whh_b)

    # ---- stage 3: fused output linear (no (.., 2H) concat) -----------------
    hf_flat = hf.reshape(N, H)
    hb_flat = hb.reshape(N, H)
    w_f = params["w_lin"][:H].astype(matmul_dtype)
    w_b = params["w_lin"][H:].astype(matmul_dtype)

    s3_w = 2 * 2 * H * O * wbytes
    s3_row = 2 * 4 * (2 * H + O)
    rt2 = _largest_divisor(N, min(512, max(8, (budget - s3_w) // max(s3_row, 1))),
                           multiple=8)

    out_flat = pl.pallas_call(
        functools.partial(_linear_kernel, matmul_dtype=matmul_dtype),
        out_shape=jax.ShapeDtypeStruct((N, O), f32),
        grid_spec=pltpu.PrefetchScalarGridSpec(
            num_scalar_prefetch=0,
            grid=(N // rt2,),
            in_specs=[
                pl.BlockSpec((rt2, H), lambda i: (i, 0)),
                pl.BlockSpec((rt2, H), lambda i: (i, 0)),
                pl.BlockSpec((H, O), lambda i: (0, 0)),
                pl.BlockSpec((H, O), lambda i: (0, 0)),
                pl.BlockSpec((1, O), lambda i: (0, 0)),
            ],
            out_specs=pl.BlockSpec((rt2, O), lambda i: (i, 0)),
        ),
        compiler_params=pltpu.CompilerParams(
            dimension_semantics=("parallel",),
            vmem_limit_bytes=budget),
    )(hf_flat, hb_flat, w_f, w_b, params["b_lin"])

    out = out_flat.reshape(T, B_pad, O)
    out = jnp.transpose(out, (1, 0, 2))           # back to batch-first
    return out[:B]                                # drop batch padding

# TODO(synk): nn.LSTM.flatten_parameters() is a CUDA-memory-layout hint only;
# it has no TPU/JAX equivalent and is intentionally a no-op here.


# ----------------------------------------------------------------------------
# Pure-JAX reference (semantics of nn.LSTM(bidirectional) + nn.Linear)
# ----------------------------------------------------------------------------
def _lstm_dir_ref(xt, wih, whh, b, H):
    B = xt.shape[1]

    def step(carry, x):
        h, c = carry
        g = x @ wih + h @ whh + b
        i = jax.nn.sigmoid(g[:, :H])
        f = jax.nn.sigmoid(g[:, H:2 * H])
        gg = jnp.tanh(g[:, 2 * H:3 * H])
        o = jax.nn.sigmoid(g[:, 3 * H:])
        c = f * c + i * gg
        h = o * jnp.tanh(c)
        return (h, c), h

    init = (jnp.zeros((B, H), jnp.float32), jnp.zeros((B, H), jnp.float32))
    _, hs = jax.lax.scan(step, init, xt)
    return hs


def reference(x, params):
    B, T, I = x.shape
    H = params["whh_f"].shape[0]
    xt = jnp.transpose(x, (1, 0, 2))
    hf = _lstm_dir_ref(xt, params["wih_f"], params["whh_f"], params["b_f"], H)
    hb = _lstm_dir_ref(xt[::-1], params["wih_b"], params["whh_b"],
                       params["b_b"], H)[::-1]
    rec = jnp.concatenate([hf, hb], axis=-1)
    out = rec @ params["w_lin"] + params["b_lin"]
    return jnp.transpose(out, (1, 0, 2))


# ----------------------------------------------------------------------------
# Parameter construction (PyTorch shapes transposed for matmul)
# ----------------------------------------------------------------------------
def make_params(key, input_size, hidden_size, output_size):
    ks = jax.random.split(key, 10)
    H, I, O = hidden_size, input_size, output_size
    u = lambda k, shape: jax.random.uniform(k, shape, jnp.float32, -0.1, 0.1)
    # PyTorch stores weight_ih (4H, I), weight_hh (4H, H); kept transposed.
    # b = b_ih + b_hh folded into one (1, 4H) bias per direction.
    return {
        "wih_f": u(ks[0], (I, 4 * H)),
        "whh_f": u(ks[1], (H, 4 * H)),
        "b_f":   u(ks[2], (1, 4 * H)) + u(ks[3], (1, 4 * H)),
        "wih_b": u(ks[4], (I, 4 * H)),
        "whh_b": u(ks[5], (H, 4 * H)),
        "b_b":   u(ks[6], (1, 4 * H)) + u(ks[7], (1, 4 * H)),
        "w_lin": u(ks[8], (2 * H, O)),
        "b_lin": u(ks[9], (1, O)),
    }


if __name__ == "__main__":
    B, T, INPUT, HIDDEN, OUTPUT = 2, 8, 16, 32, 16

    key = jax.random.PRNGKey(0)
    kx, kp = jax.random.split(key)
    x = jax.random.normal(kx, (B, T, INPUT), jnp.float32)
    params = make_params(kp, INPUT, HIDDEN, OUTPUT)

    ref = reference(x, params)

    # Exact-path check: f32 MXU matmuls vs the pure-JAX reference.
    fwd_f32 = jax.jit(functools.partial(bidirectional_lstm,
                                        matmul_dtype=jnp.float32))
    out_f32 = jax.block_until_ready(fwd_f32(x, params))
    assert out_f32.shape == (B, T, OUTPUT)
    assert jnp.allclose(out_f32, ref, atol=1e-4, rtol=1e-4), "f32 mismatch"

    # Default fast path (bf16 MXU, f32 accumulation): looser tolerance since
    # bf16 rounding compounds through the recurrence.
    out_bf16 = jax.block_until_ready(jax.jit(bidirectional_lstm)(x, params))
    assert out_bf16.shape == (B, T, OUTPUT)
    assert bool(jnp.all(jnp.isfinite(out_bf16)))
    assert jnp.allclose(out_bf16, ref, atol=5e-2, rtol=5e-2), "bf16 mismatch"

    print("KERNEL_OK")
</pallas_src>

<mosaic_0001>
module attributes {stable_mosaic.version = 11 : i64} {
  func.func @_input_proj_kernel(%arg0: i32, %arg1: memref<64x16xf32, #tpu.memory_space<vmem>>, %arg2: memref<16x256xf32, #tpu.memory_space<vmem>>, %arg3: memref<1x256xf32, #tpu.memory_space<vmem>>, %arg4: memref<64x128xf32, #tpu.memory_space<vmem>>, %arg5: memref<64x128xf32, #tpu.memory_space<vmem>>) attributes {dimension_semantics = [#tpu.dimension_semantics<parallel>], iteration_bounds = array<i64: 1>, scalar_prefetch = 0 : i64, scratch_operands = 0 : i64, tpu.core_type = #tpu.core_type<tc>, window_params = [{transform_indices = @transform_0, window_bounds = array<i64: 64, 16>}, {pipeline_mode = #tpu.pipeline_mode<synchronous>, transform_indices = @transform_1, window_bounds = array<i64: 16, 256>}, {pipeline_mode = #tpu.pipeline_mode<synchronous>, transform_indices = @transform_2, window_bounds = array<i64: 1, 256>}, {transform_indices = @transform_3, window_bounds = array<i64: 64, 128>}, {transform_indices = @transform_4, window_bounds = array<i64: 64, 128>}]} {
    %c0 = arith.constant 0 : index
    %c0_0 = arith.constant 0 : index
    %0 = vector.load %arg1[%c0, %c0_0] : memref<64x16xf32, #tpu.memory_space<vmem>>, vector<64x16xf32>
    %c0_1 = arith.constant 0 : index
    %c0_2 = arith.constant 0 : index
    %1 = vector.load %arg2[%c0_1, %c0_2] : memref<16x256xf32, #tpu.memory_space<vmem>>, vector<16x256xf32>
    %cst = arith.constant dense<0.000000e+00> : vector<64x256xf32>
    %2 = tpu.matmul %0, %1, %cst {dimension_numbers = #tpu.dot_dimension_numbers<[1], [0], [0], [1], [0, 0, 1, 1], [], []>} : vector<64x16xf32>, vector<16x256xf32>, vector<64x256xf32> -> vector<64x256xf32>
    %c0_3 = arith.constant 0 : index
    %c0_4 = arith.constant 0 : index
    %3 = vector.load %arg3[%c0_3, %c0_4] : memref<1x256xf32, #tpu.memory_space<vmem>>, vector<1x256xf32>
    %4 = vector.broadcast %3 : vector<1x256xf32> to vector<64x256xf32>
    %5 = arith.addf %2, %4 : vector<64x256xf32>
    %6 = vector.extract_strided_slice %5 {offsets = [0, 0], sizes = [64, 128], strides = [1, 1]} : vector<64x256xf32> to vector<64x128xf32>
    %c0_5 = arith.constant 0 : index
    %c0_6 = arith.constant 0 : index
    %7 = vector.load %arg4[%c0_5, %c0_6] : memref<64x128xf32, #tpu.memory_space<vmem>>, vector<64x128xf32>
    tpu.vector_store %arg4[%c0_5, %c0_6], %6 {strides = array<i32>} : memref<64x128xf32, #tpu.memory_space<vmem>>, vector<64x128xf32>,
    %8 = vector.extract_strided_slice %5 {offsets = [0, 128], sizes = [64, 128], strides = [1, 1]} : vector<64x256xf32> to vector<64x128xf32>
    %c0_7 = arith.constant 0 : index
    %c0_8 = arith.constant 0 : index
    %9 = vector.load %arg5[%c0_7, %c0_8] : memref<64x128xf32, #tpu.memory_space<vmem>>, vector<64x128xf32>
    tpu.vector_store %arg5[%c0_7, %c0_8], %8 {strides = array<i32>} : memref<64x128xf32, #tpu.memory_space<vmem>>, vector<64x128xf32>,
    return
  }
  func.func @transform_0(%arg0: i32) -> (i32, i32) {
    %c0_i32 = arith.constant 0 : i32
    %c0_i32_0 = arith.constant 0 : i32
    return %arg0, %c0_i32 : i32, i32
  }
  func.func @transform_1(%arg0: i32) -> (i32, i32) {
    %c0_i32 = arith.constant 0 : i32
    %c0_i32_0 = arith.constant 0 : i32
    %c0_i32_1 = arith.constant 0 : i32
    return %c0_i32, %c0_i32_0 : i32, i32
  }
  func.func @transform_2(%arg0: i32) -> (i32, i32) {
    %c0_i32 = arith.constant 0 : i32
    %c0_i32_0 = arith.constant 0 : i32
    %c0_i32_1 = arith.constant 0 : i32
    return %c0_i32, %c0_i32_0 : i32, i32
  }
  func.func @transform_3(%arg0: i32) -> (i32, i32) {
    %c0_i32 = arith.constant 0 : i32
    %c0_i32_0 = arith.constant 0 : i32
    return %arg0, %c0_i32 : i32, i32
  }
  func.func @transform_4(%arg0: i32) -> (i32, i32) {
    %c0_i32 = arith.constant 0 : i32
    %c0_i32_0 = arith.constant 0 : i32
    return %arg0, %c0_i32 : i32, i32
  }
}

module attributes {stable_mosaic.version = 11 : i64} {
  func.func @_linear_kernel(%arg0: i32, %arg1: memref<64x32xf32, #tpu.memory_space<vmem>>, %arg2: memref<64x32xf32, #tpu.memory_space<vmem>>, %arg3: memref<32x16xf32, #tpu.memory_space<vmem>>, %arg4: memref<32x16xf32, #tpu.memory_space<vmem>>, %arg5: memref<1x16xf32, #tpu.memory_space<vmem>>, %arg6: memref<64x16xf32, #tpu.memory_space<vmem>>) attributes {dimension_semantics = [#tpu.dimension_semantics<parallel>], iteration_bounds = array<i64: 1>, scalar_prefetch = 0 : i64, scratch_operands = 0 : i64, tpu.core_type = #tpu.core_type<tc>, window_params = [{transform_indices = @transform_0, window_bounds = array<i64: 64, 32>}, {transform_indices = @transform_1, window_bounds = array<i64: 64, 32>}, {pipeline_mode = #tpu.pipeline_mode<synchronous>, transform_indices = @transform_2, window_bounds = array<i64: 32, 16>}, {pipeline_mode = #tpu.pipeline_mode<synchronous>, transform_indices = @transform_3, window_bounds = array<i64: 32, 16>}, {pipeline_mode = #tpu.pipeline_mode<synchronous>, transform_indices = @transform_4, window_bounds = array<i64: 1, 16>}, {transform_indices = @transform_5, window_bounds = array<i64: 64, 16>}]} {
    %c0 = arith.constant 0 : index
    %c0_0 = arith.constant 0 : index
    %0 = vector.load %arg1[%c0, %c0_0] : memref<64x32xf32, #tpu.memory_space<vmem>>, vector<64x32xf32>
    %c0_1 = arith.constant 0 : index
    %c0_2 = arith.constant 0 : index
    %1 = vector.load %arg2[%c0_1, %c0_2] : memref<64x32xf32, #tpu.memory_space<vmem>>, vector<64x32xf32>
    %c0_3 = arith.constant 0 : index
    %c0_4 = arith.constant 0 : index
    %2 = vector.load %arg3[%c0_3, %c0_4] : memref<32x16xf32, #tpu.memory_space<vmem>>, vector<32x16xf32>
    %cst = arith.constant dense<0.000000e+00> : vector<64x16xf32>
    %3 = tpu.matmul %0, %2, %cst {dimension_numbers = #tpu.dot_dimension_numbers<[1], [0], [0], [1], [0, 0, 1, 1], [], []>} : vector<64x32xf32>, vector<32x16xf32>, vector<64x16xf32> -> vector<64x16xf32>
    %c0_5 = arith.constant 0 : index
    %c0_6 = arith.constant 0 : index
    %4 = vector.load %arg4[%c0_5, %c0_6] : memref<32x16xf32, #tpu.memory_space<vmem>>, vector<32x16xf32>
    %cst_7 = arith.constant dense<0.000000e+00> : vector<64x16xf32>
    %5 = tpu.matmul %1, %4, %cst_7 {dimension_numbers = #tpu.dot_dimension_numbers<[1], [0], [0], [1], [0, 0, 1, 1], [], []>} : vector<64x32xf32>, vector<32x16xf32>, vector<64x16xf32> -> vector<64x16xf32>
    %6 = arith.addf %3, %5 : vector<64x16xf32>
    %c0_8 = arith.constant 0 : index
    %c0_9 = arith.constant 0 : index
    %7 = vector.load %arg5[%c0_8, %c0_9] : memref<1x16xf32, #tpu.memory_space<vmem>>, vector<1x16xf32>
    %8 = vector.broadcast %7 : vector<1x16xf32> to vector<64x16xf32>
    %9 = arith.addf %6, %8 : vector<64x16xf32>
    %c0_10 = arith.constant 0 : index
    %c0_11 = arith.constant 0 : index
    %10 = vector.load %arg6[%c0_10, %c0_11] : memref<64x16xf32, #tpu.memory_space<vmem>>, vector<64x16xf32>
    tpu.vector_store %arg6[%c0_10, %c0_11], %9 {strides = array<i32>} : memref<64x16xf32, #tpu.memory_space<vmem>>, vector<64x16xf32>,
    return
  }
  func.func @transform_0(%arg0: i32) -> (i32, i32) {
    %c0_i32 = arith.constant 0 : i32
    %c0_i32_0 = arith.constant 0 : i32
    return %arg0, %c0_i32 : i32, i32
  }
  func.func @transform_1(%arg0: i32) -> (i32, i32) {
    %c0_i32 = arith.constant 0 : i32
    %c0_i32_0 = arith.constant 0 : i32
    return %arg0, %c0_i32 : i32, i32
  }
  func.func @transform_2(%arg0: i32) -> (i32, i32) {
    %c0_i32 = arith.constant 0 : i32
    %c0_i32_0 = arith.constant 0 : i32
    %c0_i32_1 = arith.constant 0 : i32
    return %c0_i32, %c0_i32_0 : i32, i32
  }
  func.func @transform_3(%arg0: i32) -> (i32, i32) {
    %c0_i32 = arith.constant 0 : i32
    %c0_i32_0 = arith.constant 0 : i32
    %c0_i32_1 = arith.constant 0 : i32
    return %c0_i32, %c0_i32_0 : i32, i32
  }
  func.func @transform_4(%arg0: i32) -> (i32, i32) {
    %c0_i32 = arith.constant 0 : i32
    %c0_i32_0 = arith.constant 0 : i32
    %c0_i32_1 = arith.constant 0 : i32
    return %c0_i32, %c0_i32_0 : i32, i32
  }
  func.func @transform_5(%arg0: i32) -> (i32, i32) {
    %c0_i32 = arith.constant 0 : i32
    %c0_i32_0 = arith.constant 0 : i32
    return %arg0, %c0_i32 : i32, i32
  }
}

module attributes {stable_mosaic.version = 11 : i64} {
  func.func @_bilstm_recurrent_kernel(%arg0: i32, %arg1: i32, %arg2: memref<8x8x128xf32, #tpu.memory_space<vmem>>, %arg3: memref<8x8x128xf32, #tpu.memory_space<vmem>>, %arg4: memref<32x128xf32, #tpu.memory_space<vmem>>, %arg5: memref<32x128xf32, #tpu.memory_space<vmem>>, %arg6: memref<8x8x32xf32, #tpu.memory_space<vmem>>, %arg7: memref<8x8x32xf32, #tpu.memory_space<vmem>>, %arg8: memref<8x32xf32, #tpu.memory_space<vmem>>, %arg9: memref<8x32xf32, #tpu.memory_space<vmem>>, %arg10: memref<8x32xf32, #tpu.memory_space<vmem>>, %arg11: memref<8x32xf32, #tpu.memory_space<vmem>>) attributes {dimension_semantics = [#tpu.dimension_semantics<parallel>, #tpu.dimension_semantics<arbitrary>], iteration_bounds = array<i64: 1, 1>, scalar_prefetch = 0 : i64, scratch_operands = 4 : i64, tpu.core_type = #tpu.core_type<tc>, window_params = [{transform_indices = @transform_0, window_bounds = array<i64: 8, 8, 128>}, {transform_indices = @transform_1, window_bounds = array<i64: 8, 8, 128>}, {pipeline_mode = #tpu.pipeline_mode<synchronous>, transform_indices = @transform_2, window_bounds = array<i64: 32, 128>}, {pipeline_mode = #tpu.pipeline_mode<synchronous>, transform_indices = @transform_3, window_bounds = array<i64: 32, 128>}, {transform_indices = @transform_4, window_bounds = array<i64: 8, 8, 32>}, {transform_indices = @transform_5, window_bounds = array<i64: 8, 8, 32>}]} {
    %c0_i32 = arith.constant 0 : i32
    %0 = arith.cmpi eq, %arg1, %c0_i32 : i32
    %1 = arith.extui %0 : i1 to i32
    %c0_i32_0 = arith.constant 0 : i32
    %2 = arith.cmpi ne, %1, %c0_i32_0 : i32
    scf.if %2 {
      %cst_252 = arith.constant 0.000000e+00 : f32
      %661 = vector.broadcast %cst_252 : f32 to vector<8x32xf32>
      %c0_253 = arith.constant 0 : index
      %c0_254 = arith.constant 0 : index
      %662 = vector.load %arg8[%c0_253, %c0_254] : memref<8x32xf32, #tpu.memory_space<vmem>>, vector<8x32xf32>
      tpu.vector_store %arg8[%c0_253, %c0_254], %661 {strides = array<i32>} : memref<8x32xf32, #tpu.memory_space<vmem>>, vector<8x32xf32>,
      %cst_255 = arith.constant 0.000000e+00 : f32
      %663 = vector.broadcast %cst_255 : f32 to vector<8x32xf32>
      %c0_256 = arith.constant 0 : index
      %c0_257 = arith.constant 0 : index
      %664 = vector.load %arg9[%c0_256, %c0_257] : memref<8x32xf32, #tpu.memory_space<vmem>>, vector<8x32xf32>
      tpu.vector_store %arg9[%c0_256, %c0_257], %663 {strides = array<i32>} : memref<8x32xf32, #tpu.memory_space<vmem>>, vector<8x32xf32>,
      %cst_258 = arith.constant 0.000000e+00 : f32
      %665 = vector.broadcast %cst_258 : f32 to vector<8x32xf32>
      %c0_259 = arith.constant 0 : index
      %c0_260 = arith.constant 0 : index
      %666 = vector.load %arg10[%c0_259, %c0_260] : memref<8x32xf32, #tpu.memory_space<vmem>>, vector<8x32xf32>
      tpu.vector_store %arg10[%c0_259, %c0_260], %665 {strides = array<i32>} : memref<8x32xf32, #tpu.memory_space<vmem>>, vector<8x32xf32>,
      %cst_261 = arith.constant 0.000000e+00 : f32
      %667 = vector.broadcast %cst_261 : f32 to vector<8x32xf32>
      %c0_262 = arith.constant 0 : index
      %c0_263 = arith.constant 0 : index
      %668 = vector.load %arg11[%c0_262, %c0_263] : memref<8x32xf32, #tpu.memory_space<vmem>>, vector<8x32xf32>
      tpu.vector_store %arg11[%c0_262, %c0_263], %667 {strides = array<i32>} : memref<8x32xf32, #tpu.memory_space<vmem>>, vector<8x32xf32>,
    } else {
    }
    %c0 = arith.constant 0 : index
    %c0_1 = arith.constant 0 : index
    %3 = vector.load %arg4[%c0, %c0_1] : memref<32x128xf32, #tpu.memory_space<vmem>>, vector<32x128xf32>
    %c0_2 = arith.constant 0 : index
    %c0_3 = arith.constant 0 : index
    %4 = vector.load %arg5[%c0_2, %c0_3] : memref<32x128xf32, #tpu.memory_space<vmem>>, vector<32x128xf32>
    %c0_4 = arith.constant 0 : index
    %c0_5 = arith.constant 0 : index
    %5 = vector.load %arg8[%c0_4, %c0_5] : memref<8x32xf32, #tpu.memory_space<vmem>>, vector<8x32xf32>
    %c0_6 = arith.constant 0 : index
    %c0_7 = arith.constant 0 : index
    %6 = vector.load %arg9[%c0_6, %c0_7] : memref<8x32xf32, #tpu.memory_space<vmem>>, vector<8x32xf32>
    %c0_8 = arith.constant 0 : index
    %c0_9 = arith.constant 0 : index
    %7 = vector.load %arg10[%c0_8, %c0_9] : memref<8x32xf32, #tpu.memory_space<vmem>>, vector<8x32xf32>
    %c0_10 = arith.constant 0 : index
    %c0_11 = arith.constant 0 : index
    %8 = vector.load %arg11[%c0_10, %c0_11] : memref<8x32xf32, #tpu.memory_space<vmem>>, vector<8x32xf32>
    %c0_i32_12 = arith.constant 0 : i32
    %9 = arith.index_cast %c0_i32_12 : i32 to index
    %c0_13 = arith.constant 0 : index
    %c0_14 = arith.constant 0 : index
    %10 = vector.load %arg2[%9, %c0_13, %c0_14] : memref<8x8x128xf32, #tpu.memory_space<vmem>>, vector<1x8x128xf32>
    %11 = vector.shape_cast %10 : vector<1x8x128xf32> to vector<8x128xf32>
    %cst = arith.constant dense<0.000000e+00> : vector<8x128xf32>
    %12 = tpu.matmul %5, %3, %cst {dimension_numbers = #tpu.dot_dimension_numbers<[1], [0], [0], [1], [0, 0, 1, 1], [], []>} : vector<8x32xf32>, vector<32x128xf32>, vector<8x128xf32> -> vector<8x128xf32>
    %13 = arith.addf %11, %12 : vector<8x128xf32>
    %14 = vector.extract_strided_slice %13 {offsets = [0, 0], sizes = [8, 32], strides = [1, 1]} : vector<8x128xf32> to vector<8x32xf32>
    %cst_15 = arith.constant 5.000000e-01 : f32
    %15 = vector.broadcast %cst_15 : f32 to vector<8x32xf32>
    %16 = arith.mulf %15, %14 : vector<8x32xf32>
    %17 = math.tanh %16 : vector<8x32xf32>
    %cst_16 = arith.constant 5.000000e-01 : f32
    %18 = vector.broadcast %cst_16 : f32 to vector<8x32xf32>
    %19 = arith.mulf %18, %17 : vector<8x32xf32>
    %cst_17 = arith.constant 5.000000e-01 : f32
    %20 = vector.broadcast %cst_17 : f32 to vector<8x32xf32>
    %21 = arith.addf %19, %20 : vector<8x32xf32>
    %22 = vector.extract_strided_slice %13 {offsets = [0, 32], sizes = [8, 32], strides = [1, 1]} : vector<8x128xf32> to vector<8x32xf32>
    %cst_18 = arith.constant 5.000000e-01 : f32
    %23 = vector.broadcast %cst_18 : f32 to vector<8x32xf32>
    %24 = arith.mulf %23, %22 : vector<8x32xf32>
    %25 = math.tanh %24 : vector<8x32xf32>
    %cst_19 = arith.constant 5.000000e-01 : f32
    %26 = vector.broadcast %cst_19 : f32 to vector<8x32xf32>
    %27 = arith.mulf %26, %25 : vector<8x32xf32>
    %cst_20 = arith.constant 5.000000e-01 : f32
    %28 = vector.broadcast %cst_20 : f32 to vector<8x32xf32>
    %29 = arith.addf %27, %28 : vector<8x32xf32>
    %30 = vector.extract_strided_slice %13 {offsets = [0, 64], sizes = [8, 32], strides = [1, 1]} : vector<8x128xf32> to vector<8x32xf32>
    %31 = math.tanh %30 : vector<8x32xf32>
    %32 = vector.extract_strided_slice %13 {offsets = [0, 96], sizes = [8, 32], strides = [1, 1]} : vector<8x128xf32> to vector<8x32xf32>
    %cst_21 = arith.constant 5.000000e-01 : f32
    %33 = vector.broadcast %cst_21 : f32 to vector<8x32xf32>
    %34 = arith.mulf %33, %32 : vector<8x32xf32>
    %35 = math.tanh %34 : vector<8x32xf32>
    %cst_22 = arith.constant 5.000000e-01 : f32
    %36 = vector.broadcast %cst_22 : f32 to vector<8x32xf32>
    %37 = arith.mulf %36, %35 : vector<8x32xf32>
    %cst_23 = arith.constant 5.000000e-01 : f32
    %38 = vector.broadcast %cst_23 : f32 to vector<8x32xf32>
    %39 = arith.addf %37, %38 : vector<8x32xf32>
    %40 = arith.mulf %29, %6 : vector<8x32xf32>
    %41 = arith.mulf %21, %31 : vector<8x32xf32>
    %42 = arith.addf %40, %41 : vector<8x32xf32>
    %43 = math.tanh %42 : vector<8x32xf32>
    %44 = arith.mulf %39, %43 : vector<8x32xf32>
    %45 = arith.index_cast %c0_i32_12 : i32 to index
    %c0_24 = arith.constant 0 : index
    %c0_25 = arith.constant 0 : index
    %46 = vector.load %arg6[%45, %c0_24, %c0_25] : memref<8x8x32xf32, #tpu.memory_space<vmem>>, vector<1x8x32xf32>
    %47 = vector.shape_cast %46 : vector<1x8x32xf32> to vector<8x32xf32>
    %48 = vector.shape_cast %44 : vector<8x32xf32> to vector<1x8x32xf32>
    tpu.vector_store %arg6[%45, %c0_24, %c0_25], %48 {strides = array<i32>} : memref<8x8x32xf32, #tpu.memory_space<vmem>>, vector<1x8x32xf32>,
    %c7_i32 = arith.constant 7 : i32
    %49 = arith.subi %c7_i32, %c0_i32_12 : i32
    %50 = arith.index_cast %49 : i32 to index
    %c0_26 = arith.constant 0 : index
    %c0_27 = arith.constant 0 : index
    %51 = vector.load %arg3[%50, %c0_26, %c0_27] : memref<8x8x128xf32, #tpu.memory_space<vmem>>, vector<1x8x128xf32>
    %52 = vector.shape_cast %51 : vector<1x8x128xf32> to vector<8x128xf32>
    %cst_28 = arith.constant dense<0.000000e+00> : vector<8x128xf32>
    %53 = tpu.matmul %7, %4, %cst_28 {dimension_numbers = #tpu.dot_dimension_numbers<[1], [0], [0], [1], [0, 0, 1, 1], [], []>} : vector<8x32xf32>, vector<32x128xf32>, vector<8x128xf32> -> vector<8x128xf32>
    %54 = arith.addf %52, %53 : vector<8x128xf32>
    %55 = vector.extract_strided_slice %54 {offsets = [0, 0], sizes = [8, 32], strides = [1, 1]} : vector<8x128xf32> to vector<8x32xf32>
    %cst_29 = arith.constant 5.000000e-01 : f32
    %56 = vector.broadcast %cst_29 : f32 to vector<8x32xf32>
    %57 = arith.mulf %56, %55 : vector<8x32xf32>
    %58 = math.tanh %57 : vector<8x32xf32>
    %cst_30 = arith.constant 5.000000e-01 : f32
    %59 = vector.broadcast %cst_30 : f32 to vector<8x32xf32>
    %60 = arith.mulf %59, %58 : vector<8x32xf32>
    %cst_31 = arith.constant 5.000000e-01 : f32
    %61 = vector.broadcast %cst_31 : f32 to vector<8x32xf32>
    %62 = arith.addf %60, %61 : vector<8x32xf32>
    %63 = vector.extract_strided_slice %54 {offsets = [0, 32], sizes = [8, 32], strides = [1, 1]} : vector<8x128xf32> to vector<8x32xf32>
    %cst_32 = arith.constant 5.000000e-01 : f32
    %64 = vector.broadcast %cst_32 : f32 to vector<8x32xf32>
    %65 = arith.mulf %64, %63 : vector<8x32xf32>
    %66 = math.tanh %65 : vector<8x32xf32>
    %cst_33 = arith.constant 5.000000e-01 : f32
    %67 = vector.broadcast %cst_33 : f32 to vector<8x32xf32>
    %68 = arith.mulf %67, %66 : vector<8x32xf32>
    %cst_34 = arith.constant 5.000000e-01 : f32
    %69 = vector.broadcast %cst_34 : f32 to vector<8x32xf32>
    %70 = arith.addf %68, %69 : vector<8x32xf32>
    %71 = vector.extract_strided_slice %54 {offsets = [0, 64], sizes = [8, 32], strides = [1, 1]} : vector<8x128xf32> to vector<8x32xf32>
    %72 = math.tanh %71 : vector<8x32xf32>
    %73 = vector.extract_strided_slice %54 {offsets = [0, 96], sizes = [8, 32], strides = [1, 1]} : vector<8x128xf32> to vector<8x32xf32>
    %cst_35 = arith.constant 5.000000e-01 : f32
    %74 = vector.broadcast %cst_35 : f32 to vector<8x32xf32>
    %75 = arith.mulf %74, %73 : vector<8x32xf32>
    %76 = math.tanh %75 : vector<8x32xf32>
    %cst_36 = arith.constant 5.000000e-01 : f32
    %77 = vector.broadcast %cst_36 : f32 to vector<8x32xf32>
    %78 = arith.mulf %77, %76 : vector<8x32xf32>
    %cst_37 = arith.constant 5.000000e-01 : f32
    %79 = vector.broadcast %cst_37 : f32 to vector<8x32xf32>
    %80 = arith.addf %78, %79 : vector<8x32xf32>
    %81 = arith.mulf %70, %8 : vector<8x32xf32>
    %82 = arith.mulf %62, %72 : vector<8x32xf32>
    %83 = arith.addf %81, %82 : vector<8x32xf32>
    %84 = math.tanh %83 : vector<8x32xf32>
    %85 = arith.mulf %80, %84 : vector<8x32xf32>
    %86 = arith.index_cast %49 : i32 to index
    %c0_38 = arith.constant 0 : index
    %c0_39 = arith.constant 0 : index
    %87 = vector.load %arg7[%86, %c0_38, %c0_39] : memref<8x8x32xf32, #tpu.memory_space<vmem>>, vector<1x8x32xf32>
    %88 = vector.shape_cast %87 : vector<1x8x32xf32> to vector<8x32xf32>
    %89 = vector.shape_cast %85 : vector<8x32xf32> to vector<1x8x32xf32>
    tpu.vector_store %arg7[%86, %c0_38, %c0_39], %89 {strides = array<i32>} : memref<8x8x32xf32, #tpu.memory_space<vmem>>, vector<1x8x32xf32>,
    %c1_i32 = arith.constant 1 : i32
    %90 = arith.index_cast %c1_i32 : i32 to index
    %c0_40 = arith.constant 0 : index
    %c0_41 = arith.constant 0 : index
    %91 = vector.load %arg2[%90, %c0_40, %c0_41] : memref<8x8x128xf32, #tpu.memory_space<vmem>>, vector<1x8x128xf32>
    %92 = vector.shape_cast %91 : vector<1x8x128xf32> to vector<8x128xf32>
    %cst_42 = arith.constant dense<0.000000e+00> : vector<8x128xf32>
    %93 = tpu.matmul %44, %3, %cst_42 {dimension_numbers = #tpu.dot_dimension_numbers<[1], [0], [0], [1], [0, 0, 1, 1], [], []>} : vector<8x32xf32>, vector<32x128xf32>, vector<8x128xf32> -> vector<8x128xf32>
    %94 = arith.addf %92, %93 : vector<8x128xf32>
    %95 = vector.extract_strided_slice %94 {offsets = [0, 0], sizes = [8, 32], strides = [1, 1]} : vector<8x128xf32> to vector<8x32xf32>
    %cst_43 = arith.constant 5.000000e-01 : f32
    %96 = vector.broadcast %cst_43 : f32 to vector<8x32xf32>
    %97 = arith.mulf %96, %95 : vector<8x32xf32>
    %98 = math.tanh %97 : vector<8x32xf32>
    %cst_44 = arith.constant 5.000000e-01 : f32
    %99 = vector.broadcast %cst_44 : f32 to vector<8x32xf32>
    %100 = arith.mulf %99, %98 : vector<8x32xf32>
    %cst_45 = arith.constant 5.000000e-01 : f32
    %101 = vector.broadcast %cst_45 : f32 to vector<8x32xf32>
    %102 = arith.addf %100, %101 : vector<8x32xf32>
    %103 = vector.extract_strided_slice %94 {offsets = [0, 32], sizes = [8, 32], strides = [1, 1]} : vector<8x128xf32> to vector<8x32xf32>
    %cst_46 = arith.constant 5.000000e-01 : f32
    %104 = vector.broadcast %cst_46 : f32 to vector<8x32xf32>
    %105 = arith.mulf %104, %103 : vector<8x32xf32>
    %106 = math.tanh %105 : vector<8x32xf32>
    %cst_47 = arith.constant 5.000000e-01 : f32
    %107 = vector.broadcast %cst_47 : f32 to vector<8x32xf32>
    %108 = arith.mulf %107, %106 : vector<8x32xf32>
    %cst_48 = arith.constant 5.000000e-01 : f32
    %109 = vector.broadcast %cst_48 : f32 to vector<8x32xf32>
    %110 = arith.addf %108, %109 : vector<8x32xf32>
    %111 = vector.extract_strided_slice %94 {offsets = [0, 64], sizes = [8, 32], strides = [1, 1]} : vector<8x128xf32> to vector<8x32xf32>
    %112 = math.tanh %111 : vector<8x32xf32>
    %113 = vector.extract_strided_slice %94 {offsets = [0, 96], sizes = [8, 32], strides = [1, 1]} : vector<8x128xf32> to vector<8x32xf32>
    %cst_49 = arith.constant 5.000000e-01 : f32
    %114 = vector.broadcast %cst_49 : f32 to vector<8x32xf32>
    %115 = arith.mulf %114, %113 : vector<8x32xf32>
    %116 = math.tanh %115 : vector<8x32xf32>
    %cst_50 = arith.constant 5.000000e-01 : f32
    %117 = vector.broadcast %cst_50 : f32 to vector<8x32xf32>
    %118 = arith.mulf %117, %116 : vector<8x32xf32>
    %cst_51 = arith.constant 5.000000e-01 : f32
    %119 = vector.broadcast %cst_51 : f32 to vector<8x32xf32>
    %120 = arith.addf %118, %119 : vector<8x32xf32>
    %121 = arith.mulf %110, %42 : vector<8x32xf32>
    %122 = arith.mulf %102, %112 : vector<8x32xf32>
    %123 = arith.addf %121, %122 : vector<8x32xf32>
    %124 = math.tanh %123 : vector<8x32xf32>
    %125 = arith.mulf %120, %124 : vector<8x32xf32>
    %126 = arith.index_cast %c1_i32 : i32 to index
    %c0_52 = arith.constant 0 : index
    %c0_53 = arith.constant 0 : index
    %127 = vector.load %arg6[%126, %c0_52, %c0_53] : memref<8x8x32xf32, #tpu.memory_space<vmem>>, vector<1x8x32xf32>
    %128 = vector.shape_cast %127 : vector<1x8x32xf32> to vector<8x32xf32>
    %129 = vector.shape_cast %125 : vector<8x32xf32> to vector<1x8x32xf32>
    tpu.vector_store %arg6[%126, %c0_52, %c0_53], %129 {strides = array<i32>} : memref<8x8x32xf32, #tpu.memory_space<vmem>>, vector<1x8x32xf32>,
    %c7_i32_54 = arith.constant 7 : i32
    %130 = arith.subi %c7_i32_54, %c1_i32 : i32
    %131 = arith.index_cast %130 : i32 to index
    %c0_55 = arith.constant 0 : index
    %c0_56 = arith.constant 0 : index
    %132 = vector.load %arg3[%131, %c0_55, %c0_56] : memref<8x8x128xf32, #tpu.memory_space<vmem>>, vector<1x8x128xf32>
    %133 = vector.shape_cast %132 : vector<1x8x128xf32> to vector<8x128xf32>
    %cst_57 = arith.constant dense<0.000000e+00> : vector<8x128xf32>
    %134 = tpu.matmul %85, %4, %cst_57 {dimension_numbers = #tpu.dot_dimension_numbers<[1], [0], [0], [1], [0, 0, 1, 1], [], []>} : vector<8x32xf32>, vector<32x128xf32>, vector<8x128xf32> -> vector<8x128xf32>
    %135 = arith.addf %133, %134 : vector<8x128xf32>
    %136 = vector.extract_strided_slice %135 {offsets = [0, 0], sizes = [8, 32], strides = [1, 1]} : vector<8x128xf32> to vector<8x32xf32>
    %cst_58 = arith.constant 5.000000e-01 : f32
    %137 = vector.broadcast %cst_58 : f32 to vector<8x32xf32>
    %138 = arith.mulf %137, %136 : vector<8x32xf32>
    %139 = math.tanh %138 : vector<8x32xf32>
    %cst_59 = arith.constant 5.000000e-01 : f32
    %140 = vector.broadcast %cst_59 : f32 to vector<8x32xf32>
    %141 = arith.mulf %140, %139 : vector<8x32xf32>
    %cst_60 = arith.constant 5.000000e-01 : f32
    %142 = vector.broadcast %cst_60 : f32 to vector<8x32xf32>
    %143 = arith.addf %141, %142 : vector<8x32xf32>
    %144 = vector.extract_strided_slice %135 {offsets = [0, 32], sizes = [8, 32], strides = [1, 1]} : vector<8x128xf32> to vector<8x32xf32>
    %cst_61 = arith.constant 5.000000e-01 : f32
    %145 = vector.broadcast %cst_61 : f32 to vector<8x32xf32>
    %146 = arith.mulf %145, %144 : vector<8x32xf32>
    %147 = math.tanh %146 : vector<8x32xf32>
    %cst_62 = arith.constant 5.000000e-01 : f32
    %148 = vector.broadcast %cst_62 : f32 to vector<8x32xf32>
    %149 = arith.mulf %148, %147 : vector<8x32xf32>
    %cst_63 = arith.constant 5.000000e-01 : f32
    %150 = vector.broadcast %cst_63 : f32 to vector<8x32xf32>
    %151 = arith.addf %149, %150 : vector<8x32xf32>
    %152 = vector.extract_strided_slice %135 {offsets = [0, 64], sizes = [8, 32], strides = [1, 1]} : vector<8x128xf32> to vector<8x32xf32>
    %153 = math.tanh %152 : vector<8x32xf32>
    %154 = vector.extract_strided_slice %135 {offsets = [0, 96], sizes = [8, 32], strides = [1, 1]} : vector<8x128xf32> to vector<8x32xf32>
    %cst_64 = arith.constant 5.000000e-01 : f32
    %155 = vector.broadcast %cst_64 : f32 to vector<8x32xf32>
    %156 = arith.mulf %155, %154 : vector<8x32xf32>
    %157 = math.tanh %156 : vector<8x32xf32>
    %cst_65 = arith.constant 5.000000e-01 : f32
    %158 = vector.broadcast %cst_65 : f32 to vector<8x32xf32>
    %159 = arith.mulf %158, %157 : vector<8x32xf32>
    %cst_66 = arith.constant 5.000000e-01 : f32
    %160 = vector.broadcast %cst_66 : f32 to vector<8x32xf32>
    %161 = arith.addf %159, %160 : vector<8x32xf32>
    %162 = arith.mulf %151, %83 : vector<8x32xf32>
    %163 = arith.mulf %143, %153 : vector<8x32xf32>
    %164 = arith.addf %162, %163 : vector<8x32xf32>
    %165 = math.tanh %164 : vector<8x32xf32>
    %166 = arith.mulf %161, %165 : vector<8x32xf32>
    %167 = arith.index_cast %130 : i32 to index
    %c0_67 = arith.constant 0 : index
    %c0_68 = arith.constant 0 : index
    %168 = vector.load %arg7[%167, %c0_67, %c0_68] : memref<8x8x32xf32, #tpu.memory_space<vmem>>, vector<1x8x32xf32>
    %169 = vector.shape_cast %168 : vector<1x8x32xf32> to vector<8x32xf32>
    %170 = vector.shape_cast %166 : vector<8x32xf32> to vector<1x8x32xf32>
    tpu.vector_store %arg7[%167, %c0_67, %c0_68], %170 {strides = array<i32>} : memref<8x8x32xf32, #tpu.memory_space<vmem>>, vector<1x8x32xf32>,
    %c2_i32 = arith.constant 2 : i32
    %171 = arith.index_cast %c2_i32 : i32 to index
    %c0_69 = arith.constant 0 : index
    %c0_70 = arith.constant 0 : index
    %172 = vector.load %arg2[%171, %c0_69, %c0_70] : memref<8x8x128xf32, #tpu.memory_space<vmem>>, vector<1x8x128xf32>
    %173 = vector.shape_cast %172 : vector<1x8x128xf32> to vector<8x128xf32>
    %cst_71 = arith.constant dense<0.000000e+00> : vector<8x128xf32>
    %174 = tpu.matmul %125, %3, %cst_71 {dimension_numbers = #tpu.dot_dimension_numbers<[1], [0], [0], [1], [0, 0, 1, 1], [], []>} : vector<8x32xf32>, vector<32x128xf32>, vector<8x128xf32> -> vector<8x128xf32>
    %175 = arith.addf %173, %174 : vector<8x128xf32>
    %176 = vector.extract_strided_slice %175 {offsets = [0, 0], sizes = [8, 32], strides = [1, 1]} : vector<8x128xf32> to vector<8x32xf32>
    %cst_72 = arith.constant 5.000000e-01 : f32
    %177 = vector.broadcast %cst_72 : f32 to vector<8x32xf32>
    %178 = arith.mulf %177, %176 : vector<8x32xf32>
    %179 = math.tanh %178 : vector<8x32xf32>
    %cst_73 = arith.constant 5.000000e-01 : f32
    %180 = vector.broadcast %cst_73 : f32 to vector<8x32xf32>
    %181 = arith.mulf %180, %179 : vector<8x32xf32>
    %cst_74 = arith.constant 5.000000e-01 : f32
    %182 = vector.broadcast %cst_74 : f32 to vector<8x32xf32>
    %183 = arith.addf %181, %182 : vector<8x32xf32>
    %184 = vector.extract_strided_slice %175 {offsets = [0, 32], sizes = [8, 32], strides = [1, 1]} : vector<8x128xf32> to vector<8x32xf32>
    %cst_75 = arith.constant 5.000000e-01 : f32
    %185 = vector.broadcast %cst_75 : f32 to vector<8x32xf32>
    %186 = arith.mulf %185, %184 : vector<8x32xf32>
    %187 = math.tanh %186 : vector<8x32xf32>
    %cst_76 = arith.constant 5.000000e-01 : f32
    %188 = vector.broadcast %cst_76 : f32 to vector<8x32xf32>
    %189 = arith.mulf %188, %187 : vector<8x32xf32>
    %cst_77 = arith.constant 5.000000e-01 : f32
    %190 = vector.broadcast %cst_77 : f32 to vector<8x32xf32>
    %191 = arith.addf %189, %190 : vector<8x32xf32>
    %192 = vector.extract_strided_slice %175 {offsets = [0, 64], sizes = [8, 32], strides = [1, 1]} : vector<8x128xf32> to vector<8x32xf32>
    %193 = math.tanh %192 : vector<8x32xf32>
    %194 = vector.extract_strided_slice %175 {offsets = [0, 96], sizes = [8, 32], strides = [1, 1]} : vector<8x128xf32> to vector<8x32xf32>
    %cst_78 = arith.constant 5.000000e-01 : f32
    %195 = vector.broadcast %cst_78 : f32 to vector<8x32xf32>
    %196 = arith.mulf %195, %194 : vector<8x32xf32>
    %197 = math.tanh %196 : vector<8x32xf32>
    %cst_79 = arith.constant 5.000000e-01 : f32
    %198 = vector.broadcast %cst_79 : f32 to vector<8x32xf32>
    %199 = arith.mulf %198, %197 : vector<8x32xf32>
    %cst_80 = arith.constant 5.000000e-01 : f32
    %200 = vector.broadcast %cst_80 : f32 to vector<8x32xf32>
    %201 = arith.addf %199, %200 : vector<8x32xf32>
    %202 = arith.mulf %191, %123 : vector<8x32xf32>
    %203 = arith.mulf %183, %193 : vector<8x32xf32>
    %204 = arith.addf %202, %203 : vector<8x32xf32>
    %205 = math.tanh %204 : vector<8x32xf32>
    %206 = arith.mulf %201, %205 : vector<8x32xf32>
    %207 = arith.index_cast %c2_i32 : i32 to index
    %c0_81 = arith.constant 0 : index
    %c0_82 = arith.constant 0 : index
    %208 = vector.load %arg6[%207, %c0_81, %c0_82] : memref<8x8x32xf32, #tpu.memory_space<vmem>>, vector<1x8x32xf32>
    %209 = vector.shape_cast %208 : vector<1x8x32xf32> to vector<8x32xf32>
    %210 = vector.shape_cast %206 : vector<8x32xf32> to vector<1x8x32xf32>
    tpu.vector_store %arg6[%207, %c0_81, %c0_82], %210 {strides = array<i32>} : memref<8x8x32xf32, #tpu.memory_space<vmem>>, vector<1x8x32xf32>,
    %c7_i32_83 = arith.constant 7 : i32
    %211 = arith.subi %c7_i32_83, %c2_i32 : i32
    %212 = arith.index_cast %211 : i32 to index
    %c0_84 = arith.constant 0 : index
    %c0_85 = arith.constant 0 : index
    %213 = vector.load %arg3[%212, %c0_84, %c0_85] : memref<8x8x128xf32, #tpu.memory_space<vmem>>, vector<1x8x128xf32>
    %214 = vector.shape_cast %213 : vector<1x8x128xf32> to vector<8x128xf32>
    %cst_86 = arith.constant dense<0.000000e+00> : vector<8x128xf32>
    %215 = tpu.matmul %166, %4, %cst_86 {dimension_numbers = #tpu.dot_dimension_numbers<[1], [0], [0], [1], [0, 0, 1, 1], [], []>} : vector<8x32xf32>, vector<32x128xf32>, vector<8x128xf32> -> vector<8x128xf32>
    %216 = arith.addf %214, %215 : vector<8x128xf32>
    %217 = vector.extract_strided_slice %216 {offsets = [0, 0], sizes = [8, 32], strides = [1, 1]} : vector<8x128xf32> to vector<8x32xf32>
    %cst_87 = arith.constant 5.000000e-01 : f32
    %218 = vector.broadcast %cst_87 : f32 to vector<8x32xf32>
    %219 = arith.mulf %218, %217 : vector<8x32xf32>
    %220 = math.tanh %219 : vector<8x32xf32>
    %cst_88 = arith.constant 5.000000e-01 : f32
    %221 = vector.broadcast %cst_88 : f32 to vector<8x32xf32>
    %222 = arith.mulf %221, %220 : vector<8x32xf32>
    %cst_89 = arith.constant 5.000000e-01 : f32
    %223 = vector.broadcast %cst_89 : f32 to vector<8x32xf32>
    %224 = arith.addf %222, %223 : vector<8x32xf32>
    %225 = vector.extract_strided_slice %216 {offsets = [0, 32], sizes = [8, 32], strides = [1, 1]} : vector<8x128xf32> to vector<8x32xf32>
    %cst_90 = arith.constant 5.000000e-01 : f32
    %226 = vector.broadcast %cst_90 : f32 to vector<8x32xf32>
    %227 = arith.mulf %226, %225 : vector<8x32xf32>
    %228 = math.tanh %227 : vector<8x32xf32>
    %cst_91 = arith.constant 5.000000e-01 : f32
    %229 = vector.broadcast %cst_91 : f32 to vector<8x32xf32>
    %230 = arith.mulf %229, %228 : vector<8x32xf32>
    %cst_92 = arith.constant 5.000000e-01 : f32
    %231 = vector.broadcast %cst_92 : f32 to vector<8x32xf32>
    %232 = arith.addf %230, %231 : vector<8x32xf32>
    %233 = vector.extract_strided_slice %216 {offsets = [0, 64], sizes = [8, 32], strides = [1, 1]} : vector<8x128xf32> to vector<8x32xf32>
    %234 = math.tanh %233 : vector<8x32xf32>
    %235 = vector.extract_strided_slice %216 {offsets = [0, 96], sizes = [8, 32], strides = [1, 1]} : vector<8x128xf32> to vector<8x32xf32>
    %cst_93 = arith.constant 5.000000e-01 : f32
    %236 = vector.broadcast %cst_93 : f32 to vector<8x32xf32>
    %237 = arith.mulf %236, %235 : vector<8x32xf32>
    %238 = math.tanh %237 : vector<8x32xf32>
    %cst_94 = arith.constant 5.000000e-01 : f32
    %239 = vector.broadcast %cst_94 : f32 to vector<8x32xf32>
    %240 = arith.mulf %239, %238 : vector<8x32xf32>
    %cst_95 = arith.constant 5.000000e-01 : f32
    %241 = vector.broadcast %cst_95 : f32 to vector<8x32xf32>
    %242 = arith.addf %240, %241 : vector<8x32xf32>
    %243 = arith.mulf %232, %164 : vector<8x32xf32>
    %244 = arith.mulf %224, %234 : vector<8x32xf32>
    %245 = arith.addf %243, %244 : vector<8x32xf32>
    %246 = math.tanh %245 : vector<8x32xf32>
    %247 = arith.mulf %242, %246 : vector<8x32xf32>
    %248 = arith.index_cast %211 : i32 to index
    %c0_96 = arith.constant 0 : index
    %c0_97 = arith.constant 0 : index
    %249 = vector.load %arg7[%248, %c0_96, %c0_97] : memref<8x8x32xf32, #tpu.memory_space<vmem>>, vector<1x8x32xf32>
    %250 = vector.shape_cast %249 : vector<1x8x32xf32> to vector<8x32xf32>
    %251 = vector.shape_cast %247 : vector<8x32xf32> to vector<1x8x32xf32>
    tpu.vector_store %arg7[%248, %c0_96, %c0_97], %251 {strides = array<i32>} : memref<8x8x32xf32, #tpu.memory_space<vmem>>, vector<1x8x32xf32>,
    %c3_i32 = arith.constant 3 : i32
    %252 = arith.index_cast %c3_i32 : i32 to index
    %c0_98 = arith.constant 0 : index
    %c0_99 = arith.constant 0 : index
    %253 = vector.load %arg2[%252, %c0_98, %c0_99] : memref<8x8x128xf32, #tpu.memory_space<vmem>>, vector<1x8x128xf32>
    %254 = vector.shape_cast %253 : vector<1x8x128xf32> to vector<8x128xf32>
    %cst_100 = arith.constant dense<0.000000e+00> : vector<8x128xf32>
    %255 = tpu.matmul %206, %3, %cst_100 {dimension_numbers = #tpu.dot_dimension_numbers<[1], [0], [0], [1], [0, 0, 1, 1], [], []>} : vector<8x32xf32>, vector<32x128xf32>, vector<8x128xf32> -> vector<8x128xf32>
    %256 = arith.addf %254, %255 : vector<8x128xf32>
    %257 = vector.extract_strided_slice %256 {offsets = [0, 0], sizes = [8, 32], strides = [1, 1]} : vector<8x128xf32> to vector<8x32xf32>
    %cst_101 = arith.constant 5.000000e-01 : f32
    %258 = vector.broadcast %cst_101 : f32 to vector<8x32xf32>
    %259 = arith.mulf %258, %257 : vector<8x32xf32>
    %260 = math.tanh %259 : vector<8x32xf32>
    %cst_102 = arith.constant 5.000000e-01 : f32
    %261 = vector.broadcast %cst_102 : f32 to vector<8x32xf32>
    %262 = arith.mulf %261, %260 : vector<8x32xf32>
    %cst_103 = arith.constant 5.000000e-01 : f32
    %263 = vector.broadcast %cst_103 : f32 to vector<8x32xf32>
    %264 = arith.addf %262, %263 : vector<8x32xf32>
    %265 = vector.extract_strided_slice %256 {offsets = [0, 32], sizes = [8, 32], strides = [1, 1]} : vector<8x128xf32> to vector<8x32xf32>
    %cst_104 = arith.constant 5.000000e-01 : f32
    %266 = vector.broadcast %cst_104 : f32 to vector<8x32xf32>
    %267 = arith.mulf %266, %265 : vector<8x32xf32>
    %268 = math.tanh %267 : vector<8x32xf32>
    %cst_105 = arith.constant 5.000000e-01 : f32
    %269 = vector.broadcast %cst_105 : f32 to vector<8x32xf32>
    %270 = arith.mulf %269, %268 : vector<8x32xf32>
    %cst_106 = arith.constant 5.000000e-01 : f32
    %271 = vector.broadcast %cst_106 : f32 to vector<8x32xf32>
    %272 = arith.addf %270, %271 : vector<8x32xf32>
    %273 = vector.extract_strided_slice %256 {offsets = [0, 64], sizes = [8, 32], strides = [1, 1]} : vector<8x128xf32> to vector<8x32xf32>
    %274 = math.tanh %273 : vector<8x32xf32>
    %275 = vector.extract_strided_slice %256 {offsets = [0, 96], sizes = [8, 32], strides = [1, 1]} : vector<8x128xf32> to vector<8x32xf32>
    %cst_107 = arith.constant 5.000000e-01 : f32
    %276 = vector.broadcast %cst_107 : f32 to vector<8x32xf32>
    %277 = arith.mulf %276, %275 : vector<8x32xf32>
    %278 = math.tanh %277 : vector<8x32xf32>
    %cst_108 = arith.constant 5.000000e-01 : f32
    %279 = vector.broadcast %cst_108 : f32 to vector<8x32xf32>
    %280 = arith.mulf %279, %278 : vector<8x32xf32>
    %cst_109 = arith.constant 5.000000e-01 : f32
    %281 = vector.broadcast %cst_109 : f32 to vector<8x32xf32>
    %282 = arith.addf %280, %281 : vector<8x32xf32>
    %283 = arith.mulf %272, %204 : vector<8x32xf32>
    %284 = arith.mulf %264, %274 : vector<8x32xf32>
    %285 = arith.addf %283, %284 : vector<8x32xf32>
    %286 = math.tanh %285 : vector<8x32xf32>
    %287 = arith.mulf %282, %286 : vector<8x32xf32>
    %288 = arith.index_cast %c3_i32 : i32 to index
    %c0_110 = arith.constant 0 : index
    %c0_111 = arith.constant 0 : index
    %289 = vector.load %arg6[%288, %c0_110, %c0_111] : memref<8x8x32xf32, #tpu.memory_space<vmem>>, vector<1x8x32xf32>
    %290 = vector.shape_cast %289 : vector<1x8x32xf32> to vector<8x32xf32>
    %291 = vector.shape_cast %287 : vector<8x32xf32> to vector<1x8x32xf32>
    tpu.vector_store %arg6[%288, %c0_110, %c0_111], %291 {strides = array<i32>} : memref<8x8x32xf32, #tpu.memory_space<vmem>>, vector<1x8x32xf32>,
    %c7_i32_112 = arith.constant 7 : i32
    %292 = arith.subi %c7_i32_112, %c3_i32 : i32
    %293 = arith.index_cast %292 : i32 to index
    %c0_113 = arith.constant 0 : index
    %c0_114 = arith.constant 0 : index
    %294 = vector.load %arg3[%293, %c0_113, %c0_114] : memref<8x8x128xf32, #tpu.memory_space<vmem>>, vector<1x8x128xf32>
    %295 = vector.shape_cast %294 : vector<1x8x128xf32> to vector<8x128xf32>
    %cst_115 = arith.constant dense<0.000000e+00> : vector<8x128xf32>
    %296 = tpu.matmul %247, %4, %cst_115 {dimension_numbers = #tpu.dot_dimension_numbers<[1], [0], [0], [1], [0, 0, 1, 1], [], []>} : vector<8x32xf32>, vector<32x128xf32>, vector<8x128xf32> -> vector<8x128xf32>
    %297 = arith.addf %295, %296 : vector<8x128xf32>
    %298 = vector.extract_strided_slice %297 {offsets = [0, 0], sizes = [8, 32], strides = [1, 1]} : vector<8x128xf32> to vector<8x32xf32>
    %cst_116 = arith.constant 5.000000e-01 : f32
    %299 = vector.broadcast %cst_116 : f32 to vector<8x32xf32>
    %300 = arith.mulf %299, %298 : vector<8x32xf32>
    %301 = math.tanh %300 : vector<8x32xf32>
    %cst_117 = arith.constant 5.000000e-01 : f32
    %302 = vector.broadcast %cst_117 : f32 to vector<8x32xf32>
    %303 = arith.mulf %302, %301 : vector<8x32xf32>
    %cst_118 = arith.constant 5.000000e-01 : f32
    %304 = vector.broadcast %cst_118 : f32 to vector<8x32xf32>
    %305 = arith.addf %303, %304 : vector<8x32xf32>
    %306 = vector.extract_strided_slice %297 {offsets = [0, 32], sizes = [8, 32], strides = [1, 1]} : vector<8x128xf32> to vector<8x32xf32>
    %cst_119 = arith.constant 5.000000e-01 : f32
    %307 = vector.broadcast %cst_119 : f32 to vector<8x32xf32>
    %308 = arith.mulf %307, %306 : vector<8x32xf32>
    %309 = math.tanh %308 : vector<8x32xf32>
    %cst_120 = arith.constant 5.000000e-01 : f32
    %310 = vector.broadcast %cst_120 : f32 to vector<8x32xf32>
    %311 = arith.mulf %310, %309 : vector<8x32xf32>
    %cst_121 = arith.constant 5.000000e-01 : f32
    %312 = vector.broadcast %cst_121 : f32 to vector<8x32xf32>
    %313 = arith.addf %311, %312 : vector<8x32xf32>
    %314 = vector.extract_strided_slice %297 {offsets = [0, 64], sizes = [8, 32], strides = [1, 1]} : vector<8x128xf32> to vector<8x32xf32>
    %315 = math.tanh %314 : vector<8x32xf32>
    %316 = vector.extract_strided_slice %297 {offsets = [0, 96], sizes = [8, 32], strides = [1, 1]} : vector<8x128xf32> to vector<8x32xf32>
    %cst_122 = arith.constant 5.000000e-01 : f32
    %317 = vector.broadcast %cst_122 : f32 to vector<8x32xf32>
    %318 = arith.mulf %317, %316 : vector<8x32xf32>
    %319 = math.tanh %318 : vector<8x32xf32>
    %cst_123 = arith.constant 5.000000e-01 : f32
    %320 = vector.broadcast %cst_123 : f32 to vector<8x32xf32>
    %321 = arith.mulf %320, %319 : vector<8x32xf32>
    %cst_124 = arith.constant 5.000000e-01 : f32
    %322 = vector.broadcast %cst_124 : f32 to vector<8x32xf32>
    %323 = arith.addf %321, %322 : vector<8x32xf32>
    %324 = arith.mulf %313, %245 : vector<8x32xf32>
    %325 = arith.mulf %305, %315 : vector<8x32xf32>
    %326 = arith.addf %324, %325 : vector<8x32xf32>
    %327 = math.tanh %326 : vector<8x32xf32>
    %328 = arith.mulf %323, %327 : vector<8x32xf32>
    %329 = arith.index_cast %292 : i32 to index
    %c0_125 = arith.constant 0 : index
    %c0_126 = arith.constant 0 : index
    %330 = vector.load %arg7[%329, %c0_125, %c0_126] : memref<8x8x32xf32, #tpu.memory_space<vmem>>, vector<1x8x32xf32>
    %331 = vector.shape_cast %330 : vector<1x8x32xf32> to vector<8x32xf32>
    %332 = vector.shape_cast %328 : vector<8x32xf32> to vector<1x8x32xf32>
    tpu.vector_store %arg7[%329, %c0_125, %c0_126], %332 {strides = array<i32>} : memref<8x8x32xf32, #tpu.memory_space<vmem>>, vector<1x8x32xf32>,
    %c4_i32 = arith.constant 4 : i32
    %333 = arith.index_cast %c4_i32 : i32 to index
    %c0_127 = arith.constant 0 : index
    %c0_128 = arith.constant 0 : index
    %334 = vector.load %arg2[%333, %c0_127, %c0_128] : memref<8x8x128xf32, #tpu.memory_space<vmem>>, vector<1x8x128xf32>
    %335 = vector.shape_cast %334 : vector<1x8x128xf32> to vector<8x128xf32>
    %cst_129 = arith.constant dense<0.000000e+00> : vector<8x128xf32>
    %336 = tpu.matmul %287, %3, %cst_129 {dimension_numbers = #tpu.dot_dimension_numbers<[1], [0], [0], [1], [0, 0, 1, 1], [], []>} : vector<8x32xf32>, vector<32x128xf32>, vector<8x128xf32> -> vector<8x128xf32>
    %337 = arith.addf %335, %336 : vector<8x128xf32>
    %338 = vector.extract_strided_slice %337 {offsets = [0, 0], sizes = [8, 32], strides = [1, 1]} : vector<8x128xf32> to vector<8x32xf32>
    %cst_130 = arith.constant 5.000000e-01 : f32
    %339 = vector.broadcast %cst_130 : f32 to vector<8x32xf32>
    %340 = arith.mulf %339, %338 : vector<8x32xf32>
    %341 = math.tanh %340 : vector<8x32xf32>
    %cst_131 = arith.constant 5.000000e-01 : f32
    %342 = vector.broadcast %cst_131 : f32 to vector<8x32xf32>
    %343 = arith.mulf %342, %341 : vector<8x32xf32>
    %cst_132 = arith.constant 5.000000e-01 : f32
    %344 = vector.broadcast %cst_132 : f32 to vector<8x32xf32>
    %345 = arith.addf %343, %344 : vector<8x32xf32>
    %346 = vector.extract_strided_slice %337 {offsets = [0, 32], sizes = [8, 32], strides = [1, 1]} : vector<8x128xf32> to vector<8x32xf32>
    %cst_133 = arith.constant 5.000000e-01 : f32
    %347 = vector.broadcast %cst_133 : f32 to vector<8x32xf32>
    %348 = arith.mulf %347, %346 : vector<8x32xf32>
    %349 = math.tanh %348 : vector<8x32xf32>
    %cst_134 = arith.constant 5.000000e-01 : f32
    %350 = vector.broadcast %cst_134 : f32 to vector<8x32xf32>
    %351 = arith.mulf %350, %349 : vector<8x32xf32>
    %cst_135 = arith.constant 5.000000e-01 : f32
    %352 = vector.broadcast %cst_135 : f32 to vector<8x32xf32>
    %353 = arith.addf %351, %352 : vector<8x32xf32>
    %354 = vector.extract_strided_slice %337 {offsets = [0, 64], sizes = [8, 32], strides = [1, 1]} : vector<8x128xf32> to vector<8x32xf32>
    %355 = math.tanh %354 : vector<8x32xf32>
    %356 = vector.extract_strided_slice %337 {offsets = [0, 96], sizes = [8, 32], strides = [1, 1]} : vector<8x128xf32> to vector<8x32xf32>
    %cst_136 = arith.constant 5.000000e-01 : f32
    %357 = vector.broadcast %cst_136 : f32 to vector<8x32xf32>
    %358 = arith.mulf %357, %356 : vector<8x32xf32>
    %359 = math.tanh %358 : vector<8x32xf32>
    %cst_137 = arith.constant 5.000000e-01 : f32
    %360 = vector.broadcast %cst_137 : f32 to vector<8x32xf32>
    %361 = arith.mulf %360, %359 : vector<8x32xf32>
    %cst_138 = arith.constant 5.000000e-01 : f32
    %362 = vector.broadcast %cst_138 : f32 to vector<8x32xf32>
    %363 = arith.addf %361, %362 : vector<8x32xf32>
    %364 = arith.mulf %353, %285 : vector<8x32xf32>
    %365 = arith.mulf %345, %355 : vector<8x32xf32>
    %366 = arith.addf %364, %365 : vector<8x32xf32>
    %367 = math.tanh %366 : vector<8x32xf32>
    %368 = arith.mulf %363, %367 : vector<8x32xf32>
    %369 = arith.index_cast %c4_i32 : i32 to index
    %c0_139 = arith.constant 0 : index
    %c0_140 = arith.constant 0 : index
    %370 = vector.load %arg6[%369, %c0_139, %c0_140] : memref<8x8x32xf32, #tpu.memory_space<vmem>>, vector<1x8x32xf32>
    %371 = vector.shape_cast %370 : vector<1x8x32xf32> to vector<8x32xf32>
    %372 = vector.shape_cast %368 : vector<8x32xf32> to vector<1x8x32xf32>
    tpu.vector_store %arg6[%369, %c0_139, %c0_140], %372 {strides = array<i32>} : memref<8x8x32xf32, #tpu.memory_space<vmem>>, vector<1x8x32xf32>,
    %c7_i32_141 = arith.constant 7 : i32
    %373 = arith.subi %c7_i32_141, %c4_i32 : i32
    %374 = arith.index_cast %373 : i32 to index
    %c0_142 = arith.constant 0 : index
    %c0_143 = arith.constant 0 : index
    %375 = vector.load %arg3[%374, %c0_142, %c0_143] : memref<8x8x128xf32, #tpu.memory_space<vmem>>, vector<1x8x128xf32>
    %376 = vector.shape_cast %375 : vector<1x8x128xf32> to vector<8x128xf32>
    %cst_144 = arith.constant dense<0.000000e+00> : vector<8x128xf32>
    %377 = tpu.matmul %328, %4, %cst_144 {dimension_numbers = #tpu.dot_dimension_numbers<[1], [0], [0], [1], [0, 0, 1, 1], [], []>} : vector<8x32xf32>, vector<32x128xf32>, vector<8x128xf32> -> vector<8x128xf32>
    %378 = arith.addf %376, %377 : vector<8x128xf32>
    %379 = vector.extract_strided_slice %378 {offsets = [0, 0], sizes = [8, 32], strides = [1, 1]} : vector<8x128xf32> to vector<8x32xf32>
    %cst_145 = arith.constant 5.000000e-01 : f32
    %380 = vector.broadcast %cst_145 : f32 to vector<8x32xf32>
    %381 = arith.mulf %380, %379 : vector<8x32xf32>
    %382 = math.tanh %381 : vector<8x32xf32>
    %cst_146 = arith.constant 5.000000e-01 : f32
    %383 = vector.broadcast %cst_146 : f32 to vector<8x32xf32>
    %384 = arith.mulf %383, %382 : vector<8x32xf32>
    %cst_147 = arith.constant 5.000000e-01 : f32
    %385 = vector.broadcast %cst_147 : f32 to vector<8x32xf32>
    %386 = arith.addf %384, %385 : vector<8x32xf32>
    %387 = vector.extract_strided_slice %378 {offsets = [0, 32], sizes = [8, 32], strides = [1, 1]} : vector<8x128xf32> to vector<8x32xf32>
    %cst_148 = arith.constant 5.000000e-01 : f32
    %388 = vector.broadcast %cst_148 : f32 to vector<8x32xf32>
    %389 = arith.mulf %388, %387 : vector<8x32xf32>
    %390 = math.tanh %389 : vector<8x32xf32>
    %cst_149 = arith.constant 5.000000e-01 : f32
    %391 = vector.broadcast %cst_149 : f32 to vector<8x32xf32>
    %392 = arith.mulf %391, %390 : vector<8x32xf32>
    %cst_150 = arith.constant 5.000000e-01 : f32
    %393 = vector.broadcast %cst_150 : f32 to vector<8x32xf32>
    %394 = arith.addf %392, %393 : vector<8x32xf32>
    %395 = vector.extract_strided_slice %378 {offsets = [0, 64], sizes = [8, 32], strides = [1, 1]} : vector<8x128xf32> to vector<8x32xf32>
    %396 = math.tanh %395 : vector<8x32xf32>
    %397 = vector.extract_strided_slice %378 {offsets = [0, 96], sizes = [8, 32], strides = [1, 1]} : vector<8x128xf32> to vector<8x32xf32>
    %cst_151 = arith.constant 5.000000e-01 : f32
    %398 = vector.broadcast %cst_151 : f32 to vector<8x32xf32>
    %399 = arith.mulf %398, %397 : vector<8x32xf32>
    %400 = math.tanh %399 : vector<8x32xf32>
    %cst_152 = arith.constant 5.000000e-01 : f32
    %401 = vector.broadcast %cst_152 : f32 to vector<8x32xf32>
    %402 = arith.mulf %401, %400 : vector<8x32xf32>
    %cst_153 = arith.constant 5.000000e-01 : f32
    %403 = vector.broadcast %cst_153 : f32 to vector<8x32xf32>
    %404 = arith.addf %402, %403 : vector<8x32xf32>
    %405 = arith.mulf %394, %326 : vector<8x32xf32>
    %406 = arith.mulf %386, %396 : vector<8x32xf32>
    %407 = arith.addf %405, %406 : vector<8x32xf32>
    %408 = math.tanh %407 : vector<8x32xf32>
    %409 = arith.mulf %404, %408 : vector<8x32xf32>
    %410 = arith.index_cast %373 : i32 to index
    %c0_154 = arith.constant 0 : index
    %c0_155 = arith.constant 0 : index
    %411 = vector.load %arg7[%410, %c0_154, %c0_155] : memref<8x8x32xf32, #tpu.memory_space<vmem>>, vector<1x8x32xf32>
    %412 = vector.shape_cast %411 : vector<1x8x32xf32> to vector<8x32xf32>
    %413 = vector.shape_cast %409 : vector<8x32xf32> to vector<1x8x32xf32>
    tpu.vector_store %arg7[%410, %c0_154, %c0_155], %413 {strides = array<i32>} : memref<8x8x32xf32, #tpu.memory_space<vmem>>, vector<1x8x32xf32>,
    %c5_i32 = arith.constant 5 : i32
    %414 = arith.index_cast %c5_i32 : i32 to index
    %c0_156 = arith.constant 0 : index
    %c0_157 = arith.constant 0 : index
    %415 = vector.load %arg2[%414, %c0_156, %c0_157] : memref<8x8x128xf32, #tpu.memory_space<vmem>>, vector<1x8x128xf32>
    %416 = vector.shape_cast %415 : vector<1x8x128xf32> to vector<8x128xf32>
    %cst_158 = arith.constant dense<0.000000e+00> : vector<8x128xf32>
    %417 = tpu.matmul %368, %3, %cst_158 {dimension_numbers = #tpu.dot_dimension_numbers<[1], [0], [0], [1], [0, 0, 1, 1], [], []>} : vector<8x32xf32>, vector<32x128xf32>, vector<8x128xf32> -> vector<8x128xf32>
    %418 = arith.addf %416, %417 : vector<8x128xf32>
    %419 = vector.extract_strided_slice %418 {offsets = [0, 0], sizes = [8, 32], strides = [1, 1]} : vector<8x128xf32> to vector<8x32xf32>
    %cst_159 = arith.constant 5.000000e-01 : f32
    %420 = vector.broadcast %cst_159 : f32 to vector<8x32xf32>
    %421 = arith.mulf %420, %419 : vector<8x32xf32>
    %422 = math.tanh %421 : vector<8x32xf32>
    %cst_160 = arith.constant 5.000000e-01 : f32
    %423 = vector.broadcast %cst_160 : f32 to vector<8x32xf32>
    %424 = arith.mulf %423, %422 : vector<8x32xf32>
    %cst_161 = arith.constant 5.000000e-01 : f32
    %425 = vector.broadcast %cst_161 : f32 to vector<8x32xf32>
    %426 = arith.addf %424, %425 : vector<8x32xf32>
    %427 = vector.extract_strided_slice %418 {offsets = [0, 32], sizes = [8, 32], strides = [1, 1]} : vector<8x128xf32> to vector<8x32xf32>
    %cst_162 = arith.constant 5.000000e-01 : f32
    %428 = vector.broadcast %cst_162 : f32 to vector<8x32xf32>
    %429 = arith.mulf %428, %427 : vector<8x32xf32>
    %430 = math.tanh %429 : vector<8x32xf32>
    %cst_163 = arith.constant 5.000000e-01 : f32
    %431 = vector.broadcast %cst_163 : f32 to vector<8x32xf32>
    %432 = arith.mulf %431, %430 : vector<8x32xf32>
    %cst_164 = arith.constant 5.000000e-01 : f32
    %433 = vector.broadcast %cst_164 : f32 to vector<8x32xf32>
    %434 = arith.addf %432, %433 : vector<8x32xf32>
    %435 = vector.extract_strided_slice %418 {offsets = [0, 64], sizes = [8, 32], strides = [1, 1]} : vector<8x128xf32> to vector<8x32xf32>
    %436 = math.tanh %435 : vector<8x32xf32>
    %437 = vector.extract_strided_slice %418 {offsets = [0, 96], sizes = [8, 32], strides = [1, 1]} : vector<8x128xf32> to vector<8x32xf32>
    %cst_165 = arith.constant 5.000000e-01 : f32
    %438 = vector.broadcast %cst_165 : f32 to vector<8x32xf32>
    %439 = arith.mulf %438, %437 : vector<8x32xf32>
    %440 = math.tanh %439 : vector<8x32xf32>
    %cst_166 = arith.constant 5.000000e-01 : f32
    %441 = vector.broadcast %cst_166 : f32 to vector<8x32xf32>
    %442 = arith.mulf %441, %440 : vector<8x32xf32>
    %cst_167 = arith.constant 5.000000e-01 : f32
    %443 = vector.broadcast %cst_167 : f32 to vector<8x32xf32>
    %444 = arith.addf %442, %443 : vector<8x32xf32>
    %445 = arith.mulf %434, %366 : vector<8x32xf32>
    %446 = arith.mulf %426, %436 : vector<8x32xf32>
    %447 = arith.addf %445, %446 : vector<8x32xf32>
    %448 = math.tanh %447 : vector<8x32xf32>
    %449 = arith.mulf %444, %448 : vector<8x32xf32>
    %450 = arith.index_cast %c5_i32 : i32 to index
    %c0_168 = arith.constant 0 : index
    %c0_169 = arith.constant 0 : index
    %451 = vector.load %arg6[%450, %c0_168, %c0_169] : memref<8x8x32xf32, #tpu.memory_space<vmem>>, vector<1x8x32xf32>
    %452 = vector.shape_cast %451 : vector<1x8x32xf32> to vector<8x32xf32>
    %453 = vector.shape_cast %449 : vector<8x32xf32> to vector<1x8x32xf32>
    tpu.vector_store %arg6[%450, %c0_168, %c0_169], %453 {strides = array<i32>} : memref<8x8x32xf32, #tpu.memory_space<vmem>>, vector<1x8x32xf32>,
    %c7_i32_170 = arith.constant 7 : i32
    %454 = arith.subi %c7_i32_170, %c5_i32 : i32
    %455 = arith.index_cast %454 : i32 to index
    %c0_171 = arith.constant 0 : index
    %c0_172 = arith.constant 0 : index
    %456 = vector.load %arg3[%455, %c0_171, %c0_172] : memref<8x8x128xf32, #tpu.memory_space<vmem>>, vector<1x8x128xf32>
    %457 = vector.shape_cast %456 : vector<1x8x128xf32> to vector<8x128xf32>
    %cst_173 = arith.constant dense<0.000000e+00> : vector<8x128xf32>
    %458 = tpu.matmul %409, %4, %cst_173 {dimension_numbers = #tpu.dot_dimension_numbers<[1], [0], [0], [1], [0, 0, 1, 1], [], []>} : vector<8x32xf32>, vector<32x128xf32>, vector<8x128xf32> -> vector<8x128xf32>
    %459 = arith.addf %457, %458 : vector<8x128xf32>
    %460 = vector.extract_strided_slice %459 {offsets = [0, 0], sizes = [8, 32], strides = [1, 1]} : vector<8x128xf32> to vector<8x32xf32>
    %cst_174 = arith.constant 5.000000e-01 : f32
    %461 = vector.broadcast %cst_174 : f32 to vector<8x32xf32>
    %462 = arith.mulf %461, %460 : vector<8x32xf32>
    %463 = math.tanh %462 : vector<8x32xf32>
    %cst_175 = arith.constant 5.000000e-01 : f32
    %464 = vector.broadcast %cst_175 : f32 to vector<8x32xf32>
    %465 = arith.mulf %464, %463 : vector<8x32xf32>
    %cst_176 = arith.constant 5.000000e-01 : f32
    %466 = vector.broadcast %cst_176 : f32 to vector<8x32xf32>
    %467 = arith.addf %465, %466 : vector<8x32xf32>
    %468 = vector.extract_strided_slice %459 {offsets = [0, 32], sizes = [8, 32], strides = [1, 1]} : vector<8x128xf32> to vector<8x32xf32>
    %cst_177 = arith.constant 5.000000e-01 : f32
    %469 = vector.broadcast %cst_177 : f32 to vector<8x32xf32>
    %470 = arith.mulf %469, %468 : vector<8x32xf32>
    %471 = math.tanh %470 : vector<8x32xf32>
    %cst_178 = arith.constant 5.000000e-01 : f32
    %472 = vector.broadcast %cst_178 : f32 to vector<8x32xf32>
    %473 = arith.mulf %472, %471 : vector<8x32xf32>
    %cst_179 = arith.constant 5.000000e-01 : f32
    %474 = vector.broadcast %cst_179 : f32 to vector<8x32xf32>
    %475 = arith.addf %473, %474 : vector<8x32xf32>
    %476 = vector.extract_strided_slice %459 {offsets = [0, 64], sizes = [8, 32], strides = [1, 1]} : vector<8x128xf32> to vector<8x32xf32>
    %477 = math.tanh %476 : vector<8x32xf32>
    %478 = vector.extract_strided_slice %459 {offsets = [0, 96], sizes = [8, 32], strides = [1, 1]} : vector<8x128xf32> to vector<8x32xf32>
    %cst_180 = arith.constant 5.000000e-01 : f32
    %479 = vector.broadcast %cst_180 : f32 to vector<8x32xf32>
    %480 = arith.mulf %479, %478 : vector<8x32xf32>
    %481 = math.tanh %480 : vector<8x32xf32>
    %cst_181 = arith.constant 5.000000e-01 : f32
    %482 = vector.broadcast %cst_181 : f32 to vector<8x32xf32>
    %483 = arith.mulf %482, %481 : vector<8x32xf32>
    %cst_182 = arith.constant 5.000000e-01 : f32
    %484 = vector.broadcast %cst_182 : f32 to vector<8x32xf32>
    %485 = arith.addf %483, %484 : vector<8x32xf32>
    %486 = arith.mulf %475, %407 : vector<8x32xf32>
    %487 = arith.mulf %467, %477 : vector<8x32xf32>
    %488 = arith.addf %486, %487 : vector<8x32xf32>
    %489 = math.tanh %488 : vector<8x32xf32>
    %490 = arith.mulf %485, %489 : vector<8x32xf32>
    %491 = arith.index_cast %454 : i32 to index
    %c0_183 = arith.constant 0 : index
    %c0_184 = arith.constant 0 : index
    %492 = vector.load %arg7[%491, %c0_183, %c0_184] : memref<8x8x32xf32, #tpu.memory_space<vmem>>, vector<1x8x32xf32>
    %493 = vector.shape_cast %492 : vector<1x8x32xf32> to vector<8x32xf32>
    %494 = vector.shape_cast %490 : vector<8x32xf32> to vector<1x8x32xf32>
    tpu.vector_store %arg7[%491, %c0_183, %c0_184], %494 {strides = array<i32>} : memref<8x8x32xf32, #tpu.memory_space<vmem>>, vector<1x8x32xf32>,
    %c6_i32 = arith.constant 6 : i32
    %495 = arith.index_cast %c6_i32 : i32 to index
    %c0_185 = arith.constant 0 : index
    %c0_186 = arith.constant 0 : index
    %496 = vector.load %arg2[%495, %c0_185, %c0_186] : memref<8x8x128xf32, #tpu.memory_space<vmem>>, vector<1x8x128xf32>
    %497 = vector.shape_cast %496 : vector<1x8x128xf32> to vector<8x128xf32>
    %cst_187 = arith.constant dense<0.000000e+00> : vector<8x128xf32>
    %498 = tpu.matmul %449, %3, %cst_187 {dimension_numbers = #tpu.dot_dimension_numbers<[1], [0], [0], [1], [0, 0, 1, 1], [], []>} : vector<8x32xf32>, vector<32x128xf32>, vector<8x128xf32> -> vector<8x128xf32>
    %499 = arith.addf %497, %498 : vector<8x128xf32>
    %500 = vector.extract_strided_slice %499 {offsets = [0, 0], sizes = [8, 32], strides = [1, 1]} : vector<8x128xf32> to vector<8x32xf32>
    %cst_188 = arith.constant 5.000000e-01 : f32
    %501 = vector.broadcast %cst_188 : f32 to vector<8x32xf32>
    %502 = arith.mulf %501, %500 : vector<8x32xf32>
    %503 = math.tanh %502 : vector<8x32xf32>
    %cst_189 = arith.constant 5.000000e-01 : f32
    %504 = vector.broadcast %cst_189 : f32 to vector<8x32xf32>
    %505 = arith.mulf %504, %503 : vector<8x32xf32>
    %cst_190 = arith.constant 5.000000e-01 : f32
    %506 = vector.broadcast %cst_190 : f32 to vector<8x32xf32>
    %507 = arith.addf %505, %506 : vector<8x32xf32>
    %508 = vector.extract_strided_slice %499 {offsets = [0, 32], sizes = [8, 32], strides = [1, 1]} : vector<8x128xf32> to vector<8x32xf32>
    %cst_191 = arith.constant 5.000000e-01 : f32
    %509 = vector.broadcast %cst_191 : f32 to vector<8x32xf32>
    %510 = arith.mulf %509, %508 : vector<8x32xf32>
    %511 = math.tanh %510 : vector<8x32xf32>
    %cst_192 = arith.constant 5.000000e-01 : f32
    %512 = vector.broadcast %cst_192 : f32 to vector<8x32xf32>
    %513 = arith.mulf %512, %511 : vector<8x32xf32>
    %cst_193 = arith.constant 5.000000e-01 : f32
    %514 = vector.broadcast %cst_193 : f32 to vector<8x32xf32>
    %515 = arith.addf %513, %514 : vector<8x32xf32>
    %516 = vector.extract_strided_slice %499 {offsets = [0, 64], sizes = [8, 32], strides = [1, 1]} : vector<8x128xf32> to vector<8x32xf32>
    %517 = math.tanh %516 : vector<8x32xf32>
    %518 = vector.extract_strided_slice %499 {offsets = [0, 96], sizes = [8, 32], strides = [1, 1]} : vector<8x128xf32> to vector<8x32xf32>
    %cst_194 = arith.constant 5.000000e-01 : f32
    %519 = vector.broadcast %cst_194 : f32 to vector<8x32xf32>
    %520 = arith.mulf %519, %518 : vector<8x32xf32>
    %521 = math.tanh %520 : vector<8x32xf32>
    %cst_195 = arith.constant 5.000000e-01 : f32
    %522 = vector.broadcast %cst_195 : f32 to vector<8x32xf32>
    %523 = arith.mulf %522, %521 : vector<8x32xf32>
    %cst_196 = arith.constant 5.000000e-01 : f32
    %524 = vector.broadcast %cst_196 : f32 to vector<8x32xf32>
    %525 = arith.addf %523, %524 : vector<8x32xf32>
    %526 = arith.mulf %515, %447 : vector<8x32xf32>
    %527 = arith.mulf %507, %517 : vector<8x32xf32>
    %528 = arith.addf %526, %527 : vector<8x32xf32>
    %529 = math.tanh %528 : vector<8x32xf32>
    %530 = arith.mulf %525, %529 : vector<8x32xf32>
    %531 = arith.index_cast %c6_i32 : i32 to index
    %c0_197 = arith.constant 0 : index
    %c0_198 = arith.constant 0 : index
    %532 = vector.load %arg6[%531, %c0_197, %c0_198] : memref<8x8x32xf32, #tpu.memory_space<vmem>>, vector<1x8x32xf32>
    %533 = vector.shape_cast %532 : vector<1x8x32xf32> to vector<8x32xf32>
    %534 = vector.shape_cast %530 : vector<8x32xf32> to vector<1x8x32xf32>
    tpu.vector_store %arg6[%531, %c0_197, %c0_198], %534 {strides = array<i32>} : memref<8x8x32xf32, #tpu.memory_space<vmem>>, vector<1x8x32xf32>,
    %c7_i32_199 = arith.constant 7 : i32
    %535 = arith.subi %c7_i32_199, %c6_i32 : i32
    %536 = arith.index_cast %535 : i32 to index
    %c0_200 = arith.constant 0 : index
    %c0_201 = arith.constant 0 : index
    %537 = vector.load %arg3[%536, %c0_200, %c0_201] : memref<8x8x128xf32, #tpu.memory_space<vmem>>, vector<1x8x128xf32>
    %538 = vector.shape_cast %537 : vector<1x8x128xf32> to vector<8x128xf32>
    %cst_202 = arith.constant dense<0.000000e+00> : vector<8x128xf32>
    %539 = tpu.matmul %490, %4, %cst_202 {dimension_numbers = #tpu.dot_dimension_numbers<[1], [0], [0], [1], [0, 0, 1, 1], [], []>} : vector<8x32xf32>, vector<32x128xf32>, vector<8x128xf32> -> vector<8x128xf32>
    %540 = arith.addf %538, %539 : vector<8x128xf32>
    %541 = vector.extract_strided_slice %540 {offsets = [0, 0], sizes = [8, 32], strides = [1, 1]} : vector<8x128xf32> to vector<8x32xf32>
    %cst_203 = arith.constant 5.000000e-01 : f32
    %542 = vector.broadcast %cst_203 : f32 to vector<8x32xf32>
    %543 = arith.mulf %542, %541 : vector<8x32xf32>
    %544 = math.tanh %543 : vector<8x32xf32>
    %cst_204 = arith.constant 5.000000e-01 : f32
    %545 = vector.broadcast %cst_204 : f32 to vector<8x32xf32>
    %546 = arith.mulf %545, %544 : vector<8x32xf32>
    %cst_205 = arith.constant 5.000000e-01 : f32
    %547 = vector.broadcast %cst_205 : f32 to vector<8x32xf32>
    %548 = arith.addf %546, %547 : vector<8x32xf32>
    %549 = vector.extract_strided_slice %540 {offsets = [0, 32], sizes = [8, 32], strides = [1, 1]} : vector<8x128xf32> to vector<8x32xf32>
    %cst_206 = arith.constant 5.000000e-01 : f32
    %550 = vector.broadcast %cst_206 : f32 to vector<8x32xf32>
    %551 = arith.mulf %550, %549 : vector<8x32xf32>
    %552 = math.tanh %551 : vector<8x32xf32>
    %cst_207 = arith.constant 5.000000e-01 : f32
    %553 = vector.broadcast %cst_207 : f32 to vector<8x32xf32>
    %554 = arith.mulf %553, %552 : vector<8x32xf32>
    %cst_208 = arith.constant 5.000000e-01 : f32
    %555 = vector.broadcast %cst_208 : f32 to vector<8x32xf32>
    %556 = arith.addf %554, %555 : vector<8x32xf32>
    %557 = vector.extract_strided_slice %540 {offsets = [0, 64], sizes = [8, 32], strides = [1, 1]} : vector<8x128xf32> to vector<8x32xf32>
    %558 = math.tanh %557 : vector<8x32xf32>
    %559 = vector.extract_strided_slice %540 {offsets = [0, 96], sizes = [8, 32], strides = [1, 1]} : vector<8x128xf32> to vector<8x32xf32>
    %cst_209 = arith.constant 5.000000e-01 : f32
    %560 = vector.broadcast %cst_209 : f32 to vector<8x32xf32>
    %561 = arith.mulf %560, %559 : vector<8x32xf32>
    %562 = math.tanh %561 : vector<8x32xf32>
    %cst_210 = arith.constant 5.000000e-01 : f32
    %563 = vector.broadcast %cst_210 : f32 to vector<8x32xf32>
    %564 = arith.mulf %563, %562 : vector<8x32xf32>
    %cst_211 = arith.constant 5.000000e-01 : f32
    %565 = vector.broadcast %cst_211 : f32 to vector<8x32xf32>
    %566 = arith.addf %564, %565 : vector<8x32xf32>
    %567 = arith.mulf %556, %488 : vector<8x32xf32>
    %568 = arith.mulf %548, %558 : vector<8x32xf32>
    %569 = arith.addf %567, %568 : vector<8x32xf32>
    %570 = math.tanh %569 : vector<8x32xf32>
    %571 = arith.mulf %566, %570 : vector<8x32xf32>
    %572 = arith.index_cast %535 : i32 to index
    %c0_212 = arith.constant 0 : index
    %c0_213 = arith.constant 0 : index
    %573 = vector.load %arg7[%572, %c0_212, %c0_213] : memref<8x8x32xf32, #tpu.memory_space<vmem>>, vector<1x8x32xf32>
    %574 = vector.shape_cast %573 : vector<1x8x32xf32> to vector<8x32xf32>
    %575 = vector.shape_cast %571 : vector<8x32xf32> to vector<1x8x32xf32>
    tpu.vector_store %arg7[%572, %c0_212, %c0_213], %575 {strides = array<i32>} : memref<8x8x32xf32, #tpu.memory_space<vmem>>, vector<1x8x32xf32>,
    %c7_i32_214 = arith.constant 7 : i32
    %576 = arith.index_cast %c7_i32_214 : i32 to index
    %c0_215 = arith.constant 0 : index
    %c0_216 = arith.constant 0 : index
    %577 = vector.load %arg2[%576, %c0_215, %c0_216] : memref<8x8x128xf32, #tpu.memory_space<vmem>>, vector<1x8x128xf32>
    %578 = vector.shape_cast %577 : vector<1x8x128xf32> to vector<8x128xf32>
    %cst_217 = arith.constant dense<0.000000e+00> : vector<8x128xf32>
    %579 = tpu.matmul %530, %3, %cst_217 {dimension_numbers = #tpu.dot_dimension_numbers<[1], [0], [0], [1], [0, 0, 1, 1], [], []>} : vector<8x32xf32>, vector<32x128xf32>, vector<8x128xf32> -> vector<8x128xf32>
    %580 = arith.addf %578, %579 : vector<8x128xf32>
    %581 = vector.extract_strided_slice %580 {offsets = [0, 0], sizes = [8, 32], strides = [1, 1]} : vector<8x128xf32> to vector<8x32xf32>
    %cst_218 = arith.constant 5.000000e-01 : f32
    %582 = vector.broadcast %cst_218 : f32 to vector<8x32xf32>
    %583 = arith.mulf %582, %581 : vector<8x32xf32>
    %584 = math.tanh %583 : vector<8x32xf32>
    %cst_219 = arith.constant 5.000000e-01 : f32
    %585 = vector.broadcast %cst_219 : f32 to vector<8x32xf32>
    %586 = arith.mulf %585, %584 : vector<8x32xf32>
    %cst_220 = arith.constant 5.000000e-01 : f32
    %587 = vector.broadcast %cst_220 : f32 to vector<8x32xf32>
    %588 = arith.addf %586, %587 : vector<8x32xf32>
    %589 = vector.extract_strided_slice %580 {offsets = [0, 32], sizes = [8, 32], strides = [1, 1]} : vector<8x128xf32> to vector<8x32xf32>
    %cst_221 = arith.constant 5.000000e-01 : f32
    %590 = vector.broadcast %cst_221 : f32 to vector<8x32xf32>
    %591 = arith.mulf %590, %589 : vector<8x32xf32>
    %592 = math.tanh %591 : vector<8x32xf32>
    %cst_222 = arith.constant 5.000000e-01 : f32
    %593 = vector.broadcast %cst_222 : f32 to vector<8x32xf32>
    %594 = arith.mulf %593, %592 : vector<8x32xf32>
    %cst_223 = arith.constant 5.000000e-01 : f32
    %595 = vector.broadcast %cst_223 : f32 to vector<8x32xf32>
    %596 = arith.addf %594, %595 : vector<8x32xf32>
    %597 = vector.extract_strided_slice %580 {offsets = [0, 64], sizes = [8, 32], strides = [1, 1]} : vector<8x128xf32> to vector<8x32xf32>
    %598 = math.tanh %597 : vector<8x32xf32>
    %599 = vector.extract_strided_slice %580 {offsets = [0, 96], sizes = [8, 32], strides = [1, 1]} : vector<8x128xf32> to vector<8x32xf32>
    %cst_224 = arith.constant 5.000000e-01 : f32
    %600 = vector.broadcast %cst_224 : f32 to vector<8x32xf32>
    %601 = arith.mulf %600, %599 : vector<8x32xf32>
    %602 = math.tanh %601 : vector<8x32xf32>
    %cst_225 = arith.constant 5.000000e-01 : f32
    %603 = vector.broadcast %cst_225 : f32 to vector<8x32xf32>
    %604 = arith.mulf %603, %602 : vector<8x32xf32>
    %cst_226 = arith.constant 5.000000e-01 : f32
    %605 = vector.broadcast %cst_226 : f32 to vector<8x32xf32>
    %606 = arith.addf %604, %605 : vector<8x32xf32>
    %607 = arith.mulf %596, %528 : vector<8x32xf32>
    %608 = arith.mulf %588, %598 : vector<8x32xf32>
    %609 = arith.addf %607, %608 : vector<8x32xf32>
    %610 = math.tanh %609 : vector<8x32xf32>
    %611 = arith.mulf %606, %610 : vector<8x32xf32>
    %612 = arith.index_cast %c7_i32_214 : i32 to index
    %c0_227 = arith.constant 0 : index
    %c0_228 = arith.constant 0 : index
    %613 = vector.load %arg6[%612, %c0_227, %c0_228] : memref<8x8x32xf32, #tpu.memory_space<vmem>>, vector<1x8x32xf32>
    %614 = vector.shape_cast %613 : vector<1x8x32xf32> to vector<8x32xf32>
    %615 = vector.shape_cast %611 : vector<8x32xf32> to vector<1x8x32xf32>
    tpu.vector_store %arg6[%612, %c0_227, %c0_228], %615 {strides = array<i32>} : memref<8x8x32xf32, #tpu.memory_space<vmem>>, vector<1x8x32xf32>,
    %c7_i32_229 = arith.constant 7 : i32
    %616 = arith.subi %c7_i32_229, %c7_i32_214 : i32
    %617 = arith.index_cast %616 : i32 to index
    %c0_230 = arith.constant 0 : index
    %c0_231 = arith.constant 0 : index
    %618 = vector.load %arg3[%617, %c0_230, %c0_231] : memref<8x8x128xf32, #tpu.memory_space<vmem>>, vector<1x8x128xf32>
    %619 = vector.shape_cast %618 : vector<1x8x128xf32> to vector<8x128xf32>
    %cst_232 = arith.constant dense<0.000000e+00> : vector<8x128xf32>
    %620 = tpu.matmul %571, %4, %cst_232 {dimension_numbers = #tpu.dot_dimension_numbers<[1], [0], [0], [1], [0, 0, 1, 1], [], []>} : vector<8x32xf32>, vector<32x128xf32>, vector<8x128xf32> -> vector<8x128xf32>
    %621 = arith.addf %619, %620 : vector<8x128xf32>
    %622 = vector.extract_strided_slice %621 {offsets = [0, 0], sizes = [8, 32], strides = [1, 1]} : vector<8x128xf32> to vector<8x32xf32>
    %cst_233 = arith.constant 5.000000e-01 : f32
    %623 = vector.broadcast %cst_233 : f32 to vector<8x32xf32>
    %624 = arith.mulf %623, %622 : vector<8x32xf32>
    %625 = math.tanh %624 : vector<8x32xf32>
    %cst_234 = arith.constant 5.000000e-01 : f32
    %626 = vector.broadcast %cst_234 : f32 to vector<8x32xf32>
    %627 = arith.mulf %626, %625 : vector<8x32xf32>
    %cst_235 = arith.constant 5.000000e-01 : f32
    %628 = vector.broadcast %cst_235 : f32 to vector<8x32xf32>
    %629 = arith.addf %627, %628 : vector<8x32xf32>
    %630 = vector.extract_strided_slice %621 {offsets = [0, 32], sizes = [8, 32], strides = [1, 1]} : vector<8x128xf32> to vector<8x32xf32>
    %cst_236 = arith.constant 5.000000e-01 : f32
    %631 = vector.broadcast %cst_236 : f32 to vector<8x32xf32>
    %632 = arith.mulf %631, %630 : vector<8x32xf32>
    %633 = math.tanh %632 : vector<8x32xf32>
    %cst_237 = arith.constant 5.000000e-01 : f32
    %634 = vector.broadcast %cst_237 : f32 to vector<8x32xf32>
    %635 = arith.mulf %634, %633 : vector<8x32xf32>
    %cst_238 = arith.constant 5.000000e-01 : f32
    %636 = vector.broadcast %cst_238 : f32 to vector<8x32xf32>
    %637 = arith.addf %635, %636 : vector<8x32xf32>
    %638 = vector.extract_strided_slice %621 {offsets = [0, 64], sizes = [8, 32], strides = [1, 1]} : vector<8x128xf32> to vector<8x32xf32>
    %639 = math.tanh %638 : vector<8x32xf32>
    %640 = vector.extract_strided_slice %621 {offsets = [0, 96], sizes = [8, 32], strides = [1, 1]} : vector<8x128xf32> to vector<8x32xf32>
    %cst_239 = arith.constant 5.000000e-01 : f32
    %641 = vector.broadcast %cst_239 : f32 to vector<8x32xf32>
    %642 = arith.mulf %641, %640 : vector<8x32xf32>
    %643 = math.tanh %642 : vector<8x32xf32>
    %cst_240 = arith.constant 5.000000e-01 : f32
    %644 = vector.broadcast %cst_240 : f32 to vector<8x32xf32>
    %645 = arith.mulf %644, %643 : vector<8x32xf32>
    %cst_241 = arith.constant 5.000000e-01 : f32
    %646 = vector.broadcast %cst_241 : f32 to vector<8x32xf32>
    %647 = arith.addf %645, %646 : vector<8x32xf32>
    %648 = arith.mulf %637, %569 : vector<8x32xf32>
    %649 = arith.mulf %629, %639 : vector<8x32xf32>
    %650 = arith.addf %648, %649 : vector<8x32xf32>
    %651 = math.tanh %650 : vector<8x32xf32>
    %652 = arith.mulf %647, %651 : vector<8x32xf32>
    %653 = arith.index_cast %616 : i32 to index
    %c0_242 = arith.constant 0 : index
    %c0_243 = arith.constant 0 : index
    %654 = vector.load %arg7[%653, %c0_242, %c0_243] : memref<8x8x32xf32, #tpu.memory_space<vmem>>, vector<1x8x32xf32>
    %655 = vector.shape_cast %654 : vector<1x8x32xf32> to vector<8x32xf32>
    %656 = vector.shape_cast %652 : vector<8x32xf32> to vector<1x8x32xf32>
    tpu.vector_store %arg7[%653, %c0_242, %c0_243], %656 {strides = array<i32>} : memref<8x8x32xf32, #tpu.memory_space<vmem>>, vector<1x8x32xf32>,
    %c8_i32 = arith.constant 8 : i32
    %c0_244 = arith.constant 0 : index
    %c0_245 = arith.constant 0 : index
    %657 = vector.load %arg8[%c0_244, %c0_245] : memref<8x32xf32, #tpu.memory_space<vmem>>, vector<8x32xf32>
    tpu.vector_store %arg8[%c0_244, %c0_245], %611 {strides = array<i32>} : memref<8x32xf32, #tpu.memory_space<vmem>>, vector<8x32xf32>,
    %c0_246 = arith.constant 0 : index
    %c0_247 = arith.constant 0 : index
    %658 = vector.load %arg9[%c0_246, %c0_247] : memref<8x32xf32, #tpu.memory_space<vmem>>, vector<8x32xf32>
    tpu.vector_store %arg9[%c0_246, %c0_247], %609 {strides = array<i32>} : memref<8x32xf32, #tpu.memory_space<vmem>>, vector<8x32xf32>,
    %c0_248 = arith.constant 0 : index
    %c0_249 = arith.constant 0 : index
    %659 = vector.load %arg10[%c0_248, %c0_249] : memref<8x32xf32, #tpu.memory_space<vmem>>, vector<8x32xf32>
    tpu.vector_store %arg10[%c0_248, %c0_249], %652 {strides = array<i32>} : memref<8x32xf32, #tpu.memory_space<vmem>>, vector<8x32xf32>,
    %c0_250 = arith.constant 0 : index
    %c0_251 = arith.constant 0 : index
    %660 = vector.load %arg11[%c0_250, %c0_251] : memref<8x32xf32, #tpu.memory_space<vmem>>, vector<8x32xf32>
    tpu.vector_store %arg11[%c0_250, %c0_251], %650 {strides = array<i32>} : memref<8x32xf32, #tpu.memory_space<vmem>>, vector<8x32xf32>,
    return
  }
  func.func @transform_0(%arg0: i32, %arg1: i32) -> (i32, i32, i32) {
    %c0_i32 = arith.constant 0 : i32
    %c0_i32_0 = arith.constant 0 : i32
    return %arg1, %arg0, %c0_i32 : i32, i32, i32
  }
  func.func @transform_1(%arg0: i32, %arg1: i32) -> (i32, i32, i32) {
    %c0_i32 = arith.constant 0 : i32
    %0 = arith.subi %c0_i32, %arg1 : i32
    %c0_i32_0 = arith.constant 0 : i32
    %c0_i32_1 = arith.constant 0 : i32
    return %0, %arg0, %c0_i32_0 : i32, i32, i32
  }
  func.func @transform_2(%arg0: i32, %arg1: i32) -> (i32, i32) {
    %c0_i32 = arith.constant 0 : i32
    %c0_i32_0 = arith.constant 0 : i32
    %c0_i32_1 = arith.constant 0 : i32
    return %c0_i32, %c0_i32_0 : i32, i32
  }
  func.func @transform_3(%arg0: i32, %arg1: i32) -> (i32, i32) {
    %c0_i32 = arith.constant 0 : i32
    %c0_i32_0 = arith.constant 0 : i32
    %c0_i32_1 = arith.constant 0 : i32
    return %c0_i32, %c0_i32_0 : i32, i32
  }
  func.func @transform_4(%arg0: i32, %arg1: i32) -> (i32, i32, i32) {
    %c0_i32 = arith.constant 0 : i32
    %c0_i32_0 = arith.constant 0 : i32
    return %arg1, %arg0, %c0_i32 : i32, i32, i32
  }
  func.func @transform_5(%arg0: i32, %arg1: i32) -> (i32, i32, i32) {
    %c0_i32 = arith.constant 0 : i32
    %0 = arith.subi %c0_i32, %arg1 : i32
    %c0_i32_0 = arith.constant 0 : i32
    %c0_i32_1 = arith.constant 0 : i32
    return %0, %arg0, %c0_i32_0 : i32, i32, i32
  }
}

</mosaic_0001>

<llo_original>
// kernel: bidirectional_lstm.5
$region0: #{bidirectional_lstm.5}
  #allocation0 [shape = 'u32[]', space=smem, size = 0x4, offset = 0x4, fixed_abs, tag = 'smem constant byte address 0x4 - core index']
  #allocation1 [shape = 'u32[144,128]{1,0:T(1,128)}', space=vmem, size = 0x12000, scoped, tag = 'internal scratch']
  %s0 = inlined_call_operand.vmem [shape: f32[64,32], index: 0, kind: input, shape index: {}]
  %s1 = inlined_call_operand.vmem [shape: f32[64,32], index: 1, kind: input, shape index: {}]
  %s2 = inlined_call_operand.vmem [shape: f32[32,16], index: 2, kind: input, shape index: {}]
  %s3 = inlined_call_operand.vmem [shape: f32[32,16], index: 3, kind: input, shape index: {}]
  %s4 = inlined_call_operand.vmem [shape: f32[1,16], index: 4, kind: input, shape index: {}]
  %s5 = inlined_call_operand.vmem [shape: f32[64,16], index: 5, kind: output, shape index: {}]
  %s6 = sld [smem:[#allocation0]]
  $region30: #{bidirectional_lstm.5} parent=0
    _
  %s8 = ssub.s32 1, %s6
  %s9 = scalar_select 0, %s8, %s6
  // Predicated region
  $region2: #{bidirectional_lstm.5} parent=0 // pred_check
    _
  $region3: #{bidirectional_lstm.5} parent=0 // pred_check_branch
    %11 = sbr.rel (0) target = $region5
  $region4: #{bidirectional_lstm.5} parent=0 // pred_region
    _
  $region5: #{bidirectional_lstm.5} parent=0 // pred_fallthru
    _
  // Predicated region
  $region6: #{bidirectional_lstm.5} parent=0 // pred_check
    _
  $region7: #{bidirectional_lstm.5} parent=0 // pred_check_branch
    %13 = sbr.rel (0) target = $region9
  $region8: #{bidirectional_lstm.5} parent=0 // pred_region
    _
  $region9: #{bidirectional_lstm.5} parent=0 // pred_fallthru
    _
  // Predicated region
  $region10: #{bidirectional_lstm.5} parent=0 // pred_check
    _
  $region11: #{bidirectional_lstm.5} parent=0 // pred_check_branch
    %15 = sbr.rel (0) target = $region13
  $region12: #{bidirectional_lstm.5} parent=0 // pred_region
    _
  $region13: #{bidirectional_lstm.5} parent=0 // pred_fallthru
    _
  // Predicated region
  $region14: #{bidirectional_lstm.5} parent=0 // pred_check
    _
  $region15: #{bidirectional_lstm.5} parent=0 // pred_check_branch
    %17 = sbr.rel (0) target = $region17
  $region16: #{bidirectional_lstm.5} parent=0 // pred_region
    _
  $region17: #{bidirectional_lstm.5} parent=0 // pred_fallthru
    _
  // Predicated region
  $region18: #{bidirectional_lstm.5} parent=0 // pred_check
    _
  $region19: #{bidirectional_lstm.5} parent=0 // pred_check_branch
    %19 = sbr.rel (0) target = $region21
  $region20: #{bidirectional_lstm.5} parent=0 // pred_region
    _
  $region21: #{bidirectional_lstm.5} parent=0 // pred_fallthru
    _
  %v20 = vld [vmem:[%s0] sm:$0xff]
  %v21 = vld [vmem:[%s0 + $0x8] sm:$0xff]
  %v22 = vld [vmem:[%s0 + $0x10] sm:$0xff]
  %v23 = vld [vmem:[%s0 + $0x18] sm:$0xff]
  %v24 = vld [vmem:[%s0 + $0x20] sm:$0xff]
  %v25 = vld [vmem:[%s0 + $0x28] sm:$0xff]
  %v26 = vld [vmem:[%s0 + $0x30] sm:$0xff]
  %v27 = vld [vmem:[%s0 + $0x38] sm:$0xff]
  %v28 = vld [vmem:[%s1] sm:$0xff]
  %v29 = vld [vmem:[%s1 + $0x8] sm:$0xff]
  %v30 = vld [vmem:[%s1 + $0x10] sm:$0xff]
  %v31 = vld [vmem:[%s1 + $0x18] sm:$0xff]
  %v32 = vld [vmem:[%s1 + $0x20] sm:$0xff]
  %v33 = vld [vmem:[%s1 + $0x28] sm:$0xff]
  %v34 = vld [vmem:[%s1 + $0x30] sm:$0xff]
  %v35 = vld [vmem:[%s1 + $0x38] sm:$0xff]
  %v36 = vld [vmem:[%s2] sm:$0xff]
  %v37 = vld [vmem:[%s2 + $0x8] sm:$0xff]
  %v38 = vld [vmem:[%s2 + $0x10] sm:$0xff]
  %v39 = vld [vmem:[%s2 + $0x18] sm:$0xff]
  %v40 = vld [vmem:[%s3] sm:$0xff]
  %v41 = vld [vmem:[%s3 + $0x8] sm:$0xff]
  %v42 = vld [vmem:[%s3 + $0x10] sm:$0xff]
  %v43 = vld [vmem:[%s3 + $0x18] sm:$0xff]
  %vm44 = vcmask 261120
  %v46 = vsel %vm44, %v28, 0
  %v49 = vsel %vm44, %v29, 0
  %v52 = vsel %vm44, %v30, 0
  %v55 = vsel %vm44, %v31, 0
  %v58 = vsel %vm44, %v32, 0
  %v61 = vsel %vm44, %v33, 0
  %v64 = vsel %vm44, %v34, 0
  %v67 = vsel %vm44, %v35, 0
  %69 = vmatprep.subr.mxu0 0.0
  %70 = vmatpush1.msra.mxu0 %v40
  %71 = vmatprep.subr.mxu0 0.0
  %72 = vmatpush1.msra.mxu0 %v41
  %73 = vmatprep.subr.mxu0 0.0
  %74 = vmatpush1.msra.mxu0 %v42
  %75 = vmatprep.subr.mxu0 0.0
  %76 = vmatpush1.msra.mxu0 %v43
  %77 = vmatprep.subr.mxu0 0.0
  %78 = vmatpush1.msra.mxu0 0.0
  %79 = vmatprep.subr.mxu0 0.0
  %80 = vmatpush1.msra.mxu0 0.0
  %81 = vmatprep.subr.mxu0 0.0
  %82 = vmatpush1.msra.mxu0 0.0
  %83 = vmatprep.subr.mxu0 0.0
  %84 = vmatpush1.msra.mxu0 0.0
  %85 = vmatprep.subr.mxu0 0.0
  %86 = vmatpush1.msra.mxu0 0.0
  %87 = vmatprep.subr.mxu0 0.0
  %88 = vmatpush1.msra.mxu0 0.0
  %89 = vmatprep.subr.mxu0 0.0
  %90 = vmatpush1.msra.mxu0 0.0
  %91 = vmatprep.subr.mxu0 0.0
  %92 = vmatpush1.msra.mxu0 0.0
  %93 = vmatprep.subr.mxu0 0.0
  %94 = vmatpush1.msra.mxu0 0.0
  %95 = vmatprep.subr.mxu0 0.0
  %96 = vmatpush1.msra.mxu0 0.0
  %97 = vmatprep.subr.mxu0 0.0
  %98 = vmatpush1.msra.mxu0 0.0
  %99 = vmatprep.subr.mxu0 0.0
  %100 = vmatpush1.msra.mxu0 0.0
  %101 = vmatprep.subr.mxu0 0.0
  %102 = vmatpush1.msra.mxu0 0.0
  %103 = vmatprep.subr.mxu0 0.0
  %104 = vmatpush1.msra.mxu0 0.0
  %105 = vmatprep.subr.mxu0 0.0
  %106 = vmatpush1.msra.mxu0 0.0
  %107 = vmatprep.subr.mxu0 0.0
  %108 = vmatpush1.msra.mxu0 0.0
  %109 = vmatprep.subr.mxu0 0.0
  %110 = vmatpush1.msra.mxu0 0.0
  %111 = vmatprep.subr.mxu0 0.0
  %112 = vmatpush1.msra.mxu0 0.0
  %113 = vmatprep.subr.mxu0 0.0
  %114 = vmatpush1.msra.mxu0 0.0
  %115 = vmatprep.subr.mxu0 0.0
  %116 = vmatpush1.msra.mxu0 0.0
  %117 = vmatprep.subr.mxu0 0.0
  %118 = vmatpush1.msra.mxu0 0.0
  %119 = vmatprep.subr.mxu0 0.0
  %120 = vmatpush1.msra.mxu0 0.0
  %121 = vmatprep.subr.mxu0 0.0
  %122 = vmatpush1.msra.mxu0 0.0
  %123 = vmatprep.subr.mxu0 0.0
  %124 = vmatpush1.msra.mxu0 0.0
  %125 = vmatprep.subr.mxu0 0.0
  %126 = vmatpush1.msra.mxu0 0.0
  %127 = vmatprep.subr.mxu0 0.0
  %128 = vmatpush1.msra.mxu0 0.0
  %129 = vmatprep.subr.mxu0 0.0
  %130 = vmatpush1.msra.mxu0 0.0
  %131 = vmatprep.subr.mxu0 0.0
  %132 = vmatpush1.msra.mxu0 0.0
  %133 = vmatprep.mubr.f32.mxu0 0.0
  %134 = vmatmul.mubr.f32.gmra.mrb[0].mxu0 %v46
  %v135 = vpop.f32.mrb[0].mxu0
  %v136 = vadd.f32 0.0, %v135
  %v137 = vpop.f32.mrb[0].mxu0
  %138 = vmatprep.mubr.f32.mxu0 0.0
  %139 = vmatmul.mubr.f32.gmra.mrb[0].mxu0 %v49
  %v140 = vpop.f32.mrb[0].mxu0
  %v141 = vadd.f32 0.0, %v140
  %v142 = vpop.f32.mrb[0].mxu0
  %143 = vmatprep.mubr.f32.mxu0 0.0
  %144 = vmatmul.mubr.f32.gmra.mrb[0].mxu0 %v52
  %v145 = vpop.f32.mrb[0].mxu0
  %v146 = vadd.f32 0.0, %v145
  %v147 = vpop.f32.mrb[0].mxu0
  %148 = vmatprep.mubr.f32.mxu0 0.0
  %149 = vmatmul.mubr.f32.gmra.mrb[0].mxu0 %v55
  %v150 = vpop.f32.mrb[0].mxu0
  %v151 = vadd.f32 0.0, %v150
  %v152 = vpop.f32.mrb[0].mxu0
  %153 = vmatprep.mubr.f32.mxu0 0.0
  %154 = vmatmul.mubr.f32.gmra.mrb[0].mxu0 %v58
  %v155 = vpop.f32.mrb[0].mxu0
  %v156 = vadd.f32 0.0, %v155
  %v157 = vpop.f32.mrb[0].mxu0
  %158 = vmatprep.mubr.f32.mxu0 0.0
  %159 = vmatmul.mubr.f32.gmra.mrb[0].mxu0 %v61
  %v160 = vpop.f32.mrb[0].mxu0
  %v161 = vadd.f32 0.0, %v160
  %v162 = vpop.f32.mrb[0].mxu0
  %163 = vmatprep.mubr.f32.mxu0 0.0
  %164 = vmatmul.mubr.f32.gmra.mrb[0].mxu0 %v64
  %v165 = vpop.f32.mrb[0].mxu0
  %v166 = vadd.f32 0.0, %v165
  %v167 = vpop.f32.mrb[0].mxu0
  %168 = vmatprep.mubr.f32.mxu0 0.0
  %169 = vmatmul.mubr.f32.gmra.mrb[0].mxu0 %v67
  %v170 = vpop.f32.mrb[0].mxu0
  %v171 = vadd.f32 0.0, %v170
  %v172 = vpop.f32.mrb[0].mxu0
  %173 = vdwg.mxu0
  %v175 = vsel %vm44, %v20, 0
  %v178 = vsel %vm44, %v21, 0
  %v181 = vsel %vm44, %v22, 0
  %v184 = vsel %vm44, %v23, 0
  %v187 = vsel %vm44, %v24, 0
  %v190 = vsel %vm44, %v25, 0
  %v193 = vsel %vm44, %v26, 0
  %v196 = vsel %vm44, %v27, 0
  %198 = vmatprep.subr.mxu0 0.0
  %199 = vmatpush1.msra.mxu0 %v36
  %200 = vmatprep.subr.mxu0 0.0
  %201 = vmatpush1.msra.mxu0 %v37
  %202 = vmatprep.subr.mxu0 0.0
  %203 = vmatpush1.msra.mxu0 %v38
  %204 = vmatprep.subr.mxu0 0.0
  %205 = vmatpush1.msra.mxu0 %v39
  %206 = vmatprep.subr.mxu0 0.0
  %207 = vmatpush1.msra.mxu0 0.0
  %208 = vmatprep.subr.mxu0 0.0
  %209 = vmatpush1.msra.mxu0 0.0
  %210 = vmatprep.subr.mxu0 0.0
  %211 = vmatpush1.msra.mxu0 0.0
  %212 = vmatprep.subr.mxu0 0.0
  %213 = vmatpush1.msra.mxu0 0.0
  %214 = vmatprep.subr.mxu0 0.0
  %215 = vmatpush1.msra.mxu0 0.0
  %216 = vmatprep.subr.mxu0 0.0
  %217 = vmatpush1.msra.mxu0 0.0
  %218 = vmatprep.subr.mxu0 0.0
  %219 = vmatpush1.msra.mxu0 0.0
  %220 = vmatprep.subr.mxu0 0.0
  %221 = vmatpush1.msra.mxu0 0.0
  %222 = vmatprep.subr.mxu0 0.0
  %223 = vmatpush1.msra.mxu0 0.0
  %224 = vmatprep.subr.mxu0 0.0
  %225 = vmatpush1.msra.mxu0 0.0
  %226 = vmatprep.subr.mxu0 0.0
  %227 = vmatpush1.msra.mxu0 0.0
  %228 = vmatprep.subr.mxu0 0.0
  %229 = vmatpush1.msra.mxu0 0.0
  %230 = vmatprep.subr.mxu0 0.0
  %231 = vmatpush1.msra.mxu0 0.0
  %232 = vmatprep.subr.mxu0 0.0
  %233 = vmatpush1.msra.mxu0 0.0
  %234 = vmatprep.subr.mxu0 0.0
  %235 = vmatpush1.msra.mxu0 0.0
  %236 = vmatprep.subr.mxu0 0.0
  %237 = vmatpush1.msra.mxu0 0.0
  %238 = vmatprep.subr.mxu0 0.0
  %239 = vmatpush1.msra.mxu0 0.0
  %240 = vmatprep.subr.mxu0 0.0
  %241 = vmatpush1.msra.mxu0 0.0
  %242 = vmatprep.subr.mxu0 0.0
  %243 = vmatpush1.msra.mxu0 0.0
  %244 = vmatprep.subr.mxu0 0.0
  %245 = vmatpush1.msra.mxu0 0.0
  %246 = vmatprep.subr.mxu0 0.0
  %247 = vmatpush1.msra.mxu0 0.0
  %248 = vmatprep.subr.mxu0 0.0
  %249 = vmatpush1.msra.mxu0 0.0
  %250 = vmatprep.subr.mxu0 0.0
  %251 = vmatpush1.msra.mxu0 0.0
  %252 = vmatprep.subr.mxu0 0.0
  %253 = vmatpush1.msra.mxu0 0.0
  %254 = vmatprep.subr.mxu0 0.0
  %255 = vmatpush1.msra.mxu0 0.0
  %256 = vmatprep.subr.mxu0 0.0
  %257 = vmatpush1.msra.mxu0 0.0
  %258 = vmatprep.subr.mxu0 0.0
  %259 = vmatpush1.msra.mxu0 0.0
  %260 = vmatprep.subr.mxu0 0.0
  %261 = vmatpush1.msra.mxu0 0.0
  %262 = vmatprep.mubr.f32.mxu0 0.0
  %263 = vmatmul.mubr.f32.gmra.mrb[0].mxu0 %v175
  %v264 = vpop.f32.mrb[0].mxu0
  %v265 = vadd.f32 %v136, %v264
  %v266 = vpop.f32.mrb[0].mxu0
  %267 = vmatprep.mubr.f32.mxu0 0.0
  %268 = vmatmul.mubr.f32.gmra.mrb[0].mxu0 %v178
  %v269 = vpop.f32.mrb[0].mxu0
  %v270 = vadd.f32 %v141, %v269
  %v271 = vpop.f32.mrb[0].mxu0
  %272 = vmatprep.mubr.f32.mxu0 0.0
  %273 = vmatmul.mubr.f32.gmra.mrb[0].mxu0 %v181
  %v274 = vpop.f32.mrb[0].mxu0
  %v275 = vadd.f32 %v146, %v274
  %v276 = vpop.f32.mrb[0].mxu0
  %277 = vmatprep.mubr.f32.mxu0 0.0
  %278 = vmatmul.mubr.f32.gmra.mrb[0].mxu0 %v184
  %v279 = vpop.f32.mrb[0].mxu0
  %v280 = vadd.f32 %v151, %v279
  %v281 = vpop.f32.mrb[0].mxu0
  %282 = vmatprep.mubr.f32.mxu0 0.0
  %283 = vmatmul.mubr.f32.gmra.mrb[0].mxu0 %v187
  %v284 = vpop.f32.mrb[0].mxu0
  %v285 = vadd.f32 %v156, %v284
  %v286 = vpop.f32.mrb[0].mxu0
  %287 = vmatprep.mubr.f32.mxu0 0.0
  %288 = vmatmul.mubr.f32.gmra.mrb[0].mxu0 %v190
  %v289 = vpop.f32.mrb[0].mxu0
  %v290 = vadd.f32 %v161, %v289
  %v291 = vpop.f32.mrb[0].mxu0
  %292 = vmatprep.mubr.f32.mxu0 0.0
  %293 = vmatmul.mubr.f32.gmra.mrb[0].mxu0 %v193
  %v294 = vpop.f32.mrb[0].mxu0
  %v295 = vadd.f32 %v166, %v294
  %v296 = vpop.f32.mrb[0].mxu0
  %297 = vmatprep.mubr.f32.mxu0 0.0
  %298 = vmatmul.mubr.f32.gmra.mrb[0].mxu0 %v196
  %v299 = vpop.f32.mrb[0].mxu0
  %v300 = vadd.f32 %v171, %v299
  %v301 = vpop.f32.mrb[0].mxu0
  %302 = vdwg.mxu0
  %v303 = vld [vmem:[%s4] sm:$0x1]
  %v305 = vlaneseq
  %v306 = vshrl.u32 %v305, 7
  %v307 = vsub.s32 0, %v306
  %v308 = vrot.slane %v303, %v307
  %v310 = vadd.f32 %v265, %v308
  %v311 = vadd.f32 %v270, %v308
  %v312 = vadd.f32 %v275, %v308
  %v313 = vadd.f32 %v280, %v308
  %v314 = vadd.f32 %v285, %v308
  %v315 = vadd.f32 %v290, %v308
  %v316 = vadd.f32 %v295, %v308
  %v317 = vadd.f32 %v300, %v308
  %vm318 = vcmask 130048
  %319 = vst.msk [vmem:[%s5] sm:$0xff] %vm318, %v310
  %320 = vst.msk [vmem:[%s5 + $0x8] sm:$0xff] %vm318, %v311
  %321 = vst.msk [vmem:[%s5 + $0x10] sm:$0xff] %vm318, %v312
  %322 = vst.msk [vmem:[%s5 + $0x18] sm:$0xff] %vm318, %v313
  %323 = vst.msk [vmem:[%s5 + $0x20] sm:$0xff] %vm318, %v314
  %324 = vst.msk [vmem:[%s5 + $0x28] sm:$0xff] %vm318, %v315
  %325 = vst.msk [vmem:[%s5 + $0x30] sm:$0xff] %vm318, %v316
  %326 = vst.msk [vmem:[%s5 + $0x38] sm:$0xff] %vm318, %v317
  // Predicated region
  $region22: #{bidirectional_lstm.5} parent=0 // pred_check
    _
  $region23: #{bidirectional_lstm.5} parent=0 // pred_check_branch
    %328 = sbr.rel (0) target = $region25
  $region24: #{bidirectional_lstm.5} parent=0 // pred_region
    _
  $region25: #{bidirectional_lstm.5} parent=0 // pred_fallthru
    _
  // Predicated region
  $region26: #{bidirectional_lstm.5} parent=0 // pred_check
    _
  $region27: #{bidirectional_lstm.5} parent=0 // pred_check_branch
    %330 = sbr.rel (0) target = $region29
  $region28: #{bidirectional_lstm.5} parent=0 // pred_region
    _
  $region29: #{bidirectional_lstm.5} parent=0 // pred_fallthru
    _

// kernel: bidirectional_lstm.3
$region0: #{bidirectional_lstm.3}
  #allocation0 [shape = 'u32[]', space=smem, size = 0x4, offset = 0x4, fixed_abs, tag = 'smem constant byte address 0x4 - core index']
  #allocation1 [shape = 'u32[144,128]{1,0:T(1,128)}', space=vmem, size = 0x12000, scoped, tag = 'internal scratch']
  %s0 = inlined_call_operand.vmem [shape: f32[64,16], index: 0, kind: input, shape index: {}]
  %s1 = inlined_call_operand.vmem [shape: f32[16,256], index: 1, kind: input, shape index: {}]
  %s2 = inlined_call_operand.vmem [shape: f32[1,256], index: 2, kind: input, shape index: {}]
  %s3 = inlined_call_operand.vmem [shape: f32[64,128], index: 3, kind: output, shape index: {0}]
  %s4 = inlined_call_operand.vmem [shape: f32[64,128], index: 4, kind: output, shape index: {1}]
  %5 = xla_tuple %s3, %s4
  %s6 = sld [smem:[#allocation0]]
  $region30: #{bidirectional_lstm.3} parent=0
    _
  %s8 = ssub.s32 1, %s6
  %s9 = scalar_select 0, %s8, %s6
  // Predicated region
  $region2: #{bidirectional_lstm.3} parent=0 // pred_check
    _
  $region3: #{bidirectional_lstm.3} parent=0 // pred_check_branch
    %11 = sbr.rel (0) target = $region5
  $region4: #{bidirectional_lstm.3} parent=0 // pred_region
    _
  $region5: #{bidirectional_lstm.3} parent=0 // pred_fallthru
    _
  // Predicated region
  $region6: #{bidirectional_lstm.3} parent=0 // pred_check
    _
  $region7: #{bidirectional_lstm.3} parent=0 // pred_check_branch
    %13 = sbr.rel (0) target = $region9
  $region8: #{bidirectional_lstm.3} parent=0 // pred_region
    _
  $region9: #{bidirectional_lstm.3} parent=0 // pred_fallthru
    _
  // Predicated region
  $region10: #{bidirectional_lstm.3} parent=0 // pred_check
    _
  $region11: #{bidirectional_lstm.3} parent=0 // pred_check_branch
    %15 = sbr.rel (0) target = $region13
  $region12: #{bidirectional_lstm.3} parent=0 // pred_region
    _
  $region13: #{bidirectional_lstm.3} parent=0 // pred_fallthru
    _
  %v16 = vld [vmem:[%s0] sm:$0xff]
  %v17 = vld [vmem:[%s0 + $0x8] sm:$0xff]
  %v18 = vld [vmem:[%s0 + $0x10] sm:$0xff]
  %v19 = vld [vmem:[%s0 + $0x18] sm:$0xff]
  %v20 = vld [vmem:[%s0 + $0x20] sm:$0xff]
  %v21 = vld [vmem:[%s0 + $0x28] sm:$0xff]
  %v22 = vld [vmem:[%s0 + $0x30] sm:$0xff]
  %v23 = vld [vmem:[%s0 + $0x38] sm:$0xff]
  %v24 = vld [vmem:[%s1] sm:$0xff]
  %v25 = vld [vmem:[%s1 + $0x8] sm:$0xff]
  %v26 = vld [vmem:[%s1 + $0x10] sm:$0xff]
  %v27 = vld [vmem:[%s1 + $0x18] sm:$0xff]
  %v28 = vld [vmem:[%s2] sm:$0x3]
  %v30 = vlaneseq
  %v31 = vshrl.u32 %v30, 7
  %v32 = vsub.s32 0, %v31
  %v33 = vrot.slane %v28, %v32
  %v34 = vlaneseq
  %v35 = vshrl.u32 %v34, 7
  %v36 = vsub.s32 1, %v35
  %v37 = vrot.slane %v28, %v36
  %vm40 = vcmask 130048
  %v42 = vsel %vm40, %v16, 0
  %v45 = vsel %vm40, %v17, 0
  %v48 = vsel %vm40, %v18, 0
  %v51 = vsel %vm40, %v19, 0
  %v54 = vsel %vm40, %v20, 0
  %v57 = vsel %vm40, %v21, 0
  %v60 = vsel %vm40, %v22, 0
  %v63 = vsel %vm40, %v23, 0
  %65 = vmatprep.subr.mxu0 %v25
  %66 = vmatpush1.msra.mxu0 %v24
  %67 = vmatprep.subr.mxu0 %v27
  %68 = vmatpush1.msra.mxu0 %v26
  %69 = vmatprep.subr.mxu0 0.0
  %70 = vmatpush1.msra.mxu0 0.0
  %71 = vmatprep.subr.mxu0 0.0
  %72 = vmatpush1.msra.mxu0 0.0
  %73 = vmatprep.subr.mxu0 0.0
  %74 = vmatpush1.msra.mxu0 0.0
  %75 = vmatprep.subr.mxu0 0.0
  %76 = vmatpush1.msra.mxu0 0.0
  %77 = vmatprep.subr.mxu0 0.0
  %78 = vmatpush1.msra.mxu0 0.0
  %79 = vmatprep.subr.mxu0 0.0
  %80 = vmatpush1.msra.mxu0 0.0
  %81 = vmatprep.subr.mxu0 0.0
  %82 = vmatpush1.msra.mxu0 0.0
  %83 = vmatprep.subr.mxu0 0.0
  %84 = vmatpush1.msra.mxu0 0.0
  %85 = vmatprep.subr.mxu0 0.0
  %86 = vmatpush1.msra.mxu0 0.0
  %87 = vmatprep.subr.mxu0 0.0
  %88 = vmatpush1.msra.mxu0 0.0
  %89 = vmatprep.subr.mxu0 0.0
  %90 = vmatpush1.msra.mxu0 0.0
  %91 = vmatprep.subr.mxu0 0.0
  %92 = vmatpush1.msra.mxu0 0.0
  %93 = vmatprep.subr.mxu0 0.0
  %94 = vmatpush1.msra.mxu0 0.0
  %95 = vmatprep.subr.mxu0 0.0
  %96 = vmatpush1.msra.mxu0 0.0
  %97 = vmatprep.subr.mxu0 0.0
  %98 = vmatpush1.msra.mxu0 0.0
  %99 = vmatprep.subr.mxu0 0.0
  %100 = vmatpush1.msra.mxu0 0.0
  %101 = vmatprep.subr.mxu0 0.0
  %102 = vmatpush1.msra.mxu0 0.0
  %103 = vmatprep.subr.mxu0 0.0
  %104 = vmatpush1.msra.mxu0 0.0
  %105 = vmatprep.subr.mxu0 0.0
  %106 = vmatpush1.msra.mxu0 0.0
  %107 = vmatprep.subr.mxu0 0.0
  %108 = vmatpush1.msra.mxu0 0.0
  %109 = vmatprep.subr.mxu0 0.0
  %110 = vmatpush1.msra.mxu0 0.0
  %111 = vmatprep.subr.mxu0 0.0
  %112 = vmatpush1.msra.mxu0 0.0
  %113 = vmatprep.subr.mxu0 0.0
  %114 = vmatpush1.msra.mxu0 0.0
  %115 = vmatprep.subr.mxu0 0.0
  %116 = vmatpush1.msra.mxu0 0.0
  %117 = vmatprep.subr.mxu0 0.0
  %118 = vmatpush1.msra.mxu0 0.0
  %119 = vmatprep.subr.mxu0 0.0
  %120 = vmatpush1.msra.mxu0 0.0
  %121 = vmatprep.subr.mxu0 0.0
  %122 = vmatpush1.msra.mxu0 0.0
  %123 = vmatprep.subr.mxu0 0.0
  %124 = vmatpush1.msra.mxu0 0.0
  %125 = vmatprep.subr.mxu0 0.0
  %126 = vmatpush1.msra.mxu0 0.0
  %127 = vmatprep.subr.mxu0 0.0
  %128 = vmatpush1.msra.mxu0 0.0
  %129 = vmatprep.mubr.f32.mxu0 0.0
  %130 = vmatmul.mubr.f32.gmra.mrb[0].mxu0 %v42
  %v131 = vpop.f32.mrb[0].mxu0
  %v132 = vadd.f32 %v33, %v131
  %v133 = vpop.f32.mrb[0].mxu0
  %v134 = vadd.f32 %v37, %v133
  %135 = vmatprep.mubr.f32.mxu0 0.0
  %136 = vmatmul.mubr.f32.gmra.mrb[0].mxu0 %v45
  %v137 = vpop.f32.mrb[0].mxu0
  %v138 = vadd.f32 %v33, %v137
  %v139 = vpop.f32.mrb[0].mxu0
  %v140 = vadd.f32 %v37, %v139
  %141 = vmatprep.mubr.f32.mxu0 0.0
  %142 = vmatmul.mubr.f32.gmra.mrb[0].mxu0 %v48
  %v143 = vpop.f32.mrb[0].mxu0
  %v144 = vadd.f32 %v33, %v143
  %v145 = vpop.f32.mrb[0].mxu0
  %v146 = vadd.f32 %v37, %v145
  %147 = vmatprep.mubr.f32.mxu0 0.0
  %148 = vmatmul.mubr.f32.gmra.mrb[0].mxu0 %v51
  %v149 = vpop.f32.mrb[0].mxu0
  %v150 = vadd.f32 %v33, %v149
  %v151 = vpop.f32.mrb[0].mxu0
  %v152 = vadd.f32 %v37, %v151
  %153 = vmatprep.mubr.f32.mxu0 0.0
  %154 = vmatmul.mubr.f32.gmra.mrb[0].mxu0 %v54
  %v155 = vpop.f32.mrb[0].mxu0
  %v156 = vadd.f32 %v33, %v155
  %v157 = vpop.f32.mrb[0].mxu0
  %v158 = vadd.f32 %v37, %v157
  %159 = vmatprep.mubr.f32.mxu0 0.0
  %160 = vmatmul.mubr.f32.gmra.mrb[0].mxu0 %v57
  %v161 = vpop.f32.mrb[0].mxu0
  %v162 = vadd.f32 %v33, %v161
  %v163 = vpop.f32.mrb[0].mxu0
  %v164 = vadd.f32 %v37, %v163
  %165 = vmatprep.mubr.f32.mxu0 0.0
  %166 = vmatmul.mubr.f32.gmra.mrb[0].mxu0 %v60
  %v167 = vpop.f32.mrb[0].mxu0
  %v168 = vadd.f32 %v33, %v167
  %v169 = vpop.f32.mrb[0].mxu0
  %v170 = vadd.f32 %v37, %v169
  %171 = vmatprep.mubr.f32.mxu0 0.0
  %172 = vmatmul.mubr.f32.gmra.mrb[0].mxu0 %v63
  %v173 = vpop.f32.mrb[0].mxu0
  %v174 = vadd.f32 %v33, %v173
  %v175 = vpop.f32.mrb[0].mxu0
  %v176 = vadd.f32 %v37, %v175
  %177 = vdwg.mxu0
  %178 = vst [vmem:[%s3] sm:$0xff] %v132
  %179 = vst [vmem:[%s3 + $0x8] sm:$0xff] %v138
  %180 = vst [vmem:[%s3 + $0x10] sm:$0xff] %v144
  %181 = vst [vmem:[%s3 + $0x18] sm:$0xff] %v150
  %182 = vst [vmem:[%s3 + $0x20] sm:$0xff] %v156
  %183 = vst [vmem:[%s3 + $0x28] sm:$0xff] %v162
  %184 = vst [vmem:[%s3 + $0x30] sm:$0xff] %v168
  %185 = vst [vmem:[%s3 + $0x38] sm:$0xff] %v174
  %186 = vst [vmem:[%s4] sm:$0xff] %v134
  %187 = vst [vmem:[%s4 + $0x8] sm:$0xff] %v140
  %188 = vst [vmem:[%s4 + $0x10] sm:$0xff] %v146
  %189 = vst [vmem:[%s4 + $0x18] sm:$0xff] %v152
  %190 = vst [vmem:[%s4 + $0x20] sm:$0xff] %v158
  %191 = vst [vmem:[%s4 + $0x28] sm:$0xff] %v164
  %192 = vst [vmem:[%s4 + $0x30] sm:$0xff] %v170
  %193 = vst [vmem:[%s4 + $0x38] sm:$0xff] %v176
  // Predicated region
  $region14: #{bidirectional_lstm.3} parent=0 // pred_check
    _
  $region15: #{bidirectional_lstm.3} parent=0 // pred_check_branch
    %195 = sbr.rel (0) target = $region17
  $region16: #{bidirectional_lstm.3} parent=0 // pred_region
    _
  $region17: #{bidirectional_lstm.3} parent=0 // pred_fallthru
    _
  // Predicated region
  $region18: #{bidirectional_lstm.3} parent=0 // pred_check
    _
  $region19: #{bidirectional_lstm.3} parent=0 // pred_check_branch
    %197 = sbr.rel (0) target = $region21
  $region20: #{bidirectional_lstm.3} parent=0 // pred_region
    _
  $region21: #{bidirectional_lstm.3} parent=0 // pred_fallthru
    _
  // Predicated region
  $region22: #{bidirectional_lstm.3} parent=0 // pred_check
    _
  $region23: #{bidirectional_lstm.3} parent=0 // pred_check_branch
    %199 = sbr.rel (0) target = $region25
  $region24: #{bidirectional_lstm.3} parent=0 // pred_region
    _
  $region25: #{bidirectional_lstm.3} parent=0 // pred_fallthru
    _
  // Predicated region
  $region26: #{bidirectional_lstm.3} parent=0 // pred_check
    _
  $region27: #{bidirectional_lstm.3} parent=0 // pred_check_branch
    %201 = sbr.rel (0) target = $region29
  $region28: #{bidirectional_lstm.3} parent=0 // pred_region
    _
  $region29: #{bidirectional_lstm.3} parent=0 // pred_fallthru
    _

// kernel: bidirectional_lstm.4
$region0: #{bidirectional_lstm.4}
  #allocation0 [shape = 'u32[]', space=smem, size = 0x4, offset = 0x4, fixed_abs, tag = 'smem constant byte address 0x4 - core index']
  #allocation1 [shape = 'u32[144,128]{1,0:T(1,128)}', space=vmem, size = 0x12000, scoped, tag = 'internal scratch']
  #allocation2 [shape = 'f32[8,32]{1,0:T(8,128)}', space=vmem, size = 0x1000, scoped, tag = 'scratch operand']
  #allocation3 [shape = 'f32[8,32]{1,0:T(8,128)}', space=vmem, size = 0x1000, scoped, tag = 'scratch operand']
  #allocation4 [shape = 'f32[8,32]{1,0:T(8,128)}', space=vmem, size = 0x1000, scoped, tag = 'scratch operand']
  #allocation5 [shape = 'f32[8,32]{1,0:T(8,128)}', space=vmem, size = 0x1000, scoped, tag = 'scratch operand']
  %s0 = inlined_call_operand.vmem [shape: f32[8,8,128], index: 0, kind: input, shape index: {}]
  %s1 = inlined_call_operand.vmem [shape: f32[8,8,128], index: 1, kind: input, shape index: {}]
  %s2 = inlined_call_operand.vmem [shape: f32[32,128], index: 2, kind: input, shape index: {}]
  %s3 = inlined_call_operand.vmem [shape: f32[32,128], index: 3, kind: input, shape index: {}]
  %s4 = inlined_call_operand.vmem [shape: f32[8,8,32], index: 4, kind: output, shape index: {0}]
  %s5 = inlined_call_operand.vmem [shape: f32[8,8,32], index: 5, kind: output, shape index: {1}]
  %6 = xla_tuple %s4, %s5
  %s7 = sld [smem:[#allocation0]]
  $region38: #{bidirectional_lstm.4} parent=0
    _
  %s9 = ssub.s32 1, %s7
  %s10 = scalar_select 0, %s9, %s7
  // Predicated region
  $region2: #{bidirectional_lstm.4} parent=0 // pred_check
    _
  $region3: #{bidirectional_lstm.4} parent=0 // pred_check_branch
    %12 = sbr.rel (0) target = $region5
  $region4: #{bidirectional_lstm.4} parent=0 // pred_region
    _
  $region5: #{bidirectional_lstm.4} parent=0 // pred_fallthru
    _
  // Predicated region
  $region6: #{bidirectional_lstm.4} parent=0 // pred_check
    _
  $region7: #{bidirectional_lstm.4} parent=0 // pred_check_branch
    %14 = sbr.rel (0) target = $region9
  $region8: #{bidirectional_lstm.4} parent=0 // pred_region
    %s15 = ssub.s32 0, 0
    %s16 = smul.u32 8, %s15
    %p17 = scmp.lt.s32.totalorder %s16, 7
    %s18 = scalar_select %p17, %s16, 7
    %s19 = smul.addr %s18, 8
    %s20 = scalar_lea.vmem %s1, %s19
    %s21 = ssub.s32 0, 0
    %s22 = smul.u32 8, %s21
  $region9: #{bidirectional_lstm.4} parent=0 // pred_fallthru
    _
  // Predicated region
  $region10: #{bidirectional_lstm.4} parent=0 // pred_check
    _
  $region11: #{bidirectional_lstm.4} parent=0 // pred_check_branch
    %24 = sbr.rel (0) target = $region13
  $region12: #{bidirectional_lstm.4} parent=0 // pred_region
    _
  $region13: #{bidirectional_lstm.4} parent=0 // pred_fallthru
    _
  // Predicated region
  $region14: #{bidirectional_lstm.4} parent=0 // pred_check
    _
  $region15: #{bidirectional_lstm.4} parent=0 // pred_check_branch
    %26 = sbr.rel (0) target = $region17
  $region16: #{bidirectional_lstm.4} parent=0 // pred_region
    _
  $region17: #{bidirectional_lstm.4} parent=0 // pred_fallthru
    _
  %s27 = ssub.s32 0, 0
  %s28 = smul.u32 8, %s27
  %p29 = scmp.lt.s32.totalorder %s28, 7
  %s30 = scalar_select %p29, %s28, 7
  %s31 = smul.addr %s30, 8
  %s32 = scalar_lea.vmem %s1, %s31
  %s33 = ssub.s32 0, 0
  %s34 = smul.u32 8, %s33
  %p35 = scmp.lt.s32.totalorder %s34, 7
  %s36 = scalar_select %p35, %s34, 7
  %s37 = smul.addr %s36, 8
  %s38 = scalar_lea.vmem %s5, %s37
  %s39 = ssub.s32 0, 0
  %s40 = smul.u32 8, %s39
  %p41 = scmp.lt.s32.totalorder %s40, 7
  %s42 = scalar_select %p41, %s40, 7
  %s43 = smul.addr %s42, 8
  %s44 = scalar_lea.vmem %s1, %s43
  %s45 = ssub.s32 0, 0
  %s46 = smul.u32 8, %s45
  %s47 = ssub.s32 0, 0
  %s48 = smul.u32 8, %s47
  %p49 = scmp.lt.s32.totalorder %s48, 7
  %s50 = scalar_select %p49, %s48, 7
  %s51 = smul.addr %s50, 8
  %s52 = scalar_lea.vmem %s5, %s51
  %s53 = ssub.s32 0, 0
  %s54 = smul.u32 8, %s53
  %p55 = scmp.eq.s32.totalorder 0, 0
  // Predicated region
  $region18: #{bidirectional_lstm.4} parent=0 // pred_check
    %p56 = pneg %p55
  $region19: #{bidirectional_lstm.4} parent=0 // pred_check_branch
    %58 = sbr.rel (%p56) target = $region21
  $region20: #{bidirectional_lstm.4} parent=0 // pred_region
    %vm59 = vcmask 261120
    %60 = vst.msk [vmem:[#allocation2] sm:$0xff] %vm59, 0.0
    %61 = vst.msk [vmem:[#allocation3] sm:$0xff] %vm59, 0.0
    %62 = vst.msk [vmem:[#allocation4] sm:$0xff] %vm59, 0.0
    %63 = vst.msk [vmem:[#allocation5] sm:$0xff] %vm59, 0.0
  $region21: #{bidirectional_lstm.4} parent=0 // pred_fallthru
    _
  %v64 = vld [vmem:[%s2] sm:$0xff]
  %v65 = vld [vmem:[%s2 + $0x8] sm:$0xff]
  %v66 = vld [vmem:[%s2 + $0x10] sm:$0xff]
  %v67 = vld [vmem:[%s2 + $0x18] sm:$0xff]
  %v68 = vld [vmem:[%s3] sm:$0xff]
  %v69 = vld [vmem:[%s3 + $0x8] sm:$0xff]
  %v70 = vld [vmem:[%s3 + $0x10] sm:$0xff]
  %v71 = vld [vmem:[%s3 + $0x18] sm:$0xff]
  %v72 = vld [vmem:[#allocation2] sm:$0xff]
  %v73 = vld [vmem:[#allocation3] sm:$0xff]
  %v74 = vld [vmem:[#allocation4] sm:$0xff]
  %v75 = vld [vmem:[#allocation5] sm:$0xff]
  %v76 = vld [vmem:[%s0] sm:$0xff]
  %vm77 = vcmask 261120
  %v79 = vsel %vm77, %v72, 0
  %81 = vmatprep.subr.mxu0 0.0
  %82 = vmatpush1.msra.mxu0 %v64
  %83 = vmatprep.subr.mxu0 0.0
  %84 = vmatpush1.msra.mxu0 %v65
  %85 = vmatprep.subr.mxu0 0.0
  %86 = vmatpush1.msra.mxu0 %v66
  %87 = vmatprep.subr.mxu0 0.0
  %88 = vmatpush1.msra.mxu0 %v67
  %89 = vmatprep.subr.mxu0 0.0
  %90 = vmatpush1.msra.mxu0 0.0
  %91 = vmatprep.subr.mxu0 0.0
  %92 = vmatpush1.msra.mxu0 0.0
  %93 = vmatprep.subr.mxu0 0.0
  %94 = vmatpush1.msra.mxu0 0.0
  %95 = vmatprep.subr.mxu0 0.0
  %96 = vmatpush1.msra.mxu0 0.0
  %97 = vmatprep.subr.mxu0 0.0
  %98 = vmatpush1.msra.mxu0 0.0
  %99 = vmatprep.subr.mxu0 0.0
  %100 = vmatpush1.msra.mxu0 0.0
  %101 = vmatprep.subr.mxu0 0.0
  %102 = vmatpush1.msra.mxu0 0.0
  %103 = vmatprep.subr.mxu0 0.0
  %104 = vmatpush1.msra.mxu0 0.0
  %105 = vmatprep.subr.mxu0 0.0
  %106 = vmatpush1.msra.mxu0 0.0
  %107 = vmatprep.subr.mxu0 0.0
  %108 = vmatpush1.msra.mxu0 0.0
  %109 = vmatprep.subr.mxu0 0.0
  %110 = vmatpush1.msra.mxu0 0.0
  %111 = vmatprep.subr.mxu0 0.0
  %112 = vmatpush1.msra.mxu0 0.0
  %113 = vmatprep.subr.mxu0 0.0
  %114 = vmatpush1.msra.mxu0 0.0
  %115 = vmatprep.subr.mxu0 0.0
  %116 = vmatpush1.msra.mxu0 0.0
  %117 = vmatprep.subr.mxu0 0.0
  %118 = vmatpush1.msra.mxu0 0.0
  %119 = vmatprep.subr.mxu0 0.0
  %120 = vmatpush1.msra.mxu0 0.0
  %121 = vmatprep.subr.mxu0 0.0
  %122 = vmatpush1.msra.mxu0 0.0
  %123 = vmatprep.subr.mxu0 0.0
  %124 = vmatpush1.msra.mxu0 0.0
  %125 = vmatprep.subr.mxu0 0.0
  %126 = vmatpush1.msra.mxu0 0.0
  %127 = vmatprep.subr.mxu0 0.0
  %128 = vmatpush1.msra.mxu0 0.0
  %129 = vmatprep.subr.mxu0 0.0
  %130 = vmatpush1.msra.mxu0 0.0
  %131 = vmatprep.subr.mxu0 0.0
  %132 = vmatpush1.msra.mxu0 0.0
  %133 = vmatprep.subr.mxu0 0.0
  %134 = vmatpush1.msra.mxu0 0.0
  %135 = vmatprep.subr.mxu0 0.0
  %136 = vmatpush1.msra.mxu0 0.0
  %137 = vmatprep.subr.mxu0 0.0
  %138 = vmatpush1.msra.mxu0 0.0
  %139 = vmatprep.subr.mxu0 0.0
  %140 = vmatpush1.msra.mxu0 0.0
  %141 = vmatprep.subr.mxu0 0.0
  %142 = vmatpush1.msra.mxu0 0.0
  %143 = vmatprep.subr.mxu0 0.0
  %144 = vmatpush1.msra.mxu0 0.0
  %145 = vmatprep.mubr.f32.mxu0 0.0
  %146 = vmatmul.mubr.f32.gmra.mrb[0].mxu0 %v79
  %v147 = vpop.f32.mrb[0].mxu0
  %v148 = vadd.f32 0.0, %v147
  %v149 = vpop.f32.mrb[0].mxu0
  %150 = vdwg.mxu0
  %v151 = vadd.f32 %v76, %v148
  %v152 = vmul.f32 %v151, 0.5
  %v153 = vtanh.pop %v152
  %v154 = vmul.f32 %v153, 0.5
  %v155 = vadd.f32 %v154, 0.5
  %v156 = vtanh.pop %v151
  %158 = vrot.lane.b32.xlu0 %v73, 32
  %v159 = vpop.permute.xlu0 %158
  %v161 = vmul.f32 %v155, %v159
  %163 = vrot.lane.b32.xlu0 %v156, 64
  %v164 = vpop.permute.xlu0 %163
  %v166 = vmul.f32 %v155, %v164
  %168 = vrot.lane.b32.xlu0 %v166, 32
  %v169 = vpop.permute.xlu0 %168
  %v171 = vadd.f32 %v161, %v169
  %v172 = vtanh.pop %v171
  %174 = vrot.lane.b32.xlu0 %v172, 64
  %v175 = vpop.permute.xlu0 %174
  %v177 = vmul.f32 %v155, %v175
  %179 = vrot.lane.b32.xlu0 %v177, 32
  %v180 = vpop.permute.xlu0 %179
  %182 = vst.msk [vmem:[%s4] sm:$0xff] %vm77, %v180
  %s183 = scalar_lea.vmem %s44, 56
  %v184 = vld [vmem:[%s183] sm:$0xff]
  %v186 = vsel %vm77, %v74, 0
  %188 = vmatprep.subr.mxu0 0.0
  %189 = vmatpush1.msra.mxu0 %v68
  %190 = vmatprep.subr.mxu0 0.0
  %191 = vmatpush1.msra.mxu0 %v69
  %192 = vmatprep.subr.mxu0 0.0
  %193 = vmatpush1.msra.mxu0 %v70
  %194 = vmatprep.subr.mxu0 0.0
  %195 = vmatpush1.msra.mxu0 %v71
  %196 = vmatprep.subr.mxu0 0.0
  %197 = vmatpush1.msra.mxu0 0.0
  %198 = vmatprep.subr.mxu0 0.0
  %199 = vmatpush1.msra.mxu0 0.0
  %200 = vmatprep.subr.mxu0 0.0
  %201 = vmatpush1.msra.mxu0 0.0
  %202 = vmatprep.subr.mxu0 0.0
  %203 = vmatpush1.msra.mxu0 0.0
  %204 = vmatprep.subr.mxu0 0.0
  %205 = vmatpush1.msra.mxu0 0.0
  %206 = vmatprep.subr.mxu0 0.0
  %207 = vmatpush1.msra.mxu0 0.0
  %208 = vmatprep.subr.mxu0 0.0
  %209 = vmatpush1.msra.mxu0 0.0
  %210 = vmatprep.subr.mxu0 0.0
  %211 = vmatpush1.msra.mxu0 0.0
  %212 = vmatprep.subr.mxu0 0.0
  %213 = vmatpush1.msra.mxu0 0.0
  %214 = vmatprep.subr.mxu0 0.0
  %215 = vmatpush1.msra.mxu0 0.0
  %216 = vmatprep.subr.mxu0 0.0
  %217 = vmatpush1.msra.mxu0 0.0
  %218 = vmatprep.subr.mxu0 0.0
  %219 = vmatpush1.msra.mxu0 0.0
  %220 = vmatprep.subr.mxu0 0.0
  %221 = vmatpush1.msra.mxu0 0.0
  %222 = vmatprep.subr.mxu0 0.0
  %223 = vmatpush1.msra.mxu0 0.0
  %224 = vmatprep.subr.mxu0 0.0
  %225 = vmatpush1.msra.mxu0 0.0
  %226 = vmatprep.subr.mxu0 0.0
  %227 = vmatpush1.msra.mxu0 0.0
  %228 = vmatprep.subr.mxu0 0.0
  %229 = vmatpush1.msra.mxu0 0.0
  %230 = vmatprep.subr.mxu0 0.0
  %231 = vmatpush1.msra.mxu0 0.0
  %232 = vmatprep.subr.mxu0 0.0
  %233 = vmatpush1.msra.mxu0 0.0
  %234 = vmatprep.subr.mxu0 0.0
  %235 = vmatpush1.msra.mxu0 0.0
  %236 = vmatprep.subr.mxu0 0.0
  %237 = vmatpush1.msra.mxu0 0.0
  %238 = vmatprep.subr.mxu0 0.0
  %239 = vmatpush1.msra.mxu0 0.0
  %240 = vmatprep.subr.mxu0 0.0
  %241 = vmatpush1.msra.mxu0 0.0
  %242 = vmatprep.subr.mxu0 0.0
  %243 = vmatpush1.msra.mxu0 0.0
  %244 = vmatprep.subr.mxu0 0.0
  %245 = vmatpush1.msra.mxu0 0.0
  %246 = vmatprep.subr.mxu0 0.0
  %247 = vmatpush1.msra.mxu0 0.0
  %248 = vmatprep.subr.mxu0 0.0
  %249 = vmatpush1.msra.mxu0 0.0
  %250 = vmatprep.subr.mxu0 0.0
  %251 = vmatpush1.msra.mxu0 0.0
  %252 = vmatprep.mubr.f32.mxu0 0.0
  %253 = vmatmul.mubr.f32.gmra.mrb[0].mxu0 %v186
  %v254 = vpop.f32.mrb[0].mxu0
  %v255 = vadd.f32 0.0, %v254
  %v256 = vpop.f32.mrb[0].mxu0
  %257 = vdwg.mxu0
  %v258 = vadd.f32 %v184, %v255
  %v259 = vmul.f32 %v258, 0.5
  %v260 = vtanh.pop %v259
  %v261 = vmul.f32 %v260, 0.5
  %v262 = vadd.f32 %v261, 0.5
  %v263 = vtanh.pop %v258
  %265 = vrot.lane.b32.xlu0 %v75, 32
  %v266 = vpop.permute.xlu0 %265
  %v268 = vmul.f32 %v262, %v266
  %270 = vrot.lane.b32.xlu0 %v263, 64
  %v271 = vpop.permute.xlu0 %270
  %v273 = vmul.f32 %v262, %v271
  %275 = vrot.lane.b32.xlu0 %v273, 32
  %v276 = vpop.permute.xlu0 %275
  %v278 = vadd.f32 %v268, %v276
  %v279 = vtanh.pop %v278
  %281 = vrot.lane.b32.xlu0 %v279, 64
  %v282 = vpop.permute.xlu0 %281
  %v284 = vmul.f32 %v262, %v282
  %286 = vrot.lane.b32.xlu0 %v284, 32
  %v287 = vpop.permute.xlu0 %286
  %s289 = scalar_lea.vmem %s52, 56
  %290 = vst.msk [vmem:[%s289] sm:$0xff] %vm77, %v287
  %s291 = scalar_lea.vmem %s0, 8
  %v292 = vld [vmem:[%s291] sm:$0xff]
  %v293 = vsel %vm77, %v180, 0
  %295 = vmatprep.subr.mxu0 0.0
  %296 = vmatpush1.msra.mxu0 %v64
  %297 = vmatprep.subr.mxu0 0.0
  %298 = vmatpush1.msra.mxu0 %v65
  %299 = vmatprep.subr.mxu0 0.0
  %300 = vmatpush1.msra.mxu0 %v66
  %301 = vmatprep.subr.mxu0 0.0
  %302 = vmatpush1.msra.mxu0 %v67
  %303 = vmatprep.subr.mxu0 0.0
  %304 = vmatpush1.msra.mxu0 0.0
  %305 = vmatprep.subr.mxu0 0.0
  %306 = vmatpush1.msra.mxu0 0.0
  %307 = vmatprep.subr.mxu0 0.0
  %308 = vmatpush1.msra.mxu0 0.0
  %309 = vmatprep.subr.mxu0 0.0
  %310 = vmatpush1.msra.mxu0 0.0
  %311 = vmatprep.subr.mxu0 0.0
  %312 = vmatpush1.msra.mxu0 0.0
  %313 = vmatprep.subr.mxu0 0.0
  %314 = vmatpush1.msra.mxu0 0.0
  %315 = vmatprep.subr.mxu0 0.0
  %316 = vmatpush1.msra.mxu0 0.0
  %317 = vmatprep.subr.mxu0 0.0
  %318 = vmatpush1.msra.mxu0 0.0
  %319 = vmatprep.subr.mxu0 0.0
  %320 = vmatpush1.msra.mxu0 0.0
  %321 = vmatprep.subr.mxu0 0.0
  %322 = vmatpush1.msra.mxu0 0.0
  %323 = vmatprep.subr.mxu0 0.0
  %324 = vmatpush1.msra.mxu0 0.0
  %325 = vmatprep.subr.mxu0 0.0
  %326 = vmatpush1.msra.mxu0 0.0
  %327 = vmatprep.subr.mxu0 0.0
  %328 = vmatpush1.msra.mxu0 0.0
  %329 = vmatprep.subr.mxu0 0.0
  %330 = vmatpush1.msra.mxu0 0.0
  %331 = vmatprep.subr.mxu0 0.0
  %332 = vmatpush1.msra.mxu0 0.0
  %333 = vmatprep.subr.mxu0 0.0
  %334 = vmatpush1.msra.mxu0 0.0
  %335 = vmatprep.subr.mxu0 0.0
  %336 = vmatpush1.msra.mxu0 0.0
  %337 = vmatprep.subr.mxu0 0.0
  %338 = vmatpush1.msra.mxu0 0.0
  %339 = vmatprep.subr.mxu0 0.0
  %340 = vmatpush1.msra.mxu0 0.0
  %341 = vmatprep.subr.mxu0 0.0
  %342 = vmatpush1.msra.mxu0 0.0
  %343 = vmatprep.subr.mxu0 0.0
  %344 = vmatpush1.msra.mxu0 0.0
  %345 = vmatprep.subr.mxu0 0.0
  %346 = vmatpush1.msra.mxu0 0.0
  %347 = vmatprep.subr.mxu0 0.0
  %348 = vmatpush1.msra.mxu0 0.0
  %349 = vmatprep.subr.mxu0 0.0
  %350 = vmatpush1.msra.mxu0 0.0
  %351 = vmatprep.subr.mxu0 0.0
  %352 = vmatpush1.msra.mxu0 0.0
  %353 = vmatprep.subr.mxu0 0.0
  %354 = vmatpush1.msra.mxu0 0.0
  %355 = vmatprep.subr.mxu0 0.0
  %356 = vmatpush1.msra.mxu0 0.0
  %357 = vmatprep.subr.mxu0 0.0
  %358 = vmatpush1.msra.mxu0 0.0
  %359 = vmatprep.mubr.f32.mxu0 0.0
  %360 = vmatmul.mubr.f32.gmra.mrb[0].mxu0 %v293
  %v361 = vpop.f32.mrb[0].mxu0
  %v362 = vadd.f32 0.0, %v361
  %v363 = vpop.f32.mrb[0].mxu0
  %364 = vdwg.mxu0
  %v365 = vadd.f32 %v292, %v362
  %v366 = vmul.f32 %v365, 0.5
  %v367 = vtanh.pop %v366
  %v368 = vmul.f32 %v367, 0.5
  %v369 = vadd.f32 %v368, 0.5
  %v370 = vtanh.pop %v365
  %v371 = vmul.f32 %v369, %v171
  %373 = vrot.lane.b32.xlu0 %v370, 64
  %v374 = vpop.permute.xlu0 %373
  %v376 = vmul.f32 %v369, %v374
  %378 = vrot.lane.b32.xlu0 %v376, 32
  %v379 = vpop.permute.xlu0 %378
  %v381 = vadd.f32 %v371, %v379
  %v382 = vtanh.pop %v381
  %384 = vrot.lane.b32.xlu0 %v382, 64
  %v385 = vpop.permute.xlu0 %384
  %v387 = vmul.f32 %v369, %v385
  %389 = vrot.lane.b32.xlu0 %v387, 32
  %v390 = vpop.permute.xlu0 %389
  %s392 = scalar_lea.vmem %s4, 8
  %393 = vst.msk [vmem:[%s392] sm:$0xff] %vm77, %v390
  %s394 = scalar_lea.vmem %s44, 48
  %v395 = vld [vmem:[%s394] sm:$0xff]
  %v396 = vsel %vm77, %v287, 0
  %398 = vmatprep.subr.mxu0 0.0
  %399 = vmatpush1.msra.mxu0 %v68
  %400 = vmatprep.subr.mxu0 0.0
  %401 = vmatpush1.msra.mxu0 %v69
  %402 = vmatprep.subr.mxu0 0.0
  %403 = vmatpush1.msra.mxu0 %v70
  %404 = vmatprep.subr.mxu0 0.0
  %405 = vmatpush1.msra.mxu0 %v71
  %406 = vmatprep.subr.mxu0 0.0
  %407 = vmatpush1.msra.mxu0 0.0
  %408 = vmatprep.subr.mxu0 0.0
  %409 = vmatpush1.msra.mxu0 0.0
  %410 = vmatprep.subr.mxu0 0.0
  %411 = vmatpush1.msra.mxu0 0.0
  %412 = vmatprep.subr.mxu0 0.0
  %413 = vmatpush1.msra.mxu0 0.0
  %414 = vmatprep.subr.mxu0 0.0
  %415 = vmatpush1.msra.mxu0 0.0
  %416 = vmatprep.subr.mxu0 0.0
  %417 = vmatpush1.msra.mxu0 0.0
  %418 = vmatprep.subr.mxu0 0.0
  %419 = vmatpush1.msra.mxu0 0.0
  %420 = vmatprep.subr.mxu0 0.0
  %421 = vmatpush1.msra.mxu0 0.0
  %422 = vmatprep.subr.mxu0 0.0
  %423 = vmatpush1.msra.mxu0 0.0
  %424 = vmatprep.subr.mxu0 0.0
  %425 = vmatpush1.msra.mxu0 0.0
  %426 = vmatprep.subr.mxu0 0.0
  %427 = vmatpush1.msra.mxu0 0.0
  %428 = vmatprep.subr.mxu0 0.0
  %429 = vmatpush1.msra.mxu0 0.0
  %430 = vmatprep.subr.mxu0 0.0
  %431 = vmatpush1.msra.mxu0 0.0
  %432 = vmatprep.subr.mxu0 0.0
  %433 = vmatpush1.msra.mxu0 0.0
  %434 = vmatprep.subr.mxu0 0.0
  %435 = vmatpush1.msra.mxu0 0.0
  %436 = vmatprep.subr.mxu0 0.0
  %437 = vmatpush1.msra.mxu0 0.0
  %438 = vmatprep.subr.mxu0 0.0
  %439 = vmatpush1.msra.mxu0 0.0
  %440 = vmatprep.subr.mxu0 0.0
  %441 = vmatpush1.msra.mxu0 0.0
  %442 = vmatprep.subr.mxu0 0.0
  %443 = vmatpush1.msra.mxu0 0.0
  %444 = vmatprep.subr.mxu0 0.0
  %445 = vmatpush1.msra.mxu0 0.0
  %446 = vmatprep.subr.mxu0 0.0
  %447 = vmatpush1.msra.mxu0 0.0
  %448 = vmatprep.subr.mxu0 0.0
  %449 = vmatpush1.msra.mxu0 0.0
  %450 = vmatprep.subr.mxu0 0.0
  %451 = vmatpush1.msra.mxu0 0.0
  %452 = vmatprep.subr.mxu0 0.0
  %453 = vmatpush1.msra.mxu0 0.0
  %454 = vmatprep.subr.mxu0 0.0
  %455 = vmatpush1.msra.mxu0 0.0
  %456 = vmatprep.subr.mxu0 0.0
  %457 = vmatpush1.msra.mxu0 0.0
  %458 = vmatprep.subr.mxu0 0.0
  %459 = vmatpush1.msra.mxu0 0.0
  %460 = vmatprep.subr.mxu0 0.0
  %461 = vmatpush1.msra.mxu0 0.0
  %462 = vmatprep.mubr.f32.mxu0 0.0
  %463 = vmatmul.mubr.f32.gmra.mrb[0].mxu0 %v396
  %v464 = vpop.f32.mrb[0].mxu0
  %v465 = vadd.f32 0.0, %v464
  %v466 = vpop.f32.mrb[0].mxu0
  %467 = vdwg.mxu0
  %v468 = vadd.f32 %v395, %v465
  %v469 = vmul.f32 %v468, 0.5
  %v470 = vtanh.pop %v469
  %v471 = vmul.f32 %v470, 0.5
  %v472 = vadd.f32 %v471, 0.5
  %v473 = vtanh.pop %v468
  %v474 = vmul.f32 %v472, %v278
  %476 = vrot.lane.b32.xlu0 %v473, 64
  %v477 = vpop.permute.xlu0 %476
  %v479 = vmul.f32 %v472, %v477
  %481 = vrot.lane.b32.xlu0 %v479, 32
  %v482 = vpop.permute.xlu0 %481
  %v484 = vadd.f32 %v474, %v482
  %v485 = vtanh.pop %v484
  %487 = vrot.lane.b32.xlu0 %v485, 64
  %v488 = vpop.permute.xlu0 %487
  %v490 = vmul.f32 %v472, %v488
  %492 = vrot.lane.b32.xlu0 %v490, 32
  %v493 = vpop.permute.xlu0 %492
  %s495 = scalar_lea.vmem %s52, 48
  %496 = vst.msk [vmem:[%s495] sm:$0xff] %vm77, %v493
  %s497 = scalar_lea.vmem %s0, 16
  %v498 = vld [vmem:[%s497] sm:$0xff]
  %v499 = vsel %vm77, %v390, 0
  %501 = vmatprep.subr.mxu0 0.0
  %502 = vmatpush1.msra.mxu0 %v64
  %503 = vmatprep.subr.mxu0 0.0
  %504 = vmatpush1.msra.mxu0 %v65
  %505 = vmatprep.subr.mxu0 0.0
  %506 = vmatpush1.msra.mxu0 %v66
  %507 = vmatprep.subr.mxu0 0.0
  %508 = vmatpush1.msra.mxu0 %v67
  %509 = vmatprep.subr.mxu0 0.0
  %510 = vmatpush1.msra.mxu0 0.0
  %511 = vmatprep.subr.mxu0 0.0
  %512 = vmatpush1.msra.mxu0 0.0
  %513 = vmatprep.subr.mxu0 0.0
  %514 = vmatpush1.msra.mxu0 0.0
  %515 = vmatprep.subr.mxu0 0.0
  %516 = vmatpush1.msra.mxu0 0.0
  %517 = vmatprep.subr.mxu0 0.0
  %518 = vmatpush1.msra.mxu0 0.0
  %519 = vmatprep.subr.mxu0 0.0
  %520 = vmatpush1.msra.mxu0 0.0
  %521 = vmatprep.subr.mxu0 0.0
  %522 = vmatpush1.msra.mxu0 0.0
  %523 = vmatprep.subr.mxu0 0.0
  %524 = vmatpush1.msra.mxu0 0.0
  %525 = vmatprep.subr.mxu0 0.0
  %526 = vmatpush1.msra.mxu0 0.0
  %527 = vmatprep.subr.mxu0 0.0
  %528 = vmatpush1.msra.mxu0 0.0
  %529 = vmatprep.subr.mxu0 0.0
  %530 = vmatpush1.msra.mxu0 0.0
  %531 = vmatprep.subr.mxu0 0.0
  %532 = vmatpush1.msra.mxu0 0.0
  %533 = vmatprep.subr.mxu0 0.0
  %534 = vmatpush1.msra.mxu0 0.0
  %535 = vmatprep.subr.mxu0 0.0
  %536 = vmatpush1.msra.mxu0 0.0
  %537 = vmatprep.subr.mxu0 0.0
  %538 = vmatpush1.msra.mxu0 0.0
  %539 = vmatprep.subr.mxu0 0.0
  %540 = vmatpush1.msra.mxu0 0.0
  %541 = vmatprep.subr.mxu0 0.0
  %542 = vmatpush1.msra.mxu0 0.0
  %543 = vmatprep.subr.mxu0 0.0
  %544 = vmatpush1.msra.mxu0 0.0
  %545 = vmatprep.subr.mxu0 0.0
  %546 = vmatpush1.msra.mxu0 0.0
  %547 = vmatprep.subr.mxu0 0.0
  %548 = vmatpush1.msra.mxu0 0.0
  %549 = vmatprep.subr.mxu0 0.0
  %550 = vmatpush1.msra.mxu0 0.0
  %551 = vmatprep.subr.mxu0 0.0
  %552 = vmatpush1.msra.mxu0 0.0
  %553 = vmatprep.subr.mxu0 0.0
  %554 = vmatpush1.msra.mxu0 0.0
  %555 = vmatprep.subr.mxu0 0.0
  %556 = vmatpush1.msra.mxu0 0.0
  %557 = vmatprep.subr.mxu0 0.0
  %558 = vmatpush1.msra.mxu0 0.0
  %559 = vmatprep.subr.mxu0 0.0
  %560 = vmatpush1.msra.mxu0 0.0
  %561 = vmatprep.subr.mxu0 0.0
  %562 = vmatpush1.msra.mxu0 0.0
  %563 = vmatprep.subr.mxu0 0.0
  %564 = vmatpush1.msra.mxu0 0.0
  %565 = vmatprep.mubr.f32.mxu0 0.0
  %566 = vmatmul.mubr.f32.gmra.mrb[0].mxu0 %v499
  %v567 = vpop.f32.mrb[0].mxu0
  %v568 = vadd.f32 0.0, %v567
  %v569 = vpop.f32.mrb[0].mxu0
  %570 = vdwg.mxu0
  %v571 = vadd.f32 %v498, %v568
  %v572 = vmul.f32 %v571, 0.5
  %v573 = vtanh.pop %v572
  %v574 = vmul.f32 %v573, 0.5
  %v575 = vadd.f32 %v574, 0.5
  %v576 = vtanh.pop %v571
  %v577 = vmul.f32 %v575, %v381
  %579 = vrot.lane.b32.xlu0 %v576, 64
  %v580 = vpop.permute.xlu0 %579
  %v582 = vmul.f32 %v575, %v580
  %584 = vrot.lane.b32.xlu0 %v582, 32
  %v585 = vpop.permute.xlu0 %584
  %v587 = vadd.f32 %v577, %v585
  %v588 = vtanh.pop %v587
  %590 = vrot.lane.b32.xlu0 %v588, 64
  %v591 = vpop.permute.xlu0 %590
  %v593 = vmul.f32 %v575, %v591
  %595 = vrot.lane.b32.xlu0 %v593, 32
  %v596 = vpop.permute.xlu0 %595
  %s598 = scalar_lea.vmem %s4, 16
  %599 = vst.msk [vmem:[%s598] sm:$0xff] %vm77, %v596
  %s600 = scalar_lea.vmem %s44, 40
  %v601 = vld [vmem:[%s600] sm:$0xff]
  %v602 = vsel %vm77, %v493, 0
  %604 = vmatprep.subr.mxu0 0.0
  %605 = vmatpush1.msra.mxu0 %v68
  %606 = vmatprep.subr.mxu0 0.0
  %607 = vmatpush1.msra.mxu0 %v69
  %608 = vmatprep.subr.mxu0 0.0
  %609 = vmatpush1.msra.mxu0 %v70
  %610 = vmatprep.subr.mxu0 0.0
  %611 = vmatpush1.msra.mxu0 %v71
  %612 = vmatprep.subr.mxu0 0.0
  %613 = vmatpush1.msra.mxu0 0.0
  %614 = vmatprep.subr.mxu0 0.0
  %615 = vmatpush1.msra.mxu0 0.0
  %616 = vmatprep.subr.mxu0 0.0
  %617 = vmatpush1.msra.mxu0 0.0
  %618 = vmatprep.subr.mxu0 0.0
  %619 = vmatpush1.msra.mxu0 0.0
  %620 = vmatprep.subr.mxu0 0.0
  %621 = vmatpush1.msra.mxu0 0.0
  %622 = vmatprep.subr.mxu0 0.0
  %623 = vmatpush1.msra.mxu0 0.0
  %624 = vmatprep.subr.mxu0 0.0
  %625 = vmatpush1.msra.mxu0 0.0
  %626 = vmatprep.subr.mxu0 0.0
  %627 = vmatpush1.msra.mxu0 0.0
  %628 = vmatprep.subr.mxu0 0.0
  %629 = vmatpush1.msra.mxu0 0.0
  %630 = vmatprep.subr.mxu0 0.0
  %631 = vmatpush1.msra.mxu0 0.0
  %632 = vmatprep.subr.mxu0 0.0
  %633 = vmatpush1.msra.mxu0 0.0
  %634 = vmatprep.subr.mxu0 0.0
  %635 = vmatpush1.msra.mxu0 0.0
  %636 = vmatprep.subr.mxu0 0.0
  %637 = vmatpush1.msra.mxu0 0.0
  %638 = vmatprep.subr.mxu0 0.0
  %639 = vmatpush1.msra.mxu0 0.0
  %640 = vmatprep.subr.mxu0 0.0
  %641 = vmatpush1.msra.mxu0 0.0
  %642 = vmatprep.subr.mxu0 0.0
  %643 = vmatpush1.msra.mxu0 0.0
  %644 = vmatprep.subr.mxu0 0.0
  %645 = vmatpush1.msra.mxu0 0.0
  %646 = vmatprep.subr.mxu0 0.0
  %647 = vmatpush1.msra.mxu0 0.0
  %648 = vmatprep.subr.mxu0 0.0
  %649 = vmatpush1.msra.mxu0 0.0
  %650 = vmatprep.subr.mxu0 0.0
  %651 = vmatpush1.msra.mxu0 0.0
  %652 = vmatprep.subr.mxu0 0.0
  %653 = vmatpush1.msra.mxu0 0.0
  %654 = vmatprep.subr.mxu0 0.0
  %655 = vmatpush1.msra.mxu0 0.0
  %656 = vmatprep.subr.mxu0 0.0
  %657 = vmatpush1.msra.mxu0 0.0
  %658 = vmatprep.subr.mxu0 0.0
  %659 = vmatpush1.msra.mxu0 0.0
  %660 = vmatprep.subr.mxu0 0.0
  %661 = vmatpush1.msra.mxu0 0.0
  %662 = vmatprep.subr.mxu0 0.0
  %663 = vmatpush1.msra.mxu0 0.0
  %664 = vmatprep.subr.mxu0 0.0
  %665 = vmatpush1.msra.mxu0 0.0
  %666 = vmatprep.subr.mxu0 0.0
  %667 = vmatpush1.msra.mxu0 0.0
  %668 = vmatprep.mubr.f32.mxu0 0.0
  %669 = vmatmul.mubr.f32.gmra.mrb[0].mxu0 %v602
  %v670 = vpop.f32.mrb[0].mxu0
  %v671 = vadd.f32 0.0, %v670
  %v672 = vpop.f32.mrb[0].mxu0
  %673 = vdwg.mxu0
  %v674 = vadd.f32 %v601, %v671
  %v675 = vmul.f32 %v674, 0.5
  %v676 = vtanh.pop %v675
  %v677 = vmul.f32 %v676, 0.5
  %v678 = vadd.f32 %v677, 0.5
  %v679 = vtanh.pop %v674
  %v680 = vmul.f32 %v678, %v484
  %682 = vrot.lane.b32.xlu0 %v679, 64
  %v683 = vpop.permute.xlu0 %682
  %v685 = vmul.f32 %v678, %v683
  %687 = vrot.lane.b32.xlu0 %v685, 32
  %v688 = vpop.permute.xlu0 %687
  %v690 = vadd.f32 %v680, %v688
  %v691 = vtanh.pop %v690
  %693 = vrot.lane.b32.xlu0 %v691, 64
  %v694 = vpop.permute.xlu0 %693
  %v696 = vmul.f32 %v678, %v694
  %698 = vrot.lane.b32.xlu0 %v696, 32
  %v699 = vpop.permute.xlu0 %698
  %s701 = scalar_lea.vmem %s52, 40
  %702 = vst.msk [vmem:[%s701] sm:$0xff] %vm77, %v699
  %s703 = scalar_lea.vmem %s0, 24
  %v704 = vld [vmem:[%s703] sm:$0xff]
  %v705 = vsel %vm77, %v596, 0
  %707 = vmatprep.subr.mxu0 0.0
  %708 = vmatpush1.msra.mxu0 %v64
  %709 = vmatprep.subr.mxu0 0.0
  %710 = vmatpush1.msra.mxu0 %v65
  %711 = vmatprep.subr.mxu0 0.0
  %712 = vmatpush1.msra.mxu0 %v66
  %713 = vmatprep.subr.mxu0 0.0
  %714 = vmatpush1.msra.mxu0 %v67
  %715 = vmatprep.subr.mxu0 0.0
  %716 = vmatpush1.msra.mxu0 0.0
  %717 = vmatprep.subr.mxu0 0.0
  %718 = vmatpush1.msra.mxu0 0.0
  %719 = vmatprep.subr.mxu0 0.0
  %720 = vmatpush1.msra.mxu0 0.0
  %721 = vmatprep.subr.mxu0 0.0
  %722 = vmatpush1.msra.mxu0 0.0
  %723 = vmatprep.subr.mxu0 0.0
  %724 = vmatpush1.msra.mxu0 0.0
  %725 = vmatprep.subr.mxu0 0.0
  %726 = vmatpush1.msra.mxu0 0.0
  %727 = vmatprep.subr.mxu0 0.0
  %728 = vmatpush1.msra.mxu0 0.0
  %729 = vmatprep.subr.mxu0 0.0
  %730 = vmatpush1.msra.mxu0 0.0
  %731 = vmatprep.subr.mxu0 0.0
  %732 = vmatpush1.msra.mxu0 0.0
  %733 = vmatprep.subr.mxu0 0.0
  %734 = vmatpush1.msra.mxu0 0.0
  %735 = vmatprep.subr.mxu0 0.0
  %736 = vmatpush1.msra.mxu0 0.0
  %737 = vmatprep.subr.mxu0 0.0
  %738 = vmatpush1.msra.mxu0 0.0
  %739 = vmatprep.subr.mxu0 0.0
  %740 = vmatpush1.msra.mxu0 0.0
  %741 = vmatprep.subr.mxu0 0.0
  %742 = vmatpush1.msra.mxu0 0.0
  %743 = vmatprep.subr.mxu0 0.0
  %744 = vmatpush1.msra.mxu0 0.0
  %745 = vmatprep.subr.mxu0 0.0
  %746 = vmatpush1.msra.mxu0 0.0
  %747 = vmatprep.subr.mxu0 0.0
  %748 = vmatpush1.msra.mxu0 0.0
  %749 = vmatprep.subr.mxu0 0.0
  %750 = vmatpush1.msra.mxu0 0.0
  %751 = vmatprep.subr.mxu0 0.0
  %752 = vmatpush1.msra.mxu0 0.0
  %753 = vmatprep.subr.mxu0 0.0
  %754 = vmatpush1.msra.mxu0 0.0
  %755 = vmatprep.subr.mxu0 0.0
  %756 = vmatpush1.msra.mxu0 0.0
  %757 = vmatprep.subr.mxu0 0.0
  %758 = vmatpush1.msra.mxu0 0.0
  %759 = vmatprep.subr.mxu0 0.0
  %760 = vmatpush1.msra.mxu0 0.0
  %761 = vmatprep.subr.mxu0 0.0
  %762 = vmatpush1.msra.mxu0 0.0
  %763 = vmatprep.subr.mxu0 0.0
  %764 = vmatpush1.msra.mxu0 0.0
  %765 = vmatprep.subr.mxu0 0.0
  %766 = vmatpush1.msra.mxu0 0.0
  %767 = vmatprep.subr.mxu0 0.0
  %768 = vmatpush1.msra.mxu0 0.0
  %769 = vmatprep.subr.mxu0 0.0
  %770 = vmatpush1.msra.mxu0 0.0
  %771 = vmatprep.mubr.f32.mxu0 0.0
  %772 = vmatmul.mubr.f32.gmra.mrb[0].mxu0 %v705
  %v773 = vpop.f32.mrb[0].mxu0
  %v774 = vadd.f32 0.0, %v773
  %v775 = vpop.f32.mrb[0].mxu0
  %776 = vdwg.mxu0
  %v777 = vadd.f32 %v704, %v774
  %v778 = vmul.f32 %v777, 0.5
  %v779 = vtanh.pop %v778
  %v780 = vmul.f32 %v779, 0.5
  %v781 = vadd.f32 %v780, 0.5
  %v782 = vtanh.pop %v777
  %v783 = vmul.f32 %v781, %v587
  %785 = vrot.lane.b32.xlu0 %v782, 64
  %v786 = vpop.permute.xlu0 %785
  %v788 = vmul.f32 %v781, %v786
  %790 = vrot.lane.b32.xlu0 %v788, 32
  %v791 = vpop.permute.xlu0 %790
  %v793 = vadd.f32 %v783, %v791
  %v794 = vtanh.pop %v793
  %796 = vrot.lane.b32.xlu0 %v794, 64
  %v797 = vpop.permute.xlu0 %796
  %v799 = vmul.f32 %v781, %v797
  %801 = vrot.lane.b32.xlu0 %v799, 32
  %v802 = vpop.permute.xlu0 %801
  %s804 = scalar_lea.vmem %s4, 24
  %805 = vst.msk [vmem:[%s804] sm:$0xff] %vm77, %v802
  %s806 = scalar_lea.vmem %s44, 32
  %v807 = vld [vmem:[%s806] sm:$0xff]
  %v808 = vsel %vm77, %v699, 0
  %810 = vmatprep.subr.mxu0 0.0
  %811 = vmatpush1.msra.mxu0 %v68
  %812 = vmatprep.subr.mxu0 0.0
  %813 = vmatpush1.msra.mxu0 %v69
  %814 = vmatprep.subr.mxu0 0.0
  %815 = vmatpush1.msra.mxu0 %v70
  %816 = vmatprep.subr.mxu0 0.0
  %817 = vmatpush1.msra.mxu0 %v71
  %818 = vmatprep.subr.mxu0 0.0
  %819 = vmatpush1.msra.mxu0 0.0
  %820 = vmatprep.subr.mxu0 0.0
  %821 = vmatpush1.msra.mxu0 0.0
  %822 = vmatprep.subr.mxu0 0.0
  %823 = vmatpush1.msra.mxu0 0.0
  %824 = vmatprep.subr.mxu0 0.0
  %825 = vmatpush1.msra.mxu0 0.0
  %826 = vmatprep.subr.mxu0 0.0
  %827 = vmatpush1.msra.mxu0 0.0
  %828 = vmatprep.subr.mxu0 0.0
  %829 = vmatpush1.msra.mxu0 0.0
  %830 = vmatprep.subr.mxu0 0.0
  %831 = vmatpush1.msra.mxu0 0.0
  %832 = vmatprep.subr.mxu0 0.0
  %833 = vmatpush1.msra.mxu0 0.0
  %834 = vmatprep.subr.mxu0 0.0
  %835 = vmatpush1.msra.mxu0 0.0
  %836 = vmatprep.subr.mxu0 0.0
  %837 = vmatpush1.msra.mxu0 0.0
  %838 = vmatprep.subr.mxu0 0.0
  %839 = vmatpush1.msra.mxu0 0.0
  %840 = vmatprep.subr.mxu0 0.0
  %841 = vmatpush1.msra.mxu0 0.0
  %842 = vmatprep.subr.mxu0 0.0
  %843 = vmatpush1.msra.mxu0 0.0
  %844 = vmatprep.subr.mxu0 0.0
  %845 = vmatpush1.msra.mxu0 0.0
  %846 = vmatprep.subr.mxu0 0.0
  %847 = vmatpush1.msra.mxu0 0.0
  %848 = vmatprep.subr.mxu0 0.0
  %849 = vmatpush1.msra.mxu0 0.0
  %850 = vmatprep.subr.mxu0 0.0
  %851 = vmatpush1.msra.mxu0 0.0
  %852 = vmatprep.subr.mxu0 0.0
  %853 = vmatpush1.msra.mxu0 0.0
  %854 = vmatprep.subr.mxu0 0.0
  %855 = vmatpush1.msra.mxu0 0.0
  %856 = vmatprep.subr.mxu0 0.0
  %857 = vmatpush1.msra.mxu0 0.0
  %858 = vmatprep.subr.mxu0 0.0
  %859 = vmatpush1.msra.mxu0 0.0
  %860 = vmatprep.subr.mxu0 0.0
  %861 = vmatpush1.msra.mxu0 0.0
  %862 = vmatprep.subr.mxu0 0.0
  %863 = vmatpush1.msra.mxu0 0.0
  %864 = vmatprep.subr.mxu0 0.0
  %865 = vmatpush1.msra.mxu0 0.0
  %866 = vmatprep.subr.mxu0 0.0
  %867 = vmatpush1.msra.mxu0 0.0
  %868 = vmatprep.subr.mxu0 0.0
  %869 = vmatpush1.msra.mxu0 0.0
  %870 = vmatprep.subr.mxu0 0.0
  %871 = vmatpush1.msra.mxu0 0.0
  %872 = vmatprep.subr.mxu0 0.0
  %873 = vmatpush1.msra.mxu0 0.0
  %874 = vmatprep.mubr.f32.mxu0 0.0
  %875 = vmatmul.mubr.f32.gmra.mrb[0].mxu0 %v808
  %v876 = vpop.f32.mrb[0].mxu0
  %v877 = vadd.f32 0.0, %v876
  %v878 = vpop.f32.mrb[0].mxu0
  %879 = vdwg.mxu0
  %v880 = vadd.f32 %v807, %v877
  %v881 = vmul.f32 %v880, 0.5
  %v882 = vtanh.pop %v881
  %v883 = vmul.f32 %v882, 0.5
  %v884 = vadd.f32 %v883, 0.5
  %v885 = vtanh.pop %v880
  %v886 = vmul.f32 %v884, %v690
  %888 = vrot.lane.b32.xlu0 %v885, 64
  %v889 = vpop.permute.xlu0 %888
  %v891 = vmul.f32 %v884, %v889
  %893 = vrot.lane.b32.xlu0 %v891, 32
  %v894 = vpop.permute.xlu0 %893
  %v896 = vadd.f32 %v886, %v894
  %v897 = vtanh.pop %v896
  %899 = vrot.lane.b32.xlu0 %v897, 64
  %v900 = vpop.permute.xlu0 %899
  %v902 = vmul.f32 %v884, %v900
  %904 = vrot.lane.b32.xlu0 %v902, 32
  %v905 = vpop.permute.xlu0 %904
  %s907 = scalar_lea.vmem %s52, 32
  %908 = vst.msk [vmem:[%s907] sm:$0xff] %vm77, %v905
  %s909 = scalar_lea.vmem %s0, 32
  %v910 = vld [vmem:[%s909] sm:$0xff]
  %v911 = vsel %vm77, %v802, 0
  %913 = vmatprep.subr.mxu0 0.0
  %914 = vmatpush1.msra.mxu0 %v64
  %915 = vmatprep.subr.mxu0 0.0
  %916 = vmatpush1.msra.mxu0 %v65
  %917 = vmatprep.subr.mxu0 0.0
  %918 = vmatpush1.msra.mxu0 %v66
  %919 = vmatprep.subr.mxu0 0.0
  %920 = vmatpush1.msra.mxu0 %v67
  %921 = vmatprep.subr.mxu0 0.0
  %922 = vmatpush1.msra.mxu0 0.0
  %923 = vmatprep.subr.mxu0 0.0
  %924 = vmatpush1.msra.mxu0 0.0
  %925 = vmatprep.subr.mxu0 0.0
  %926 = vmatpush1.msra.mxu0 0.0
  %927 = vmatprep.subr.mxu0 0.0
  %928 = vmatpush1.msra.mxu0 0.0
  %929 = vmatprep.subr.mxu0 0.0
  %930 = vmatpush1.msra.mxu0 0.0
  %931 = vmatprep.subr.mxu0 0.0
  %932 = vmatpush1.msra.mxu0 0.0
  %933 = vmatprep.subr.mxu0 0.0
  %934 = vmatpush1.msra.mxu0 0.0
  %935 = vmatprep.subr.mxu0 0.0
  %936 = vmatpush1.msra.mxu0 0.0
  %937 = vmatprep.subr.mxu0 0.0
  %938 = vmatpush1.msra.mxu0 0.0
  %939 = vmatprep.subr.mxu0 0.0
  %940 = vmatpush1.msra.mxu0 0.0
  %941 = vmatprep.subr.mxu0 0.0
  %942 = vmatpush1.msra.mxu0 0.0
  %943 = vmatprep.subr.mxu0 0.0
  %944 = vmatpush1.msra.mxu0 0.0
  %945 = vmatprep.subr.mxu0 0.0
  %946 = vmatpush1.msra.mxu0 0.0
  %947 = vmatprep.subr.mxu0 0.0
  %948 = vmatpush1.msra.mxu0 0.0
  %949 = vmatprep.subr.mxu0 0.0
  %950 = vmatpush1.msra.mxu0 0.0
  %951 = vmatprep.subr.mxu0 0.0
  %952 = vmatpush1.msra.mxu0 0.0
  %953 = vmatprep.subr.mxu0 0.0
  %954 = vmatpush1.msra.mxu0 0.0
  %955 = vmatprep.subr.mxu0 0.0
  %956 = vmatpush1.msra.mxu0 0.0
  %957 = vmatprep.subr.mxu0 0.0
  %958 = vmatpush1.msra.mxu0 0.0
  %959 = vmatprep.subr.mxu0 0.0
  %960 = vmatpush1.msra.mxu0 0.0
  %961 = vmatprep.subr.mxu0 0.0
  %962 = vmatpush1.msra.mxu0 0.0
  %963 = vmatprep.subr.mxu0 0.0
  %964 = vmatpush1.msra.mxu0 0.0
  %965 = vmatprep.subr.mxu0 0.0
  %966 = vmatpush1.msra.mxu0 0.0
  %967 = vmatprep.subr.mxu0 0.0
  %968 = vmatpush1.msra.mxu0 0.0
  %969 = vmatprep.subr.mxu0 0.0
  %970 = vmatpush1.msra.mxu0 0.0
  %971 = vmatprep.subr.mxu0 0.0
  %972 = vmatpush1.msra.mxu0 0.0
  %973 = vmatprep.subr.mxu0 0.0
  %974 = vmatpush1.msra.mxu0 0.0
  %975 = vmatprep.subr.mxu0 0.0
  %976 = vmatpush1.msra.mxu0 0.0
  %977 = vmatprep.mubr.f32.mxu0 0.0
  %978 = vmatmul.mubr.f32.gmra.mrb[0].mxu0 %v911
  %v979 = vpop.f32.mrb[0].mxu0
  %v980 = vadd.f32 0.0, %v979
  %v981 = vpop.f32.mrb[0].mxu0
  %982 = vdwg.mxu0
  %v983 = vadd.f32 %v910, %v980
  %v984 = vmul.f32 %v983, 0.5
  %v985 = vtanh.pop %v984
  %v986 = vmul.f32 %v985, 0.5
  %v987 = vadd.f32 %v986, 0.5
  %v988 = vtanh.pop %v983
  %v989 = vmul.f32 %v987, %v793
  %991 = vrot.lane.b32.xlu0 %v988, 64
  %v992 = vpop.permute.xlu0 %991
  %v994 = vmul.f32 %v987, %v992
  %996 = vrot.lane.b32.xlu0 %v994, 32
  %v997 = vpop.permute.xlu0 %996
  %v999 = vadd.f32 %v989, %v997
  %v1000 = vtanh.pop %v999
  %1002 = vrot.lane.b32.xlu0 %v1000, 64
  %v1003 = vpop.permute.xlu0 %1002
  %v1005 = vmul.f32 %v987, %v1003
  %1007 = vrot.lane.b32.xlu0 %v1005, 32
  %v1008 = vpop.permute.xlu0 %1007
  %s1010 = scalar_lea.vmem %s4, 32
  %1011 = vst.msk [vmem:[%s1010] sm:$0xff] %vm77, %v1008
  %s1012 = scalar_lea.vmem %s44, 24
  %v1013 = vld [vmem:[%s1012] sm:$0xff]
  %v1014 = vsel %vm77, %v905, 0
  %1016 = vmatprep.subr.mxu0 0.0
  %1017 = vmatpush1.msra.mxu0 %v68
  %1018 = vmatprep.subr.mxu0 0.0
  %1019 = vmatpush1.msra.mxu0 %v69
  %1020 = vmatprep.subr.mxu0 0.0
  %1021 = vmatpush1.msra.mxu0 %v70
  %1022 = vmatprep.subr.mxu0 0.0
  %1023 = vmatpush1.msra.mxu0 %v71
  %1024 = vmatprep.subr.mxu0 0.0
  %1025 = vmatpush1.msra.mxu0 0.0
  %1026 = vmatprep.subr.mxu0 0.0
  %1027 = vmatpush1.msra.mxu0 0.0
  %1028 = vmatprep.subr.mxu0 0.0
  %1029 = vmatpush1.msra.mxu0 0.0
  %1030 = vmatprep.subr.mxu0 0.0
  %1031 = vmatpush1.msra.mxu0 0.0
  %1032 = vmatprep.subr.mxu0 0.0
  %1033 = vmatpush1.msra.mxu0 0.0
  %1034 = vmatprep.subr.mxu0 0.0
  %1035 = vmatpush1.msra.mxu0 0.0
  %1036 = vmatprep.subr.mxu0 0.0
  %1037 = vmatpush1.msra.mxu0 0.0
  %1038 = vmatprep.subr.mxu0 0.0
  %1039 = vmatpush1.msra.mxu0 0.0
  %1040 = vmatprep.subr.mxu0 0.0
  %1041 = vmatpush1.msra.mxu0 0.0
  %1042 = vmatprep.subr.mxu0 0.0
  %1043 = vmatpush1.msra.mxu0 0.0
  %1044 = vmatprep.subr.mxu0 0.0
  %1045 = vmatpush1.msra.mxu0 0.0
  %1046 = vmatprep.subr.mxu0 0.0
  %1047 = vmatpush1.msra.mxu0 0.0
  %1048 = vmatprep.subr.mxu0 0.0
  %1049 = vmatpush1.msra.mxu0 0.0
  %1050 = vmatprep.subr.mxu0 0.0
  %1051 = vmatpush1.msra.mxu0 0.0
  %1052 = vmatprep.subr.mxu0 0.0
  %1053 = vmatpush1.msra.mxu0 0.0
  %1054 = vmatprep.subr.mxu0 0.0
  %1055 = vmatpush1.msra.mxu0 0.0
  %1056 = vmatprep.subr.mxu0 0.0
  %1057 = vmatpush1.msra.mxu0 0.0
  %1058 = vmatprep.subr.mxu0 0.0
  %1059 = vmatpush1.msra.mxu0 0.0
  %1060 = vmatprep.subr.mxu0 0.0
  %1061 = vmatpush1.msra.mxu0 0.0
  %1062 = vmatprep.subr.mxu0 0.0
  %1063 = vmatpush1.msra.mxu0 0.0
  %1064 = vmatprep.subr.mxu0 0.0
  %1065 = vmatpush1.msra.mxu0 0.0
  %1066 = vmatprep.subr.mxu0 0.0
  %1067 = vmatpush1.msra.mxu0 0.0
  %1068 = vmatprep.subr.mxu0 0.0
  %1069 = vmatpush1.msra.mxu0 0.0
  %1070 = vmatprep.subr.mxu0 0.0
  %1071 = vmatpush1.msra.mxu0 0.0
  %1072 = vmatprep.subr.mxu0 0.0
  %1073 = vmatpush1.msra.mxu0 0.0
  %1074 = vmatprep.subr.mxu0 0.0
  %1075 = vmatpush1.msra.mxu0 0.0
  %1076 = vmatprep.subr.mxu0 0.0
  %1077 = vmatpush1.msra.mxu0 0.0
  %1078 = vmatprep.subr.mxu0 0.0
  %1079 = vmatpush1.msra.mxu0 0.0
  %1080 = vmatprep.mubr.f32.mxu0 0.0
  %1081 = vmatmul.mubr.f32.gmra.mrb[0].mxu0 %v1014
  %v1082 = vpop.f32.mrb[0].mxu0
  %v1083 = vadd.f32 0.0, %v1082
  %v1084 = vpop.f32.mrb[0].mxu0
  %1085 = vdwg.mxu0
  %v1086 = vadd.f32 %v1013, %v1083
  %v1087 = vmul.f32 %v1086, 0.5
  %v1088 = vtanh.pop %v1087
  %v1089 = vmul.f32 %v1088, 0.5
  %v1090 = vadd.f32 %v1089, 0.5
  %v1091 = vtanh.pop %v1086
  %v1092 = vmul.f32 %v1090, %v896
  %1094 = vrot.lane.b32.xlu0 %v1091, 64
  %v1095 = vpop.permute.xlu0 %1094
  %v1097 = vmul.f32 %v1090, %v1095
  %1099 = vrot.lane.b32.xlu0 %v1097, 32
  %v1100 = vpop.permute.xlu0 %1099
  %v1102 = vadd.f32 %v1092, %v1100
  %v1103 = vtanh.pop %v1102
  %1105 = vrot.lane.b32.xlu0 %v1103, 64
  %v1106 = vpop.permute.xlu0 %1105
  %v1108 = vmul.f32 %v1090, %v1106
  %1110 = vrot.lane.b32.xlu0 %v1108, 32
  %v1111 = vpop.permute.xlu0 %1110
  %s1113 = scalar_lea.vmem %s52, 24
  %1114 = vst.msk [vmem:[%s1113] sm:$0xff] %vm77, %v1111
  %s1115 = scalar_lea.vmem %s0, 40
  %v1116 = vld [vmem:[%s1115] sm:$0xff]
  %v1117 = vsel %vm77, %v1008, 0
  %1119 = vmatprep.subr.mxu0 0.0
  %1120 = vmatpush1.msra.mxu0 %v64
  %1121 = vmatprep.subr.mxu0 0.0
  %1122 = vmatpush1.msra.mxu0 %v65
  %1123 = vmatprep.subr.mxu0 0.0
  %1124 = vmatpush1.msra.mxu0 %v66
  %1125 = vmatprep.subr.mxu0 0.0
  %1126 = vmatpush1.msra.mxu0 %v67
  %1127 = vmatprep.subr.mxu0 0.0
  %1128 = vmatpush1.msra.mxu0 0.0
  %1129 = vmatprep.subr.mxu0 0.0
  %1130 = vmatpush1.msra.mxu0 0.0
  %1131 = vmatprep.subr.mxu0 0.0
  %1132 = vmatpush1.msra.mxu0 0.0
  %1133 = vmatprep.subr.mxu0 0.0
  %1134 = vmatpush1.msra.mxu0 0.0
  %1135 = vmatprep.subr.mxu0 0.0
  %1136 = vmatpush1.msra.mxu0 0.0
  %1137 = vmatprep.subr.mxu0 0.0
  %1138 = vmatpush1.msra.mxu0 0.0
  %1139 = vmatprep.subr.mxu0 0.0
  %1140 = vmatpush1.msra.mxu0 0.0
  %1141 = vmatprep.subr.mxu0 0.0
  %1142 = vmatpush1.msra.mxu0 0.0
  %1143 = vmatprep.subr.mxu0 0.0
  %1144 = vmatpush1.msra.mxu0 0.0
  %1145 = vmatprep.subr.mxu0 0.0
  %1146 = vmatpush1.msra.mxu0 0.0
  %1147 = vmatprep.subr.mxu0 0.0
  %1148 = vmatpush1.msra.mxu0 0.0
  %1149 = vmatprep.subr.mxu0 0.0
  %1150 = vmatpush1.msra.mxu0 0.0
  %1151 = vmatprep.subr.mxu0 0.0
  %1152 = vmatpush1.msra.mxu0 0.0
  %1153 = vmatprep.subr.mxu0 0.0
  %1154 = vmatpush1.msra.mxu0 0.0
  %1155 = vmatprep.subr.mxu0 0.0
  %1156 = vmatpush1.msra.mxu0 0.0
  %1157 = vmatprep.subr.mxu0 0.0
  %1158 = vmatpush1.msra.mxu0 0.0
  %1159 = vmatprep.subr.mxu0 0.0
  %1160 = vmatpush1.msra.mxu0 0.0
  %1161 = vmatprep.subr.mxu0 0.0
  %1162 = vmatpush1.msra.mxu0 0.0
  %1163 = vmatprep.subr.mxu0 0.0
  %1164 = vmatpush1.msra.mxu0 0.0
  %1165 = vmatprep.subr.mxu0 0.0
  %1166 = vmatpush1.msra.mxu0 0.0
  %1167 = vmatprep.subr.mxu0 0.0
  %1168 = vmatpush1.msra.mxu0 0.0
  %1169 = vmatprep.subr.mxu0 0.0
  %1170 = vmatpush1.msra.mxu0 0.0
  %1171 = vmatprep.subr.mxu0 0.0
  %1172 = vmatpush1.msra.mxu0 0.0
  %1173 = vmatprep.subr.mxu0 0.0
  %1174 = vmatpush1.msra.mxu0 0.0
  %1175 = vmatprep.subr.mxu0 0.0
  %1176 = vmatpush1.msra.mxu0 0.0
  %1177 = vmatprep.subr.mxu0 0.0
  %1178 = vmatpush1.msra.mxu0 0.0
  %1179 = vmatprep.subr.mxu0 0.0
  %1180 = vmatpush1.msra.mxu0 0.0
  %1181 = vmatprep.subr.mxu0 0.0
  %1182 = vmatpush1.msra.mxu0 0.0
  %1183 = vmatprep.mubr.f32.mxu0 0.0
  %1184 = vmatmul.mubr.f32.gmra.mrb[0].mxu0 %v1117
  %v1185 = vpop.f32.mrb[0].mxu0
  %v1186 = vadd.f32 0.0, %v1185
  %v1187 = vpop.f32.mrb[0].mxu0
  %1188 = vdwg.mxu0
  %v1189 = vadd.f32 %v1116, %v1186
  %v1190 = vmul.f32 %v1189, 0.5
  %v1191 = vtanh.pop %v1190
  %v1192 = vmul.f32 %v1191, 0.5
  %v1193 = vadd.f32 %v1192, 0.5
  %v1194 = vtanh.pop %v1189
  %v1195 = vmul.f32 %v1193, %v999
  %1197 = vrot.lane.b32.xlu0 %v1194, 64
  %v1198 = vpop.permute.xlu0 %1197
  %v1200 = vmul.f32 %v1193, %v1198
  %1202 = vrot.lane.b32.xlu0 %v1200, 32
  %v1203 = vpop.permute.xlu0 %1202
  %v1205 = vadd.f32 %v1195, %v1203
  %v1206 = vtanh.pop %v1205
  %1208 = vrot.lane.b32.xlu0 %v1206, 64
  %v1209 = vpop.permute.xlu0 %1208
  %v1211 = vmul.f32 %v1193, %v1209
  %1213 = vrot.lane.b32.xlu0 %v1211, 32
  %v1214 = vpop.permute.xlu0 %1213
  %s1216 = scalar_lea.vmem %s4, 40
  %1217 = vst.msk [vmem:[%s1216] sm:$0xff] %vm77, %v1214
  %s1218 = scalar_lea.vmem %s44, 16
  %v1219 = vld [vmem:[%s1218] sm:$0xff]
  %v1220 = vsel %vm77, %v1111, 0
  %1222 = vmatprep.subr.mxu0 0.0
  %1223 = vmatpush1.msra.mxu0 %v68
  %1224 = vmatprep.subr.mxu0 0.0
  %1225 = vmatpush1.msra.mxu0 %v69
  %1226 = vmatprep.subr.mxu0 0.0
  %1227 = vmatpush1.msra.mxu0 %v70
  %1228 = vmatprep.subr.mxu0 0.0
  %1229 = vmatpush1.msra.mxu0 %v71
  %1230 = vmatprep.subr.mxu0 0.0
  %1231 = vmatpush1.msra.mxu0 0.0
  %1232 = vmatprep.subr.mxu0 0.0
  %1233 = vmatpush1.msra.mxu0 0.0
  %1234 = vmatprep.subr.mxu0 0.0
  %1235 = vmatpush1.msra.mxu0 0.0
  %1236 = vmatprep.subr.mxu0 0.0
  %1237 = vmatpush1.msra.mxu0 0.0
  %1238 = vmatprep.subr.mxu0 0.0
  %1239 = vmatpush1.msra.mxu0 0.0
  %1240 = vmatprep.subr.mxu0 0.0
  %1241 = vmatpush1.msra.mxu0 0.0
  %1242 = vmatprep.subr.mxu0 0.0
  %1243 = vmatpush1.msra.mxu0 0.0
  %1244 = vmatprep.subr.mxu0 0.0
  %1245 = vmatpush1.msra.mxu0 0.0
  %1246 = vmatprep.subr.mxu0 0.0
  %1247 = vmatpush1.msra.mxu0 0.0
  %1248 = vmatprep.subr.mxu0 0.0
  %1249 = vmatpush1.msra.mxu0 0.0
  %1250 = vmatprep.subr.mxu0 0.0
  %1251 = vmatpush1.msra.mxu0 0.0
  %1252 = vmatprep.subr.mxu0 0.0
  %1253 = vmatpush1.msra.mxu0 0.0
  %1254 = vmatprep.subr.mxu0 0.0
  %1255 = vmatpush1.msra.mxu0 0.0
  %1256 = vmatprep.subr.mxu0 0.0
  %1257 = vmatpush1.msra.mxu0 0.0
  %1258 = vmatprep.subr.mxu0 0.0
  %1259 = vmatpush1.msra.mxu0 0.0
  %1260 = vmatprep.subr.mxu0 0.0
  %1261 = vmatpush1.msra.mxu0 0.0
  %1262 = vmatprep.subr.mxu0 0.0
  %1263 = vmatpush1.msra.mxu0 0.0
  %1264 = vmatprep.subr.mxu0 0.0
  %1265 = vmatpush1.msra.mxu0 0.0
  %1266 = vmatprep.subr.mxu0 0.0
  %1267 = vmatpush1.msra.mxu0 0.0
  %1268 = vmatprep.subr.mxu0 0.0
  %1269 = vmatpush1.msra.mxu0 0.0
  %1270 = vmatprep.subr.mxu0 0.0
  %1271 = vmatpush1.msra.mxu0 0.0
  %1272 = vmatprep.subr.mxu0 0.0
  %1273 = vmatpush1.msra.mxu0 0.0
  %1274 = vmatprep.subr.mxu0 0.0
  %1275 = vmatpush1.msra.mxu0 0.0
  %1276 = vmatprep.subr.mxu0 0.0
  %1277 = vmatpush1.msra.mxu0 0.0
  %1278 = vmatprep.subr.mxu0 0.0
  %1279 = vmatpush1.msra.mxu0 0.0
  %1280 = vmatprep.subr.mxu0 0.0
  %1281 = vmatpush1.msra.mxu0 0.0
  %1282 = vmatprep.subr.mxu0 0.0
  %1283 = vmatpush1.msra.mxu0 0.0
  %1284 = vmatprep.subr.mxu0 0.0
  %1285 = vmatpush1.msra.mxu0 0.0
  %1286 = vmatprep.mubr.f32.mxu0 0.0
  %1287 = vmatmul.mubr.f32.gmra.mrb[0].mxu0 %v1220
  %v1288 = vpop.f32.mrb[0].mxu0
  %v1289 = vadd.f32 0.0, %v1288
  %v1290 = vpop.f32.mrb[0].mxu0
  %1291 = vdwg.mxu0
  %v1292 = vadd.f32 %v1219, %v1289
  %v1293 = vmul.f32 %v1292, 0.5
  %v1294 = vtanh.pop %v1293
  %v1295 = vmul.f32 %v1294, 0.5
  %v1296 = vadd.f32 %v1295, 0.5
  %v1297 = vtanh.pop %v1292
  %v1298 = vmul.f32 %v1296, %v1102
  %1300 = vrot.lane.b32.xlu0 %v1297, 64
  %v1301 = vpop.permute.xlu0 %1300
  %v1303 = vmul.f32 %v1296, %v1301
  %1305 = vrot.lane.b32.xlu0 %v1303, 32
  %v1306 = vpop.permute.xlu0 %1305
  %v1308 = vadd.f32 %v1298, %v1306
  %v1309 = vtanh.pop %v1308
  %1311 = vrot.lane.b32.xlu0 %v1309, 64
  %v1312 = vpop.permute.xlu0 %1311
  %v1314 = vmul.f32 %v1296, %v1312
  %1316 = vrot.lane.b32.xlu0 %v1314, 32
  %v1317 = vpop.permute.xlu0 %1316
  %s1319 = scalar_lea.vmem %s52, 16
  %1320 = vst.msk [vmem:[%s1319] sm:$0xff] %vm77, %v1317
  %s1321 = scalar_lea.vmem %s0, 48
  %v1322 = vld [vmem:[%s1321] sm:$0xff]
  %v1323 = vsel %vm77, %v1214, 0
  %1325 = vmatprep.subr.mxu0 0.0
  %1326 = vmatpush1.msra.mxu0 %v64
  %1327 = vmatprep.subr.mxu0 0.0
  %1328 = vmatpush1.msra.mxu0 %v65
  %1329 = vmatprep.subr.mxu0 0.0
  %1330 = vmatpush1.msra.mxu0 %v66
  %1331 = vmatprep.subr.mxu0 0.0
  %1332 = vmatpush1.msra.mxu0 %v67
  %1333 = vmatprep.subr.mxu0 0.0
  %1334 = vmatpush1.msra.mxu0 0.0
  %1335 = vmatprep.subr.mxu0 0.0
  %1336 = vmatpush1.msra.mxu0 0.0
  %1337 = vmatprep.subr.mxu0 0.0
  %1338 = vmatpush1.msra.mxu0 0.0
  %1339 = vmatprep.subr.mxu0 0.0
  %1340 = vmatpush1.msra.mxu0 0.0
  %1341 = vmatprep.subr.mxu0 0.0
  %1342 = vmatpush1.msra.mxu0 0.0
  %1343 = vmatprep.subr.mxu0 0.0
  %1344 = vmatpush1.msra.mxu0 0.0
  %1345 = vmatprep.subr.mxu0 0.0
  %1346 = vmatpush1.msra.mxu0 0.0
  %1347 = vmatprep.subr.mxu0 0.0
  %1348 = vmatpush1.msra.mxu0 0.0
  %1349 = vmatprep.subr.mxu0 0.0
  %1350 = vmatpush1.msra.mxu0 0.0
  %1351 = vmatprep.subr.mxu0 0.0
  %1352 = vmatpush1.msra.mxu0 0.0
  %1353 = vmatprep.subr.mxu0 0.0
  %1354 = vmatpush1.msra.mxu0 0.0
  %1355 = vmatprep.subr.mxu0 0.0
  %1356 = vmatpush1.msra.mxu0 0.0
  %1357 = vmatprep.subr.mxu0 0.0
  %1358 = vmatpush1.msra.mxu0 0.0
  %1359 = vmatprep.subr.mxu0 0.0
  %1360 = vmatpush1.msra.mxu0 0.0
  %1361 = vmatprep.subr.mxu0 0.0
  %1362 = vmatpush1.msra.mxu0 0.0
  %1363 = vmatprep.subr.mxu0 0.0
  %1364 = vmatpush1.msra.mxu0 0.0
  %1365 = vmatprep.subr.mxu0 0.0
  %1366 = vmatpush1.msra.mxu0 0.0
  %1367 = vmatprep.subr.mxu0 0.0
  %1368 = vmatpush1.msra.mxu0 0.0
  %1369 = vmatprep.subr.mxu0 0.0
  %1370 = vmatpush1.msra.mxu0 0.0
  %1371 = vmatprep.subr.mxu0 0.0
  %1372 = vmatpush1.msra.mxu0 0.0
  %1373 = vmatprep.subr.mxu0 0.0
  %1374 = vmatpush1.msra.mxu0 0.0
  %1375 = vmatprep.subr.mxu0 0.0
  %1376 = vmatpush1.msra.mxu0 0.0
  %1377 = vmatprep.subr.mxu0 0.0
  %1378 = vmatpush1.msra.mxu0 0.0
  %1379 = vmatprep.subr.mxu0 0.0
  %1380 = vmatpush1.msra.mxu0 0.0
  %1381 = vmatprep.subr.mxu0 0.0
  %1382 = vmatpush1.msra.mxu0 0.0
  %1383 = vmatprep.subr.mxu0 0.0
  %1384 = vmatpush1.msra.mxu0 0.0
  %1385 = vmatprep.subr.mxu0 0.0
  %1386 = vmatpush1.msra.mxu0 0.0
  %1387 = vmatprep.subr.mxu0 0.0
  %1388 = vmatpush1.msra.mxu0 0.0
  %1389 = vmatprep.mubr.f32.mxu0 0.0
  %1390 = vmatmul.mubr.f32.gmra.mrb[0].mxu0 %v1323
  %v1391 = vpop.f32.mrb[0].mxu0
  %v1392 = vadd.f32 0.0, %v1391
  %v1393 = vpop.f32.mrb[0].mxu0
  %1394 = vdwg.mxu0
  %v1395 = vadd.f32 %v1322, %v1392
  %v1396 = vmul.f32 %v1395, 0.5
  %v1397 = vtanh.pop %v1396
  %v1398 = vmul.f32 %v1397, 0.5
  %v1399 = vadd.f32 %v1398, 0.5
  %v1400 = vtanh.pop %v1395
  %v1401 = vmul.f32 %v1399, %v1205
  %1403 = vrot.lane.b32.xlu0 %v1400, 64
  %v1404 = vpop.permute.xlu0 %1403
  %v1406 = vmul.f32 %v1399, %v1404
  %1408 = vrot.lane.b32.xlu0 %v1406, 32
  %v1409 = vpop.permute.xlu0 %1408
  %v1411 = vadd.f32 %v1401, %v1409
  %v1412 = vtanh.pop %v1411
  %1414 = vrot.lane.b32.xlu0 %v1412, 64
  %v1415 = vpop.permute.xlu0 %1414
  %v1417 = vmul.f32 %v1399, %v1415
  %1419 = vrot.lane.b32.xlu0 %v1417, 32
  %v1420 = vpop.permute.xlu0 %1419
  %s1422 = scalar_lea.vmem %s4, 48
  %1423 = vst.msk [vmem:[%s1422] sm:$0xff] %vm77, %v1420
  %s1424 = scalar_lea.vmem %s44, 8
  %v1425 = vld [vmem:[%s1424] sm:$0xff]
  %v1426 = vsel %vm77, %v1317, 0
  %1428 = vmatprep.subr.mxu0 0.0
  %1429 = vmatpush1.msra.mxu0 %v68
  %1430 = vmatprep.subr.mxu0 0.0
  %1431 = vmatpush1.msra.mxu0 %v69
  %1432 = vmatprep.subr.mxu0 0.0
  %1433 = vmatpush1.msra.mxu0 %v70
  %1434 = vmatprep.subr.mxu0 0.0
  %1435 = vmatpush1.msra.mxu0 %v71
  %1436 = vmatprep.subr.mxu0 0.0
  %1437 = vmatpush1.msra.mxu0 0.0
  %1438 = vmatprep.subr.mxu0 0.0
  %1439 = vmatpush1.msra.mxu0 0.0
  %1440 = vmatprep.subr.mxu0 0.0
  %1441 = vmatpush1.msra.mxu0 0.0
  %1442 = vmatprep.subr.mxu0 0.0
  %1443 = vmatpush1.msra.mxu0 0.0
  %1444 = vmatprep.subr.mxu0 0.0
  %1445 = vmatpush1.msra.mxu0 0.0
  %1446 = vmatprep.subr.mxu0 0.0
  %1447 = vmatpush1.msra.mxu0 0.0
  %1448 = vmatprep.subr.mxu0 0.0
  %1449 = vmatpush1.msra.mxu0 0.0
  %1450 = vmatprep.subr.mxu0 0.0
  %1451 = vmatpush1.msra.mxu0 0.0
  %1452 = vmatprep.subr.mxu0 0.0
  %1453 = vmatpush1.msra.mxu0 0.0
  %1454 = vmatprep.subr.mxu0 0.0
  %1455 = vmatpush1.msra.mxu0 0.0
  %1456 = vmatprep.subr.mxu0 0.0
  %1457 = vmatpush1.msra.mxu0 0.0
  %1458 = vmatprep.subr.mxu0 0.0
  %1459 = vmatpush1.msra.mxu0 0.0
  %1460 = vmatprep.subr.mxu0 0.0
  %1461 = vmatpush1.msra.mxu0 0.0
  %1462 = vmatprep.subr.mxu0 0.0
  %1463 = vmatpush1.msra.mxu0 0.0
  %1464 = vmatprep.subr.mxu0 0.0
  %1465 = vmatpush1.msra.mxu0 0.0
  %1466 = vmatprep.subr.mxu0 0.0
  %1467 = vmatpush1.msra.mxu0 0.0
  %1468 = vmatprep.subr.mxu0 0.0
  %1469 = vmatpush1.msra.mxu0 0.0
  %1470 = vmatprep.subr.mxu0 0.0
  %1471 = vmatpush1.msra.mxu0 0.0
  %1472 = vmatprep.subr.mxu0 0.0
  %1473 = vmatpush1.msra.mxu0 0.0
  %1474 = vmatprep.subr.mxu0 0.0
  %1475 = vmatpush1.msra.mxu0 0.0
  %1476 = vmatprep.subr.mxu0 0.0
  %1477 = vmatpush1.msra.mxu0 0.0
  %1478 = vmatprep.subr.mxu0 0.0
  %1479 = vmatpush1.msra.mxu0 0.0
  %1480 = vmatprep.subr.mxu0 0.0
  %1481 = vmatpush1.msra.mxu0 0.0
  %1482 = vmatprep.subr.mxu0 0.0
  %1483 = vmatpush1.msra.mxu0 0.0
  %1484 = vmatprep.subr.mxu0 0.0
  %1485 = vmatpush1.msra.mxu0 0.0
  %1486 = vmatprep.subr.mxu0 0.0
  %1487 = vmatpush1.msra.mxu0 0.0
  %1488 = vmatprep.subr.mxu0 0.0
  %1489 = vmatpush1.msra.mxu0 0.0
  %1490 = vmatprep.subr.mxu0 0.0
  %1491 = vmatpush1.msra.mxu0 0.0
  %1492 = vmatprep.mubr.f32.mxu0 0.0
  %1493 = vmatmul.mubr.f32.gmra.mrb[0].mxu0 %v1426
  %v1494 = vpop.f32.mrb[0].mxu0
  %v1495 = vadd.f32 0.0, %v1494
  %v1496 = vpop.f32.mrb[0].mxu0
  %1497 = vdwg.mxu0
  %v1498 = vadd.f32 %v1425, %v1495
  %v1499 = vmul.f32 %v1498, 0.5
  %v1500 = vtanh.pop %v1499
  %v1501 = vmul.f32 %v1500, 0.5
  %v1502 = vadd.f32 %v1501, 0.5
  %v1503 = vtanh.pop %v1498
  %v1504 = vmul.f32 %v1502, %v1308
  %1506 = vrot.lane.b32.xlu0 %v1503, 64
  %v1507 = vpop.permute.xlu0 %1506
  %v1509 = vmul.f32 %v1502, %v1507
  %1511 = vrot.lane.b32.xlu0 %v1509, 32
  %v1512 = vpop.permute.xlu0 %1511
  %v1514 = vadd.f32 %v1504, %v1512
  %v1515 = vtanh.pop %v1514
  %1517 = vrot.lane.b32.xlu0 %v1515, 64
  %v1518 = vpop.permute.xlu0 %1517
  %v1520 = vmul.f32 %v1502, %v1518
  %1522 = vrot.lane.b32.xlu0 %v1520, 32
  %v1523 = vpop.permute.xlu0 %1522
  %s1525 = scalar_lea.vmem %s52, 8
  %1526 = vst.msk [vmem:[%s1525] sm:$0xff] %vm77, %v1523
  %s1527 = scalar_lea.vmem %s0, 56
  %v1528 = vld [vmem:[%s1527] sm:$0xff]
  %v1529 = vsel %vm77, %v1420, 0
  %1531 = vmatprep.subr.mxu0 0.0
  %1532 = vmatpush1.msra.mxu0 %v64
  %1533 = vmatprep.subr.mxu0 0.0
  %1534 = vmatpush1.msra.mxu0 %v65
  %1535 = vmatprep.subr.mxu0 0.0
  %1536 = vmatpush1.msra.mxu0 %v66
  %1537 = vmatprep.subr.mxu0 0.0
  %1538 = vmatpush1.msra.mxu0 %v67
  %1539 = vmatprep.subr.mxu0 0.0
  %1540 = vmatpush1.msra.mxu0 0.0
  %1541 = vmatprep.subr.mxu0 0.0
  %1542 = vmatpush1.msra.mxu0 0.0
  %1543 = vmatprep.subr.mxu0 0.0
  %1544 = vmatpush1.msra.mxu0 0.0
  %1545 = vmatprep.subr.mxu0 0.0
  %1546 = vmatpush1.msra.mxu0 0.0
  %1547 = vmatprep.subr.mxu0 0.0
  %1548 = vmatpush1.msra.mxu0 0.0
  %1549 = vmatprep.subr.mxu0 0.0
  %1550 = vmatpush1.msra.mxu0 0.0
  %1551 = vmatprep.subr.mxu0 0.0
  %1552 = vmatpush1.msra.mxu0 0.0
  %1553 = vmatprep.subr.mxu0 0.0
  %1554 = vmatpush1.msra.mxu0 0.0
  %1555 = vmatprep.subr.mxu0 0.0
  %1556 = vmatpush1.msra.mxu0 0.0
  %1557 = vmatprep.subr.mxu0 0.0
  %1558 = vmatpush1.msra.mxu0 0.0
  %1559 = vmatprep.subr.mxu0 0.0
  %1560 = vmatpush1.msra.mxu0 0.0
  %1561 = vmatprep.subr.mxu0 0.0
  %1562 = vmatpush1.msra.mxu0 0.0
  %1563 = vmatprep.subr.mxu0 0.0
  %1564 = vmatpush1.msra.mxu0 0.0
  %1565 = vmatprep.subr.mxu0 0.0
  %1566 = vmatpush1.msra.mxu0 0.0
  %1567 = vmatprep.subr.mxu0 0.0
  %1568 = vmatpush1.msra.mxu0 0.0
  %1569 = vmatprep.subr.mxu0 0.0
  %1570 = vmatpush1.msra.mxu0 0.0
  %1571 = vmatprep.subr.mxu0 0.0
  %1572 = vmatpush1.msra.mxu0 0.0
  %1573 = vmatprep.subr.mxu0 0.0
  %1574 = vmatpush1.msra.mxu0 0.0
  %1575 = vmatprep.subr.mxu0 0.0
  %1576 = vmatpush1.msra.mxu0 0.0
  %1577 = vmatprep.subr.mxu0 0.0
  %1578 = vmatpush1.msra.mxu0 0.0
  %1579 = vmatprep.subr.mxu0 0.0
  %1580 = vmatpush1.msra.mxu0 0.0
  %1581 = vmatprep.subr.mxu0 0.0
  %1582 = vmatpush1.msra.mxu0 0.0
  %1583 = vmatprep.subr.mxu0 0.0
  %1584 = vmatpush1.msra.mxu0 0.0
  %1585 = vmatprep.subr.mxu0 0.0
  %1586 = vmatpush1.msra.mxu0 0.0
  %1587 = vmatprep.subr.mxu0 0.0
  %1588 = vmatpush1.msra.mxu0 0.0
  %1589 = vmatprep.subr.mxu0 0.0
  %1590 = vmatpush1.msra.mxu0 0.0
  %1591 = vmatprep.subr.mxu0 0.0
  %1592 = vmatpush1.msra.mxu0 0.0
  %1593 = vmatprep.subr.mxu0 0.0
  %1594 = vmatpush1.msra.mxu0 0.0
  %1595 = vmatprep.mubr.f32.mxu0 0.0
  %1596 = vmatmul.mubr.f32.gmra.mrb[0].mxu0 %v1529
  %v1597 = vpop.f32.mrb[0].mxu0
  %v1598 = vadd.f32 0.0, %v1597
  %v1599 = vpop.f32.mrb[0].mxu0
  %1600 = vdwg.mxu0
  %v1601 = vadd.f32 %v1528, %v1598
  %v1602 = vmul.f32 %v1601, 0.5
  %v1603 = vtanh.pop %v1602
  %v1604 = vmul.f32 %v1603, 0.5
  %v1605 = vadd.f32 %v1604, 0.5
  %v1606 = vtanh.pop %v1601
  %v1607 = vmul.f32 %v1605, %v1411
  %1609 = vrot.lane.b32.xlu0 %v1606, 64
  %v1610 = vpop.permute.xlu0 %1609
  %v1612 = vmul.f32 %v1605, %v1610
  %1614 = vrot.lane.b32.xlu0 %v1612, 32
  %v1615 = vpop.permute.xlu0 %1614
  %v1617 = vadd.f32 %v1607, %v1615
  %v1618 = vtanh.pop %v1617
  %1620 = vrot.lane.b32.xlu0 %v1618, 64
  %v1621 = vpop.permute.xlu0 %1620
  %v1623 = vmul.f32 %v1605, %v1621
  %1625 = vrot.lane.b32.xlu0 %v1623, 32
  %v1626 = vpop.permute.xlu0 %1625
  %s1628 = scalar_lea.vmem %s4, 56
  %1629 = vst.msk [vmem:[%s1628] sm:$0xff] %vm77, %v1626
  %v1630 = vld [vmem:[%s44] sm:$0xff]
  %v1631 = vsel %vm77, %v1523, 0
  %1633 = vmatprep.subr.mxu0 0.0
  %1634 = vmatpush1.msra.mxu0 %v68
  %1635 = vmatprep.subr.mxu0 0.0
  %1636 = vmatpush1.msra.mxu0 %v69
  %1637 = vmatprep.subr.mxu0 0.0
  %1638 = vmatpush1.msra.mxu0 %v70
  %1639 = vmatprep.subr.mxu0 0.0
  %1640 = vmatpush1.msra.mxu0 %v71
  %1641 = vmatprep.subr.mxu0 0.0
  %1642 = vmatpush1.msra.mxu0 0.0
  %1643 = vmatprep.subr.mxu0 0.0
  %1644 = vmatpush1.msra.mxu0 0.0
  %1645 = vmatprep.subr.mxu0 0.0
  %1646 = vmatpush1.msra.mxu0 0.0
  %1647 = vmatprep.subr.mxu0 0.0
  %1648 = vmatpush1.msra.mxu0 0.0
  %1649 = vmatprep.subr.mxu0 0.0
  %1650 = vmatpush1.msra.mxu0 0.0
  %1651 = vmatprep.subr.mxu0 0.0
  %1652 = vmatpush1.msra.mxu0 0.0
  %1653 = vmatprep.subr.mxu0 0.0
  %1654 = vmatpush1.msra.mxu0 0.0
  %1655 = vmatprep.subr.mxu0 0.0
  %1656 = vmatpush1.msra.mxu0 0.0
  %1657 = vmatprep.subr.mxu0 0.0
  %1658 = vmatpush1.msra.mxu0 0.0
  %1659 = vmatprep.subr.mxu0 0.0
  %1660 = vmatpush1.msra.mxu0 0.0
  %1661 = vmatprep.subr.mxu0 0.0
  %1662 = vmatpush1.msra.mxu0 0.0
  %1663 = vmatprep.subr.mxu0 0.0
  %1664 = vmatpush1.msra.mxu0 0.0
  %1665 = vmatprep.subr.mxu0 0.0
  %1666 = vmatpush1.msra.mxu0 0.0
  %1667 = vmatprep.subr.mxu0 0.0
  %1668 = vmatpush1.msra.mxu0 0.0
  %1669 = vmatprep.subr.mxu0 0.0
  %1670 = vmatpush1.msra.mxu0 0.0
  %1671 = vmatprep.subr.mxu0 0.0
  %1672 = vmatpush1.msra.mxu0 0.0
  %1673 = vmatprep.subr.mxu0 0.0
  %1674 = vmatpush1.msra.mxu0 0.0
  %1675 = vmatprep.subr.mxu0 0.0
  %1676 = vmatpush1.msra.mxu0 0.0
  %1677 = vmatprep.subr.mxu0 0.0
  %1678 = vmatpush1.msra.mxu0 0.0
  %1679 = vmatprep.subr.mxu0 0.0
  %1680 = vmatpush1.msra.mxu0 0.0
  %1681 = vmatprep.subr.mxu0 0.0
  %1682 = vmatpush1.msra.mxu0 0.0
  %1683 = vmatprep.subr.mxu0 0.0
  %1684 = vmatpush1.msra.mxu0 0.0
  %1685 = vmatprep.subr.mxu0 0.0
  %1686 = vmatpush1.msra.mxu0 0.0
  %1687 = vmatprep.subr.mxu0 0.0
  %1688 = vmatpush1.msra.mxu0 0.0
  %1689 = vmatprep.subr.mxu0 0.0
  %1690 = vmatpush1.msra.mxu0 0.0
  %1691 = vmatprep.subr.mxu0 0.0
  %1692 = vmatpush1.msra.mxu0 0.0
  %1693 = vmatprep.subr.mxu0 0.0
  %1694 = vmatpush1.msra.mxu0 0.0
  %1695 = vmatprep.subr.mxu0 0.0
  %1696 = vmatpush1.msra.mxu0 0.0
  %1697 = vmatprep.mubr.f32.mxu0 0.0
  %1698 = vmatmul.mubr.f32.gmra.mrb[0].mxu0 %v1631
  %v1699 = vpop.f32.mrb[0].mxu0
  %v1700 = vadd.f32 0.0, %v1699
  %v1701 = vpop.f32.mrb[0].mxu0
  %1702 = vdwg.mxu0
  %v1703 = vadd.f32 %v1630, %v1700
  %v1704 = vmul.f32 %v1703, 0.5
  %v1705 = vtanh.pop %v1704
  %v1706 = vmul.f32 %v1705, 0.5
  %v1707 = vadd.f32 %v1706, 0.5
  %v1708 = vtanh.pop %v1703
  %v1709 = vmul.f32 %v1707, %v1514
  %1711 = vrot.lane.b32.xlu0 %v1708, 64
  %v1712 = vpop.permute.xlu0 %1711
  %v1714 = vmul.f32 %v1707, %v1712
  %1716 = vrot.lane.b32.xlu0 %v1714, 32
  %v1717 = vpop.permute.xlu0 %1716
  %v1719 = vadd.f32 %v1709, %v1717
  %v1720 = vtanh.pop %v1719
  %1722 = vrot.lane.b32.xlu0 %v1720, 64
  %v1723 = vpop.permute.xlu0 %1722
  %v1725 = vmul.f32 %v1707, %v1723
  %1727 = vrot.lane.b32.xlu0 %v1725, 32
  %v1728 = vpop.permute.xlu0 %1727
  %1730 = vst.msk [vmem:[%s52] sm:$0xff] %vm77, %v1728
  %1731 = vst.msk [vmem:[#allocation2] sm:$0xff] %vm77, %v1626
  %1733 = vrot.lane.b32.xlu0 %v1617, 96
  %v1734 = vpop.permute.xlu0 %1733
  %1736 = vst.msk [vmem:[#allocation3] sm:$0xff] %vm77, %v1734
  %1737 = vst.msk [vmem:[#allocation4] sm:$0xff] %vm77, %v1728
  %1739 = vrot.lane.b32.xlu0 %v1719, 96
  %v1740 = vpop.permute.xlu0 %1739
  %1742 = vst.msk [vmem:[#allocation5] sm:$0xff] %vm77, %v1740
  %s1743 = ssub.s32 0, 0
  %s1744 = smul.u32 8, %s1743
  %p1745 = scmp.lt.s32.totalorder %s1744, 7
  %s1746 = scalar_select %p1745, %s1744, 7
  %s1747 = smul.addr %s1746, 8
  %s1748 = scalar_lea.vmem %s5, %s1747
  // Predicated region
  $region22: #{bidirectional_lstm.4} parent=0 // pred_check
    _
  $region23: #{bidirectional_lstm.4} parent=0 // pred_check_branch
    %1750 = sbr.rel (0) target = $region25
  $region24: #{bidirectional_lstm.4} parent=0 // pred_region
    _
  $region25: #{bidirectional_lstm.4} parent=0 // pred_fallthru
    _
  // Predicated region
  $region26: #{bidirectional_lstm.4} parent=0 // pred_check
    _
  $region27: #{bidirectional_lstm.4} parent=0 // pred_check_branch
    %1752 = sbr.rel (0) target = $region29
  $region28: #{bidirectional_lstm.4} parent=0 // pred_region
    %s1753 = ssub.s32 0, 0
    %s1754 = smul.u32 8, %s1753
  $region29: #{bidirectional_lstm.4} parent=0 // pred_fallthru
    _
  // Predicated region
  $region30: #{bidirectional_lstm.4} parent=0 // pred_check
    _
  $region31: #{bidirectional_lstm.4} parent=0 // pred_check_branch
    %1756 = sbr.rel (0) target = $region33
  $region32: #{bidirectional_lstm.4} parent=0 // pred_region
    _
  $region33: #{bidirectional_lstm.4} parent=0 // pred_fallthru
    _
  // Predicated region
  $region34: #{bidirectional_lstm.4} parent=0 // pred_check
    _
  $region35: #{bidirectional_lstm.4} parent=0 // pred_check_branch
    %1758 = sbr.rel (0) target = $region37
  $region36: #{bidirectional_lstm.4} parent=0 // pred_region
    %s1759 = ssub.s32 0, 0
    %s1760 = smul.u32 8, %s1759
    %p1761 = scmp.lt.s32.totalorder %s1760, 7
    %s1762 = scalar_select %p1761, %s1760, 7
    %s1763 = smul.addr %s1762, 8
    %s1764 = scalar_lea.vmem %s5, %s1763
  $region37: #{bidirectional_lstm.4} parent=0 // pred_fallthru
    _

</llo_original>
